<compile_context>
chip_gen: v7x
topology: tpu7x:2x2x1
jax: 0.10.0
libtpu: 0.0.40
codegen_flags: <defaults>
</compile_context>

<pallas_src>
import functools

import jax
import jax.numpy as jnp
import numpy as np
from jax.experimental import pallas as pl
from jax.experimental.pallas import tpu as pltpu


def _round_up(x: int, m: int) -> int:
    return (x + m - 1) // m * m


def _vmem_limit_bytes() -> int:
    """Generation-aware VMEM limit (96 MiB on 128 MiB chips, 48 MiB on v7x / fallback)."""
    try:
        cap = int(pltpu.get_tpu_info().vmem_capacity_bytes)
    except Exception:
        cap = 64 * 1024 * 1024
    return int(min(cap * 3 // 4, 100 * 1024 * 1024))


_VMEM_LIMIT = _vmem_limit_bytes()


def _additive_attention_kernel(
    # inputs
    h1_ref,      # (BT, D)      f32   hidden @ w1^T + (b1 + b2), per batch tile
    feats_ref,   # (BT, ST, D)  compute_dtype (streamed)
    mask_ref,    # (BT, ST)     int32
    w2t_ref,     # (D, D)       compute_dtype (in x out), resident
    w3_ref,      # (1, D)       f32, resident
    # outputs
    ctx_ref,     # (BT, D)      f32
    probs_ref,   # (BT, SP)     f32   resident across seq tiles (lane-dense)
    # scratch
    m_scr,       # (BT, 1)      f32   running max
    l_scr,       # (BT, 1)      f32   running denom
    acc_scr,     # (BT, D)      f32   context accumulator
    msteps_scr,  # (NS, BT, 1)  f32   per-step running max (for final rescale)
    p_scr,       # (NS, BT, ST) f32   per-step unnormalized softmax numerators
    *,
    n_seq_tiles,
):
    s = pl.program_id(1)
    BT, ST, D = feats_ref.shape

    # --- once per batch tile: init online-softmax stats ---
    @pl.when(s == 0)
    def _init():
        m_scr[...] = jnp.full(m_scr.shape, -1e30, jnp.float32)
        l_scr[...] = jnp.zeros(l_scr.shape, jnp.float32)
        acc_scr[...] = jnp.zeros(acc_scr.shape, jnp.float32)

    feats = feats_ref[...]                                        # (BT, ST, D) compute dtype

    # w2 projection on the MXU (collapse leading dims; lane dim unchanged).
    f2 = jnp.dot(feats.reshape(BT * ST, D), w2t_ref[...],
                 preferred_element_type=jnp.float32).reshape(BT, ST, D)
    act = h1_ref[...][:, None, :] + f2                            # f32
    t = jnp.tanh(act.astype(feats.dtype))                         # EUP (bf16 on the bf16 path)

    # logits: VPU multiply + lane (XLU) reduction -- no M=1 MXU matmul.
    w3_b = w3_ref[...].reshape(1, 1, D)                           # f32
    logits = jnp.sum(t * w3_b, axis=-1)                           # (BT, ST) f32
    logits = jnp.where(mask_ref[...] != 0, logits, jnp.float32(-1000000.0))

    # --- online softmax update ---
    m_prev = m_scr[...]                                           # (BT, 1)
    m_new = jnp.maximum(m_prev, jnp.max(logits, axis=1, keepdims=True))
    alpha = jnp.exp(m_prev - m_new)                               # (BT, 1)
    p = jnp.exp(logits - m_new)                                   # (BT, ST) f32
    l_scr[...] = alpha * l_scr[...] + jnp.sum(p, axis=1, keepdims=True)

    # context update: VPU multiply + sublane reduction over ST (f32 accumulate).
    pv = jnp.sum(p[:, :, None] * feats, axis=1)                   # (BT, D) f32
    acc_scr[...] = alpha * acc_scr[...] + pv
    m_scr[...] = m_new

    # stash per-step numerators + per-step max for the cheap finalize rescale
    p_scr[s] = p
    msteps_scr[s] = m_new

    # --- finalize on the last seq tile ---
    @pl.when(s == n_seq_tiles - 1)
    def _finalize():
        inv_l = 1.0 / l_scr[...]                                  # (BT, 1)
        ctx_ref[...] = (acc_scr[...] * inv_l).astype(ctx_ref.dtype)
        m_final = m_scr[...]
        for i in range(n_seq_tiles):                              # static unroll, static slices
            scale_i = jnp.exp(msteps_scr[i] - m_final) * inv_l    # (BT, 1)
            probs_ref[:, i * ST:(i + 1) * ST] = p_scr[i] * scale_i


@functools.partial(jax.jit, static_argnames=("compute_dtype", "s_tile", "b_tile"))
def additive_attention(hidden_states, feats, attention_mask,
                       w1, b1, w2, b2, w3,
                       compute_dtype=jnp.bfloat16, s_tile=None, b_tile=None):
    """AdditiveAttention forward.  Weights follow torch nn.Linear convention:
       w1, w2: (D, D) = (out, in); b1, b2: (D,); w3: (1, D).
       compute_dtype: dtype of the streamed feats / w2 operands and the tanh chain
       (bfloat16 halves HBM traffic; stats, logits, softmax & accumulation stay f32;
       pass jnp.float32 for bit-faithful module semantics)."""
    # mimic the torch hidden_states shape normalization
    if hidden_states.ndim == 1:
        hidden_states = hidden_states[None, :]
    if hidden_states.ndim == 3 and hidden_states.shape[0] == 1:
        hidden_states = hidden_states[0]

    B, S, D = feats.shape
    f32 = jnp.float32
    cb = jnp.dtype(compute_dtype).itemsize

    # --- tile selection under a generation-aware VMEM budget ---
    bp8 = _round_up(B, 8)
    s_cap = _round_up(S, 128)
    if b_tile is not None:
        bt_cands = [max(8, _round_up(b_tile, 8))]
    else:
        bt_cands = [bt for bt in (32, 16, 8) if bt <= bp8] or [8]
    if s_tile is not None:
        st_cands = [min(max(128, _round_up(s_tile, 128)), s_cap)]
    else:
        st_cands = [c for c in (2048, 1024, 512, 256, 128) if c <= s_cap] or [s_cap]

    vmem_budget = (_VMEM_LIMIT * 7) // 10
    d_lane = _round_up(D, 128)                 # VMEM lane padding for small D

    def _est_vmem(bt, st):
        sp = _round_up(S, st)
        return (bt * st * d_lane * (2 * cb + 12)   # feats dbl-buffer + f32 temporaries
                + 3 * bt * sp * 4                  # resident probs out (x2) + p stash
                + 2 * D * d_lane * cb              # resident w2^T (dbl-buffered)
                + 8 * bt * d_lane * 4              # h1 / ctx / acc / stats
                + (1 << 20))

    BT, ST = bt_cands[-1], st_cands[-1]
    found = False
    for bt in bt_cands:
        for st in st_cands:
            if _est_vmem(bt, st) <= vmem_budget:
                BT, ST, found = bt, st, True
                break
        if found:
            break

    BP = _round_up(B, BT)
    SP = _round_up(S, ST)
    NB = BP // BT
    NS = SP // ST

    # --- wrapper-side prep: hoist h1, cast-then-pad feats (no f32 round trip) ---
    hidden_f = hidden_states.astype(f32)
    h1 = hidden_f @ jnp.transpose(w1).astype(f32) + (b1 + b2).astype(f32)[None, :]
    feats_c = feats.astype(compute_dtype)
    mask_i = (jnp.ones((B, S), jnp.int32) if attention_mask is None
              else attention_mask.astype(jnp.int32))
    if (BP, SP) != (B, S):
        h1_p = jnp.zeros((BP, D), f32).at[:B].set(h1)
        feats_p = jnp.zeros((BP, SP, D), compute_dtype).at[:B, :S].set(feats_c)
        mask_p = jnp.zeros((BP, SP), jnp.int32).at[:B, :S].set(mask_i)
    else:
        h1_p, feats_p, mask_p = h1, feats_c, mask_i
    w2t_p = jnp.transpose(w2).astype(compute_dtype)
    w3_p = jnp.reshape(w3, (1, D)).astype(f32)

    ctx_p, probs_p = pl.pallas_call(
        functools.partial(_additive_attention_kernel, n_seq_tiles=NS),
        out_shape=(
            jax.ShapeDtypeStruct((BP, D), f32),
            jax.ShapeDtypeStruct((BP, SP), f32),
        ),
        grid_spec=pltpu.PrefetchScalarGridSpec(
            num_scalar_prefetch=0,
            grid=(NB, NS),
            in_specs=[
                pl.BlockSpec((BT, D), lambda b, s: (b, 0)),          # h1 (per batch tile)
                pl.BlockSpec((BT, ST, D), lambda b, s: (b, s, 0)),   # feats (streamed)
                pl.BlockSpec((BT, ST), lambda b, s: (b, s)),         # mask (streamed)
                pl.BlockSpec((D, D), lambda b, s: (0, 0)),           # w2^T (resident)
                pl.BlockSpec((1, D), lambda b, s: (0, 0)),           # w3   (resident)
            ],
            out_specs=(
                pl.BlockSpec((BT, D), lambda b, s: (b, 0)),          # context
                pl.BlockSpec((BT, SP), lambda b, s: (b, 0)),         # probs (batch-major, lane-dense)
            ),
            scratch_shapes=[
                pltpu.VMEM((BT, 1), f32),        # running max m
                pltpu.VMEM((BT, 1), f32),        # running denom l
                pltpu.VMEM((BT, D), f32),        # context accumulator
                pltpu.VMEM((NS, BT, 1), f32),    # per-step max
                pltpu.VMEM((NS, BT, ST), f32),   # per-step softmax numerators
            ],
        ),
        compiler_params=pltpu.CompilerParams(
            dimension_semantics=("parallel", "arbitrary"),
            vmem_limit_bytes=int(_VMEM_LIMIT),
        ),
    )(h1_p, feats_p, mask_p, w2t_p, w3_p)

    return ctx_p[:B], probs_p[:B, :S]


def _reference(hidden_states, feats, attention_mask, w1, b1, w2, b2, w3):
    """Pure-JAX reference mirroring the PyTorch forward (eval mode)."""
    B, S, D = feats.shape
    h = jnp.repeat(hidden_states[:, None, :], S, axis=1).reshape(B * S, D)
    f = feats.reshape(B * S, D)
    t = jnp.tanh(h @ w1.T + b1 + f @ w2.T + b2)
    logits = (t @ w3.T).reshape(B, S)
    logits = jnp.where(attention_mask.astype(bool), logits, -1000000.0)
    probs = jax.nn.softmax(logits, axis=1)
    context = jnp.einsum("bs,bsd->bd", probs, feats)
    return context, probs


if __name__ == "__main__":
    def make_inputs(key, B, S, D):
        k_h, k_f, k_w1, k_b1, k_w2, k_b2, k_w3, k_len = jax.random.split(key, 8)
        hidden = jax.random.normal(k_h, (B, D), dtype=jnp.float32)
        feats = jax.random.normal(k_f, (B, S, D), dtype=jnp.float32)
        lengths = jax.random.randint(k_len, (B,), 1, S + 1)
        mask = (jnp.arange(S)[None, :] < lengths[:, None]).astype(jnp.int32)
        bound = 1.0 / np.sqrt(D)
        w1 = jax.random.uniform(k_w1, (D, D), minval=-bound, maxval=bound)
        b1 = jax.random.uniform(k_b1, (D,), minval=-bound, maxval=bound)
        w2 = jax.random.uniform(k_w2, (D, D), minval=-bound, maxval=bound)
        b2 = jax.random.uniform(k_b2, (D,), minval=-bound, maxval=bound)
        w3 = jax.random.uniform(k_w3, (1, D), minval=-bound, maxval=bound)
        return hidden, feats, mask, w1, b1, w2, b2, w3

    key = jax.random.PRNGKey(0)
    k1, k2 = jax.random.split(key)

    # --- case 1: module-native small shapes (B=2, S=8, D=32), exact f32 path ---
    args1 = make_inputs(k1, 2, 8, 32)
    ctx, probs = additive_attention(*args1, compute_dtype=jnp.float32)
    jax.block_until_ready((ctx, probs))
    ref_ctx, ref_probs = _reference(*args1)
    np.testing.assert_allclose(np.asarray(ctx), np.asarray(ref_ctx),
                               rtol=1e-4, atol=1e-5)
    np.testing.assert_allclose(np.asarray(probs), np.asarray(ref_probs),
                               rtol=1e-4, atol=1e-5)

    # --- case 2: unaligned shapes, auto tile selection (batch & seq padding), f32 ---
    args2 = make_inputs(k2, 9, 300, 40)
    ctx2, probs2 = additive_attention(*args2, compute_dtype=jnp.float32)
    jax.block_until_ready((ctx2, probs2))
    ref_ctx2, ref_probs2 = _reference(*args2)
    np.testing.assert_allclose(np.asarray(ctx2), np.asarray(ref_ctx2),
                               rtol=1e-4, atol=1e-5)
    np.testing.assert_allclose(np.asarray(probs2), np.asarray(ref_probs2),
                               rtol=1e-4, atol=1e-5)

    # --- case 2b: forced multi-tile grid (2 batch tiles x 3 seq tiles), f32 ---
    ctx2b, probs2b = additive_attention(*args2, compute_dtype=jnp.float32,
                                        s_tile=128, b_tile=8)
    jax.block_until_ready((ctx2b, probs2b))
    np.testing.assert_allclose(np.asarray(ctx2b), np.asarray(ref_ctx2),
                               rtol=1e-4, atol=1e-5)
    np.testing.assert_allclose(np.asarray(probs2b), np.asarray(ref_probs2),
                               rtol=1e-4, atol=1e-5)

    # --- case 3: default bf16 streamed-feats path (memory-bandwidth optimization) ---
    ctx3, probs3 = additive_attention(*args2)
    jax.block_until_ready((ctx3, probs3))
    np.testing.assert_allclose(np.asarray(ctx3), np.asarray(ref_ctx2),
                               rtol=5e-2, atol=5e-2)
    np.testing.assert_allclose(np.asarray(probs3), np.asarray(ref_probs2),
                               rtol=5e-2, atol=5e-2)

    print("KERNEL_OK")
</pallas_src>

<mosaic_0001>
module attributes {stable_mosaic.version = 11 : i64} {
  func.func @_additive_attention_kernel(%arg0: i32, %arg1: i32, %arg2: memref<8x32xf32, #tpu.memory_space<vmem>>, %arg3: memref<8x128x32xf32, #tpu.memory_space<vmem>>, %arg4: memref<8x128xi32, #tpu.memory_space<vmem>>, %arg5: memref<32x32xf32, #tpu.memory_space<vmem>>, %arg6: memref<1x32xf32, #tpu.memory_space<vmem>>, %arg7: memref<8x32xf32, #tpu.memory_space<vmem>>, %arg8: memref<8x128xf32, #tpu.memory_space<vmem>>, %arg9: memref<8x1xf32, #tpu.memory_space<vmem>>, %arg10: memref<8x1xf32, #tpu.memory_space<vmem>>, %arg11: memref<8x32xf32, #tpu.memory_space<vmem>>, %arg12: memref<1x8x1xf32, #tpu.memory_space<vmem>>, %arg13: memref<1x8x128xf32, #tpu.memory_space<vmem>>) attributes {dimension_semantics = [#tpu.dimension_semantics<parallel>, #tpu.dimension_semantics<arbitrary>], iteration_bounds = array<i64: 1, 1>, scalar_prefetch = 0 : i64, scratch_operands = 5 : i64, tpu.core_type = #tpu.core_type<tc>, window_params = [{transform_indices = @transform_0, window_bounds = array<i64: 8, 32>}, {transform_indices = @transform_1, window_bounds = array<i64: 8, 128, 32>}, {transform_indices = @transform_2, window_bounds = array<i64: 8, 128>}, {pipeline_mode = #tpu.pipeline_mode<synchronous>, transform_indices = @transform_3, window_bounds = array<i64: 32, 32>}, {pipeline_mode = #tpu.pipeline_mode<synchronous>, transform_indices = @transform_4, window_bounds = array<i64: 1, 32>}, {transform_indices = @transform_5, window_bounds = array<i64: 8, 32>}, {transform_indices = @transform_6, window_bounds = array<i64: 8, 128>}]} {
    %c0_i32 = arith.constant 0 : i32
    %0 = arith.cmpi eq, %arg1, %c0_i32 : i32
    %1 = arith.extui %0 : i1 to i32
    %c0_i32_0 = arith.constant 0 : i32
    %2 = arith.cmpi ne, %1, %c0_i32_0 : i32
    scf.if %2 {
      %cst_35 = arith.constant -1.000000e+30 : f32
      %59 = vector.broadcast %cst_35 : f32 to vector<8x1xf32>
      %c0_36 = arith.constant 0 : index
      %c0_37 = arith.constant 0 : index
      %60 = vector.load %arg9[%c0_36, %c0_37] : memref<8x1xf32, #tpu.memory_space<vmem>>, vector<8x1xf32>
      tpu.vector_store %arg9[%c0_36, %c0_37], %59 {strides = array<i32>} : memref<8x1xf32, #tpu.memory_space<vmem>>, vector<8x1xf32>,
      %cst_38 = arith.constant 0.000000e+00 : f32
      %61 = vector.broadcast %cst_38 : f32 to vector<8x1xf32>
      %c0_39 = arith.constant 0 : index
      %c0_40 = arith.constant 0 : index
      %62 = vector.load %arg10[%c0_39, %c0_40] : memref<8x1xf32, #tpu.memory_space<vmem>>, vector<8x1xf32>
      tpu.vector_store %arg10[%c0_39, %c0_40], %61 {strides = array<i32>} : memref<8x1xf32, #tpu.memory_space<vmem>>, vector<8x1xf32>,
      %cst_41 = arith.constant 0.000000e+00 : f32
      %63 = vector.broadcast %cst_41 : f32 to vector<8x32xf32>
      %c0_42 = arith.constant 0 : index
      %c0_43 = arith.constant 0 : index
      %64 = vector.load %arg11[%c0_42, %c0_43] : memref<8x32xf32, #tpu.memory_space<vmem>>, vector<8x32xf32>
      tpu.vector_store %arg11[%c0_42, %c0_43], %63 {strides = array<i32>} : memref<8x32xf32, #tpu.memory_space<vmem>>, vector<8x32xf32>,
    } else {
    }
    %c0 = arith.constant 0 : index
    %c0_1 = arith.constant 0 : index
    %c0_2 = arith.constant 0 : index
    %3 = vector.load %arg3[%c0, %c0_1, %c0_2] : memref<8x128x32xf32, #tpu.memory_space<vmem>>, vector<8x128x32xf32>
    %4 = vector.shape_cast %3 : vector<8x128x32xf32> to vector<1024x32xf32>
    %c0_3 = arith.constant 0 : index
    %c0_4 = arith.constant 0 : index
    %5 = vector.load %arg5[%c0_3, %c0_4] : memref<32x32xf32, #tpu.memory_space<vmem>>, vector<32x32xf32>
    %cst = arith.constant dense<0.000000e+00> : vector<1024x32xf32>
    %6 = tpu.matmul %4, %5, %cst {dimension_numbers = #tpu.dot_dimension_numbers<[1], [0], [0], [1], [0, 0, 1, 1], [], []>} : vector<1024x32xf32>, vector<32x32xf32>, vector<1024x32xf32> -> vector<1024x32xf32>
    %7 = vector.shape_cast %6 : vector<1024x32xf32> to vector<8x128x32xf32>
    %c0_5 = arith.constant 0 : index
    %c0_6 = arith.constant 0 : index
    %8 = vector.load %arg2[%c0_5, %c0_6] : memref<8x32xf32, #tpu.memory_space<vmem>>, vector<8x32xf32>
    %9 = vector.shape_cast %8 : vector<8x32xf32> to vector<8x1x32xf32>
    %10 = vector.broadcast %9 : vector<8x1x32xf32> to vector<8x128x32xf32>
    %11 = arith.addf %10, %7 : vector<8x128x32xf32>
    %12 = math.tanh %11 : vector<8x128x32xf32>
    %c0_7 = arith.constant 0 : index
    %c0_8 = arith.constant 0 : index
    %13 = vector.load %arg6[%c0_7, %c0_8] : memref<1x32xf32, #tpu.memory_space<vmem>>, vector<1x32xf32>
    %14 = vector.shape_cast %13 : vector<1x32xf32> to vector<1x1x32xf32>
    %15 = vector.broadcast %14 : vector<1x1x32xf32> to vector<8x128x32xf32>
    %16 = arith.mulf %12, %15 : vector<8x128x32xf32>
    %cst_9 = arith.constant dense<0.000000e+00> : vector<8x128xf32>
    %17 = vector.multi_reduction <add>, %16, %cst_9 [2] : vector<8x128x32xf32> to vector<8x128xf32>
    %c0_10 = arith.constant 0 : index
    %c0_11 = arith.constant 0 : index
    %18 = vector.load %arg4[%c0_10, %c0_11] : memref<8x128xi32, #tpu.memory_space<vmem>>, vector<8x128xi32>
    %c0_i32_12 = arith.constant 0 : i32
    %19 = vector.broadcast %c0_i32_12 : i32 to vector<8x128xi32>
    %20 = arith.cmpi ne, %18, %19 : vector<8x128xi32>
    %cst_13 = arith.constant -1.000000e+06 : f32
    %21 = vector.broadcast %cst_13 : f32 to vector<8x128xf32>
    %22 = arith.select %20, %17, %21 : vector<8x128xi1>, vector<8x128xf32>
    %c0_14 = arith.constant 0 : index
    %c0_15 = arith.constant 0 : index
    %23 = vector.load %arg9[%c0_14, %c0_15] : memref<8x1xf32, #tpu.memory_space<vmem>>, vector<8x1xf32>
    %cst_16 = arith.constant dense<0xFF800000> : vector<8xf32>
    %24 = vector.multi_reduction <maximumf>, %22, %cst_16 [1] : vector<8x128xf32> to vector<8xf32>
    %25 = vector.shape_cast %24 : vector<8xf32> to vector<8x1xf32>
    %26 = arith.maximumf %23, %25 : vector<8x1xf32>
    %27 = arith.subf %23, %26 : vector<8x1xf32>
    %28 = math.exp %27 : vector<8x1xf32>
    %29 = vector.broadcast %26 : vector<8x1xf32> to vector<8x128xf32>
    %30 = arith.subf %22, %29 : vector<8x128xf32>
    %31 = math.exp %30 : vector<8x128xf32>
    %c0_17 = arith.constant 0 : index
    %c0_18 = arith.constant 0 : index
    %32 = vector.load %arg10[%c0_17, %c0_18] : memref<8x1xf32, #tpu.memory_space<vmem>>, vector<8x1xf32>
    %33 = arith.mulf %28, %32 : vector<8x1xf32>
    %cst_19 = arith.constant dense<0.000000e+00> : vector<8xf32>
    %34 = vector.multi_reduction <add>, %31, %cst_19 [1] : vector<8x128xf32> to vector<8xf32>
    %35 = vector.shape_cast %34 : vector<8xf32> to vector<8x1xf32>
    %36 = arith.addf %33, %35 : vector<8x1xf32>
    %c0_20 = arith.constant 0 : index
    %c0_21 = arith.constant 0 : index
    %37 = vector.load %arg10[%c0_20, %c0_21] : memref<8x1xf32, #tpu.memory_space<vmem>>, vector<8x1xf32>
    tpu.vector_store %arg10[%c0_20, %c0_21], %36 {strides = array<i32>} : memref<8x1xf32, #tpu.memory_space<vmem>>, vector<8x1xf32>,
    %38 = vector.shape_cast %31 : vector<8x128xf32> to vector<8x128x1xf32>
    %39 = vector.broadcast %38 : vector<8x128x1xf32> to vector<8x128x32xf32>
    %40 = arith.mulf %39, %3 : vector<8x128x32xf32>
    %cst_22 = arith.constant dense<0.000000e+00> : vector<8x32xf32>
    %41 = vector.multi_reduction <add>, %40, %cst_22 [1] : vector<8x128x32xf32> to vector<8x32xf32>
    %c0_23 = arith.constant 0 : index
    %c0_24 = arith.constant 0 : index
    %42 = vector.load %arg11[%c0_23, %c0_24] : memref<8x32xf32, #tpu.memory_space<vmem>>, vector<8x32xf32>
    %43 = vector.broadcast %28 : vector<8x1xf32> to vector<8x32xf32>
    %44 = arith.mulf %43, %42 : vector<8x32xf32>
    %45 = arith.addf %44, %41 : vector<8x32xf32>
    %c0_25 = arith.constant 0 : index
    %c0_26 = arith.constant 0 : index
    %46 = vector.load %arg11[%c0_25, %c0_26] : memref<8x32xf32, #tpu.memory_space<vmem>>, vector<8x32xf32>
    tpu.vector_store %arg11[%c0_25, %c0_26], %45 {strides = array<i32>} : memref<8x32xf32, #tpu.memory_space<vmem>>, vector<8x32xf32>,
    %c0_27 = arith.constant 0 : index
    %c0_28 = arith.constant 0 : index
    %47 = vector.load %arg9[%c0_27, %c0_28] : memref<8x1xf32, #tpu.memory_space<vmem>>, vector<8x1xf32>
    tpu.vector_store %arg9[%c0_27, %c0_28], %26 {strides = array<i32>} : memref<8x1xf32, #tpu.memory_space<vmem>>, vector<8x1xf32>,
    %48 = arith.index_cast %arg1 : i32 to index
    %c0_29 = arith.constant 0 : index
    %c0_30 = arith.constant 0 : index
    %49 = vector.load %arg13[%48, %c0_29, %c0_30] : memref<1x8x128xf32, #tpu.memory_space<vmem>>, vector<1x8x128xf32>
    %50 = vector.shape_cast %49 : vector<1x8x128xf32> to vector<8x128xf32>
    %51 = vector.shape_cast %31 : vector<8x128xf32> to vector<1x8x128xf32>
    tpu.vector_store %arg13[%48, %c0_29, %c0_30], %51 {strides = array<i32>} : memref<1x8x128xf32, #tpu.memory_space<vmem>>, vector<1x8x128xf32>,
    %52 = arith.index_cast %arg1 : i32 to index
    %c0_31 = arith.constant 0 : index
    %c0_32 = arith.constant 0 : index
    %53 = vector.load %arg12[%52, %c0_31, %c0_32] : memref<1x8x1xf32, #tpu.memory_space<vmem>>, vector<1x8x1xf32>
    %54 = vector.shape_cast %53 : vector<1x8x1xf32> to vector<8x1xf32>
    %55 = vector.shape_cast %26 : vector<8x1xf32> to vector<1x8x1xf32>
    tpu.vector_store %arg12[%52, %c0_31, %c0_32], %55 {strides = array<i32>} : memref<1x8x1xf32, #tpu.memory_space<vmem>>, vector<1x8x1xf32>,
    %c0_i32_33 = arith.constant 0 : i32
    %56 = arith.cmpi eq, %arg1, %c0_i32_33 : i32
    %57 = arith.extui %56 : i1 to i32
    %c0_i32_34 = arith.constant 0 : i32
    %58 = arith.cmpi ne, %57, %c0_i32_34 : i32
    scf.if %58 {
      %c0_35 = arith.constant 0 : index
      %c0_36 = arith.constant 0 : index
      %59 = vector.load %arg10[%c0_35, %c0_36] : memref<8x1xf32, #tpu.memory_space<vmem>>, vector<8x1xf32>
      %cst_37 = arith.constant 1.000000e+00 : f32
      %60 = vector.broadcast %cst_37 : f32 to vector<8x1xf32>
      %61 = arith.divf %60, %59 : vector<8x1xf32>
      %c0_38 = arith.constant 0 : index
      %c0_39 = arith.constant 0 : index
      %62 = vector.load %arg11[%c0_38, %c0_39] : memref<8x32xf32, #tpu.memory_space<vmem>>, vector<8x32xf32>
      %63 = vector.broadcast %61 : vector<8x1xf32> to vector<8x32xf32>
      %64 = arith.mulf %62, %63 : vector<8x32xf32>
      %c0_40 = arith.constant 0 : index
      %c0_41 = arith.constant 0 : index
      %65 = vector.load %arg7[%c0_40, %c0_41] : memref<8x32xf32, #tpu.memory_space<vmem>>, vector<8x32xf32>
      tpu.vector_store %arg7[%c0_40, %c0_41], %64 {strides = array<i32>} : memref<8x32xf32, #tpu.memory_space<vmem>>, vector<8x32xf32>,
      %c0_42 = arith.constant 0 : index
      %c0_43 = arith.constant 0 : index
      %66 = vector.load %arg9[%c0_42, %c0_43] : memref<8x1xf32, #tpu.memory_space<vmem>>, vector<8x1xf32>
      %c0_44 = arith.constant 0 : index
      %c0_45 = arith.constant 0 : index
      %c0_46 = arith.constant 0 : index
      %67 = vector.load %arg12[%c0_44, %c0_45, %c0_46] : memref<1x8x1xf32, #tpu.memory_space<vmem>>, vector<1x8x1xf32>
      %68 = vector.shape_cast %67 : vector<1x8x1xf32> to vector<8x1xf32>
      %69 = arith.subf %68, %66 : vector<8x1xf32>
      %70 = math.exp %69 : vector<8x1xf32>
      %71 = arith.mulf %70, %61 : vector<8x1xf32>
      %c0_47 = arith.constant 0 : index
      %c0_48 = arith.constant 0 : index
      %c0_49 = arith.constant 0 : index
      %72 = vector.load %arg13[%c0_47, %c0_48, %c0_49] : memref<1x8x128xf32, #tpu.memory_space<vmem>>, vector<1x8x128xf32>
      %73 = vector.shape_cast %72 : vector<1x8x128xf32> to vector<8x128xf32>
      %74 = vector.broadcast %71 : vector<8x1xf32> to vector<8x128xf32>
      %75 = arith.mulf %73, %74 : vector<8x128xf32>
      %c0_50 = arith.constant 0 : index
      %c0_51 = arith.constant 0 : index
      %76 = vector.load %arg8[%c0_50, %c0_51] : memref<8x128xf32, #tpu.memory_space<vmem>>, vector<8x128xf32>
      tpu.vector_store %arg8[%c0_50, %c0_51], %75 {strides = array<i32>} : memref<8x128xf32, #tpu.memory_space<vmem>>, vector<8x128xf32>,
    } else {
    }
    return
  }
  func.func @transform_0(%arg0: i32, %arg1: i32) -> (i32, i32) {
    %c0_i32 = arith.constant 0 : i32
    %c0_i32_0 = arith.constant 0 : i32
    return %arg0, %c0_i32 : i32, i32
  }
  func.func @transform_1(%arg0: i32, %arg1: i32) -> (i32, i32, i32) {
    %c0_i32 = arith.constant 0 : i32
    %c0_i32_0 = arith.constant 0 : i32
    return %arg0, %arg1, %c0_i32 : i32, i32, i32
  }
  func.func @transform_2(%arg0: i32, %arg1: i32) -> (i32, i32) {
    %c0_i32 = arith.constant 0 : i32
    return %arg0, %arg1 : i32, i32
  }
  func.func @transform_3(%arg0: i32, %arg1: i32) -> (i32, i32) {
    %c0_i32 = arith.constant 0 : i32
    %c0_i32_0 = arith.constant 0 : i32
    %c0_i32_1 = arith.constant 0 : i32
    return %c0_i32, %c0_i32_0 : i32, i32
  }
  func.func @transform_4(%arg0: i32, %arg1: i32) -> (i32, i32) {
    %c0_i32 = arith.constant 0 : i32
    %c0_i32_0 = arith.constant 0 : i32
    %c0_i32_1 = arith.constant 0 : i32
    return %c0_i32, %c0_i32_0 : i32, i32
  }
  func.func @transform_5(%arg0: i32, %arg1: i32) -> (i32, i32) {
    %c0_i32 = arith.constant 0 : i32
    %c0_i32_0 = arith.constant 0 : i32
    return %arg0, %c0_i32 : i32, i32
  }
  func.func @transform_6(%arg0: i32, %arg1: i32) -> (i32, i32) {
    %c0_i32 = arith.constant 0 : i32
    %c0_i32_0 = arith.constant 0 : i32
    return %arg0, %c0_i32 : i32, i32
  }
}

</mosaic_0001>

<llo_original>
// kernel: additive_attention.1
$region0: #{additive_attention.1}
  #allocation0 [shape = 'u32[]', space=smem, size = 0x4, offset = 0x4, fixed_abs, tag = 'smem constant byte address 0x4 - core index']
  #allocation1 [shape = 'u32[144,128]{1,0:T(1,128)}', space=vmem, size = 0x12000, scoped, tag = 'internal scratch']
  #allocation2 [shape = 'f32[8,1]{1,0:T(8,128)}', space=vmem, size = 0x1000, scoped, tag = 'scratch operand']
  #allocation3 [shape = 'f32[8,1]{1,0:T(8,128)}', space=vmem, size = 0x1000, scoped, tag = 'scratch operand']
  #allocation4 [shape = 'f32[8,32]{1,0:T(8,128)}', space=vmem, size = 0x1000, scoped, tag = 'scratch operand']
  #allocation5 [shape = 'f32[1,8,1]{2,1,0:T(8,128)}', space=vmem, size = 0x1000, scoped, tag = 'scratch operand']
  #allocation6 [shape = 'f32[1,8,128]{2,1,0:T(8,128)}', space=vmem, size = 0x1000, scoped, tag = 'scratch operand']
  %s0 = inlined_call_operand.vmem [shape: f32[8,32], index: 0, kind: input, shape index: {}]
  %s1 = inlined_call_operand.vmem [shape: f32[8,128,32], index: 1, kind: input, shape index: {}]
  %s2 = inlined_call_operand.vmem [shape: s32[8,128], index: 2, kind: input, shape index: {}]
  %s3 = inlined_call_operand.vmem [shape: f32[32,32], index: 3, kind: input, shape index: {}]
  %s4 = inlined_call_operand.vmem [shape: f32[1,32], index: 4, kind: input, shape index: {}]
  %s5 = inlined_call_operand.vmem [shape: f32[8,32], index: 5, kind: output, shape index: {0}]
  %s6 = inlined_call_operand.vmem [shape: f32[8,128], index: 6, kind: output, shape index: {1}]
  %7 = xla_tuple %s5, %s6
  %s8 = sld [smem:[#allocation0]]
  $region46: #{additive_attention.1} parent=0
    _
  %s10 = ssub.s32 1, %s8
  %s11 = scalar_select 0, %s10, %s8
  // Predicated region
  $region2: #{additive_attention.1} parent=0 // pred_check
    _
  $region3: #{additive_attention.1} parent=0 // pred_check_branch
    %13 = sbr.rel (0) target = $region5
  $region4: #{additive_attention.1} parent=0 // pred_region
    _
  $region5: #{additive_attention.1} parent=0 // pred_fallthru
    _
  // Predicated region
  $region6: #{additive_attention.1} parent=0 // pred_check
    _
  $region7: #{additive_attention.1} parent=0 // pred_check_branch
    %15 = sbr.rel (0) target = $region9
  $region8: #{additive_attention.1} parent=0 // pred_region
    _
  $region9: #{additive_attention.1} parent=0 // pred_fallthru
    _
  // Predicated region
  $region10: #{additive_attention.1} parent=0 // pred_check
    _
  $region11: #{additive_attention.1} parent=0 // pred_check_branch
    %17 = sbr.rel (0) target = $region13
  $region12: #{additive_attention.1} parent=0 // pred_region
    _
  $region13: #{additive_attention.1} parent=0 // pred_fallthru
    _
  // Predicated region
  $region14: #{additive_attention.1} parent=0 // pred_check
    _
  $region15: #{additive_attention.1} parent=0 // pred_check_branch
    %19 = sbr.rel (0) target = $region17
  $region16: #{additive_attention.1} parent=0 // pred_region
    _
  $region17: #{additive_attention.1} parent=0 // pred_fallthru
    _
  // Predicated region
  $region18: #{additive_attention.1} parent=0 // pred_check
    _
  $region19: #{additive_attention.1} parent=0 // pred_check_branch
    %21 = sbr.rel (0) target = $region21
  $region20: #{additive_attention.1} parent=0 // pred_region
    _
  $region21: #{additive_attention.1} parent=0 // pred_fallthru
    _
  %p22 = scmp.eq.s32.totalorder 0, 0
  // Predicated region
  $region22: #{additive_attention.1} parent=0 // pred_check
    %p23 = pneg %p22
  $region23: #{additive_attention.1} parent=0 // pred_check_branch
    %25 = sbr.rel (%p23) target = $region25
  $region24: #{additive_attention.1} parent=0 // pred_region
    %vm26 = vcmask 7168
    %27 = vst.msk [vmem:[#allocation2] sm:$0xff] %vm26, -1e+30
    %28 = vst.msk [vmem:[#allocation3] sm:$0xff] %vm26, 0.0
    %vm29 = vcmask 261120
    %30 = vst.msk [vmem:[#allocation4] sm:$0xff] %vm29, 0.0
  $region25: #{additive_attention.1} parent=0 // pred_fallthru
    _
  %v31 = vld [vmem:[%s1] sm:$0xff]
  %v32 = vld [vmem:[%s1 + $0x8] sm:$0xff]
  %v33 = vld [vmem:[%s1 + $0x10] sm:$0xff]
  %v34 = vld [vmem:[%s1 + $0x18] sm:$0xff]
  %v35 = vld [vmem:[%s1 + $0x20] sm:$0xff]
  %v36 = vld [vmem:[%s1 + $0x28] sm:$0xff]
  %v37 = vld [vmem:[%s1 + $0x30] sm:$0xff]
  %v38 = vld [vmem:[%s1 + $0x38] sm:$0xff]
  %v39 = vld [vmem:[%s1 + $0x40] sm:$0xff]
  %v40 = vld [vmem:[%s1 + $0x48] sm:$0xff]
  %v41 = vld [vmem:[%s1 + $0x50] sm:$0xff]
  %v42 = vld [vmem:[%s1 + $0x58] sm:$0xff]
  %v43 = vld [vmem:[%s1 + $0x60] sm:$0xff]
  %v44 = vld [vmem:[%s1 + $0x68] sm:$0xff]
  %v45 = vld [vmem:[%s1 + $0x70] sm:$0xff]
  %v46 = vld [vmem:[%s1 + $0x78] sm:$0xff]
  %v47 = vld [vmem:[%s1 + $0x80] sm:$0xff]
  %v48 = vld [vmem:[%s1 + $0x88] sm:$0xff]
  %v49 = vld [vmem:[%s1 + $0x90] sm:$0xff]
  %v50 = vld [vmem:[%s1 + $0x98] sm:$0xff]
  %v51 = vld [vmem:[%s1 + $0xa0] sm:$0xff]
  %v52 = vld [vmem:[%s1 + $0xa8] sm:$0xff]
  %v53 = vld [vmem:[%s1 + $0xb0] sm:$0xff]
  %v54 = vld [vmem:[%s1 + $0xb8] sm:$0xff]
  %v55 = vld [vmem:[%s1 + $0xc0] sm:$0xff]
  %v56 = vld [vmem:[%s1 + $0xc8] sm:$0xff]
  %v57 = vld [vmem:[%s1 + $0xd0] sm:$0xff]
  %v58 = vld [vmem:[%s1 + $0xd8] sm:$0xff]
  %v59 = vld [vmem:[%s1 + $0xe0] sm:$0xff]
  %v60 = vld [vmem:[%s1 + $0xe8] sm:$0xff]
  %v61 = vld [vmem:[%s1 + $0xf0] sm:$0xff]
  %v62 = vld [vmem:[%s1 + $0xf8] sm:$0xff]
  %v63 = vld [vmem:[%s1 + $0x100] sm:$0xff]
  %v64 = vld [vmem:[%s1 + $0x108] sm:$0xff]
  %v65 = vld [vmem:[%s1 + $0x110] sm:$0xff]
  %v66 = vld [vmem:[%s1 + $0x118] sm:$0xff]
  %v67 = vld [vmem:[%s1 + $0x120] sm:$0xff]
  %v68 = vld [vmem:[%s1 + $0x128] sm:$0xff]
  %v69 = vld [vmem:[%s1 + $0x130] sm:$0xff]
  %v70 = vld [vmem:[%s1 + $0x138] sm:$0xff]
  %v71 = vld [vmem:[%s1 + $0x140] sm:$0xff]
  %v72 = vld [vmem:[%s1 + $0x148] sm:$0xff]
  %v73 = vld [vmem:[%s1 + $0x150] sm:$0xff]
  %v74 = vld [vmem:[%s1 + $0x158] sm:$0xff]
  %v75 = vld [vmem:[%s1 + $0x160] sm:$0xff]
  %v76 = vld [vmem:[%s1 + $0x168] sm:$0xff]
  %v77 = vld [vmem:[%s1 + $0x170] sm:$0xff]
  %v78 = vld [vmem:[%s1 + $0x178] sm:$0xff]
  %v79 = vld [vmem:[%s1 + $0x180] sm:$0xff]
  %v80 = vld [vmem:[%s1 + $0x188] sm:$0xff]
  %v81 = vld [vmem:[%s1 + $0x190] sm:$0xff]
  %v82 = vld [vmem:[%s1 + $0x198] sm:$0xff]
  %v83 = vld [vmem:[%s1 + $0x1a0] sm:$0xff]
  %v84 = vld [vmem:[%s1 + $0x1a8] sm:$0xff]
  %v85 = vld [vmem:[%s1 + $0x1b0] sm:$0xff]
  %v86 = vld [vmem:[%s1 + $0x1b8] sm:$0xff]
  %v87 = vld [vmem:[%s1 + $0x1c0] sm:$0xff]
  %v88 = vld [vmem:[%s1 + $0x1c8] sm:$0xff]
  %v89 = vld [vmem:[%s1 + $0x1d0] sm:$0xff]
  %v90 = vld [vmem:[%s1 + $0x1d8] sm:$0xff]
  %v91 = vld [vmem:[%s1 + $0x1e0] sm:$0xff]
  %v92 = vld [vmem:[%s1 + $0x1e8] sm:$0xff]
  %v93 = vld [vmem:[%s1 + $0x1f0] sm:$0xff]
  %v94 = vld [vmem:[%s1 + $0x1f8] sm:$0xff]
  %v95 = vld [vmem:[%s1 + $0x200] sm:$0xff]
  %v96 = vld [vmem:[%s1 + $0x208] sm:$0xff]
  %v97 = vld [vmem:[%s1 + $0x210] sm:$0xff]
  %v98 = vld [vmem:[%s1 + $0x218] sm:$0xff]
  %v99 = vld [vmem:[%s1 + $0x220] sm:$0xff]
  %v100 = vld [vmem:[%s1 + $0x228] sm:$0xff]
  %v101 = vld [vmem:[%s1 + $0x230] sm:$0xff]
  %v102 = vld [vmem:[%s1 + $0x238] sm:$0xff]
  %v103 = vld [vmem:[%s1 + $0x240] sm:$0xff]
  %v104 = vld [vmem:[%s1 + $0x248] sm:$0xff]
  %v105 = vld [vmem:[%s1 + $0x250] sm:$0xff]
  %v106 = vld [vmem:[%s1 + $0x258] sm:$0xff]
  %v107 = vld [vmem:[%s1 + $0x260] sm:$0xff]
  %v108 = vld [vmem:[%s1 + $0x268] sm:$0xff]
  %v109 = vld [vmem:[%s1 + $0x270] sm:$0xff]
  %v110 = vld [vmem:[%s1 + $0x278] sm:$0xff]
  %v111 = vld [vmem:[%s1 + $0x280] sm:$0xff]
  %v112 = vld [vmem:[%s1 + $0x288] sm:$0xff]
  %v113 = vld [vmem:[%s1 + $0x290] sm:$0xff]
  %v114 = vld [vmem:[%s1 + $0x298] sm:$0xff]
  %v115 = vld [vmem:[%s1 + $0x2a0] sm:$0xff]
  %v116 = vld [vmem:[%s1 + $0x2a8] sm:$0xff]
  %v117 = vld [vmem:[%s1 + $0x2b0] sm:$0xff]
  %v118 = vld [vmem:[%s1 + $0x2b8] sm:$0xff]
  %v119 = vld [vmem:[%s1 + $0x2c0] sm:$0xff]
  %v120 = vld [vmem:[%s1 + $0x2c8] sm:$0xff]
  %v121 = vld [vmem:[%s1 + $0x2d0] sm:$0xff]
  %v122 = vld [vmem:[%s1 + $0x2d8] sm:$0xff]
  %v123 = vld [vmem:[%s1 + $0x2e0] sm:$0xff]
  %v124 = vld [vmem:[%s1 + $0x2e8] sm:$0xff]
  %v125 = vld [vmem:[%s1 + $0x2f0] sm:$0xff]
  %v126 = vld [vmem:[%s1 + $0x2f8] sm:$0xff]
  %v127 = vld [vmem:[%s1 + $0x300] sm:$0xff]
  %v128 = vld [vmem:[%s1 + $0x308] sm:$0xff]
  %v129 = vld [vmem:[%s1 + $0x310] sm:$0xff]
  %v130 = vld [vmem:[%s1 + $0x318] sm:$0xff]
  %v131 = vld [vmem:[%s1 + $0x320] sm:$0xff]
  %v132 = vld [vmem:[%s1 + $0x328] sm:$0xff]
  %v133 = vld [vmem:[%s1 + $0x330] sm:$0xff]
  %v134 = vld [vmem:[%s1 + $0x338] sm:$0xff]
  %v135 = vld [vmem:[%s1 + $0x340] sm:$0xff]
  %v136 = vld [vmem:[%s1 + $0x348] sm:$0xff]
  %v137 = vld [vmem:[%s1 + $0x350] sm:$0xff]
  %v138 = vld [vmem:[%s1 + $0x358] sm:$0xff]
  %v139 = vld [vmem:[%s1 + $0x360] sm:$0xff]
  %v140 = vld [vmem:[%s1 + $0x368] sm:$0xff]
  %v141 = vld [vmem:[%s1 + $0x370] sm:$0xff]
  %v142 = vld [vmem:[%s1 + $0x378] sm:$0xff]
  %v143 = vld [vmem:[%s1 + $0x380] sm:$0xff]
  %v144 = vld [vmem:[%s1 + $0x388] sm:$0xff]
  %v145 = vld [vmem:[%s1 + $0x390] sm:$0xff]
  %v146 = vld [vmem:[%s1 + $0x398] sm:$0xff]
  %v147 = vld [vmem:[%s1 + $0x3a0] sm:$0xff]
  %v148 = vld [vmem:[%s1 + $0x3a8] sm:$0xff]
  %v149 = vld [vmem:[%s1 + $0x3b0] sm:$0xff]
  %v150 = vld [vmem:[%s1 + $0x3b8] sm:$0xff]
  %v151 = vld [vmem:[%s1 + $0x3c0] sm:$0xff]
  %v152 = vld [vmem:[%s1 + $0x3c8] sm:$0xff]
  %v153 = vld [vmem:[%s1 + $0x3d0] sm:$0xff]
  %v154 = vld [vmem:[%s1 + $0x3d8] sm:$0xff]
  %v155 = vld [vmem:[%s1 + $0x3e0] sm:$0xff]
  %v156 = vld [vmem:[%s1 + $0x3e8] sm:$0xff]
  %v157 = vld [vmem:[%s1 + $0x3f0] sm:$0xff]
  %v158 = vld [vmem:[%s1 + $0x3f8] sm:$0xff]
  %v159 = vld [vmem:[%s3] sm:$0xff]
  %v160 = vld [vmem:[%s3 + $0x8] sm:$0xff]
  %v161 = vld [vmem:[%s3 + $0x10] sm:$0xff]
  %v162 = vld [vmem:[%s3 + $0x18] sm:$0xff]
  %vm163 = vcmask 261120
  %v165 = vsel %vm163, %v31, 0
  %v168 = vsel %vm163, %v32, 0
  %v171 = vsel %vm163, %v33, 0
  %v174 = vsel %vm163, %v34, 0
  %v177 = vsel %vm163, %v35, 0
  %v180 = vsel %vm163, %v36, 0
  %v183 = vsel %vm163, %v37, 0
  %v186 = vsel %vm163, %v38, 0
  %v189 = vsel %vm163, %v39, 0
  %v192 = vsel %vm163, %v40, 0
  %v195 = vsel %vm163, %v41, 0
  %v198 = vsel %vm163, %v42, 0
  %v201 = vsel %vm163, %v43, 0
  %v204 = vsel %vm163, %v44, 0
  %v207 = vsel %vm163, %v45, 0
  %v210 = vsel %vm163, %v46, 0
  %v213 = vsel %vm163, %v47, 0
  %v216 = vsel %vm163, %v48, 0
  %v219 = vsel %vm163, %v49, 0
  %v222 = vsel %vm163, %v50, 0
  %v225 = vsel %vm163, %v51, 0
  %v228 = vsel %vm163, %v52, 0
  %v231 = vsel %vm163, %v53, 0
  %v234 = vsel %vm163, %v54, 0
  %v237 = vsel %vm163, %v55, 0
  %v240 = vsel %vm163, %v56, 0
  %v243 = vsel %vm163, %v57, 0
  %v246 = vsel %vm163, %v58, 0
  %v249 = vsel %vm163, %v59, 0
  %v252 = vsel %vm163, %v60, 0
  %v255 = vsel %vm163, %v61, 0
  %v258 = vsel %vm163, %v62, 0
  %v261 = vsel %vm163, %v63, 0
  %v264 = vsel %vm163, %v64, 0
  %v267 = vsel %vm163, %v65, 0
  %v270 = vsel %vm163, %v66, 0
  %v273 = vsel %vm163, %v67, 0
  %v276 = vsel %vm163, %v68, 0
  %v279 = vsel %vm163, %v69, 0
  %v282 = vsel %vm163, %v70, 0
  %v285 = vsel %vm163, %v71, 0
  %v288 = vsel %vm163, %v72, 0
  %v291 = vsel %vm163, %v73, 0
  %v294 = vsel %vm163, %v74, 0
  %v297 = vsel %vm163, %v75, 0
  %v300 = vsel %vm163, %v76, 0
  %v303 = vsel %vm163, %v77, 0
  %v306 = vsel %vm163, %v78, 0
  %v309 = vsel %vm163, %v79, 0
  %v312 = vsel %vm163, %v80, 0
  %v315 = vsel %vm163, %v81, 0
  %v318 = vsel %vm163, %v82, 0
  %v321 = vsel %vm163, %v83, 0
  %v324 = vsel %vm163, %v84, 0
  %v327 = vsel %vm163, %v85, 0
  %v330 = vsel %vm163, %v86, 0
  %v333 = vsel %vm163, %v87, 0
  %v336 = vsel %vm163, %v88, 0
  %v339 = vsel %vm163, %v89, 0
  %v342 = vsel %vm163, %v90, 0
  %v345 = vsel %vm163, %v91, 0
  %v348 = vsel %vm163, %v92, 0
  %v351 = vsel %vm163, %v93, 0
  %v354 = vsel %vm163, %v94, 0
  %v357 = vsel %vm163, %v95, 0
  %v360 = vsel %vm163, %v96, 0
  %v363 = vsel %vm163, %v97, 0
  %v366 = vsel %vm163, %v98, 0
  %v369 = vsel %vm163, %v99, 0
  %v372 = vsel %vm163, %v100, 0
  %v375 = vsel %vm163, %v101, 0
  %v378 = vsel %vm163, %v102, 0
  %v381 = vsel %vm163, %v103, 0
  %v384 = vsel %vm163, %v104, 0
  %v387 = vsel %vm163, %v105, 0
  %v390 = vsel %vm163, %v106, 0
  %v393 = vsel %vm163, %v107, 0
  %v396 = vsel %vm163, %v108, 0
  %v399 = vsel %vm163, %v109, 0
  %v402 = vsel %vm163, %v110, 0
  %v405 = vsel %vm163, %v111, 0
  %v408 = vsel %vm163, %v112, 0
  %v411 = vsel %vm163, %v113, 0
  %v414 = vsel %vm163, %v114, 0
  %v417 = vsel %vm163, %v115, 0
  %v420 = vsel %vm163, %v116, 0
  %v423 = vsel %vm163, %v117, 0
  %v426 = vsel %vm163, %v118, 0
  %v429 = vsel %vm163, %v119, 0
  %v432 = vsel %vm163, %v120, 0
  %v435 = vsel %vm163, %v121, 0
  %v438 = vsel %vm163, %v122, 0
  %v441 = vsel %vm163, %v123, 0
  %v444 = vsel %vm163, %v124, 0
  %v447 = vsel %vm163, %v125, 0
  %v450 = vsel %vm163, %v126, 0
  %v453 = vsel %vm163, %v127, 0
  %v456 = vsel %vm163, %v128, 0
  %v459 = vsel %vm163, %v129, 0
  %v462 = vsel %vm163, %v130, 0
  %v465 = vsel %vm163, %v131, 0
  %v468 = vsel %vm163, %v132, 0
  %v471 = vsel %vm163, %v133, 0
  %v474 = vsel %vm163, %v134, 0
  %v477 = vsel %vm163, %v135, 0
  %v480 = vsel %vm163, %v136, 0
  %v483 = vsel %vm163, %v137, 0
  %v486 = vsel %vm163, %v138, 0
  %v489 = vsel %vm163, %v139, 0
  %v492 = vsel %vm163, %v140, 0
  %v495 = vsel %vm163, %v141, 0
  %v498 = vsel %vm163, %v142, 0
  %v501 = vsel %vm163, %v143, 0
  %v504 = vsel %vm163, %v144, 0
  %v507 = vsel %vm163, %v145, 0
  %v510 = vsel %vm163, %v146, 0
  %v513 = vsel %vm163, %v147, 0
  %v516 = vsel %vm163, %v148, 0
  %v519 = vsel %vm163, %v149, 0
  %v522 = vsel %vm163, %v150, 0
  %v525 = vsel %vm163, %v151, 0
  %v528 = vsel %vm163, %v152, 0
  %v531 = vsel %vm163, %v153, 0
  %v534 = vsel %vm163, %v154, 0
  %v537 = vsel %vm163, %v155, 0
  %v540 = vsel %vm163, %v156, 0
  %v543 = vsel %vm163, %v157, 0
  %v546 = vsel %vm163, %v158, 0
  %548 = vmatprep.subr.mxu0 0.0
  %549 = vmatpush1.msra.mxu0 %v159
  %550 = vmatprep.subr.mxu0 0.0
  %551 = vmatpush1.msra.mxu0 %v160
  %552 = vmatprep.subr.mxu0 0.0
  %553 = vmatpush1.msra.mxu0 %v161
  %554 = vmatprep.subr.mxu0 0.0
  %555 = vmatpush1.msra.mxu0 %v162
  %556 = vmatprep.subr.mxu0 0.0
  %557 = vmatpush1.msra.mxu0 0.0
  %558 = vmatprep.subr.mxu0 0.0
  %559 = vmatpush1.msra.mxu0 0.0
  %560 = vmatprep.subr.mxu0 0.0
  %561 = vmatpush1.msra.mxu0 0.0
  %562 = vmatprep.subr.mxu0 0.0
  %563 = vmatpush1.msra.mxu0 0.0
  %564 = vmatprep.subr.mxu0 0.0
  %565 = vmatpush1.msra.mxu0 0.0
  %566 = vmatprep.subr.mxu0 0.0
  %567 = vmatpush1.msra.mxu0 0.0
  %568 = vmatprep.subr.mxu0 0.0
  %569 = vmatpush1.msra.mxu0 0.0
  %570 = vmatprep.subr.mxu0 0.0
  %571 = vmatpush1.msra.mxu0 0.0
  %572 = vmatprep.subr.mxu0 0.0
  %573 = vmatpush1.msra.mxu0 0.0
  %574 = vmatprep.subr.mxu0 0.0
  %575 = vmatpush1.msra.mxu0 0.0
  %576 = vmatprep.subr.mxu0 0.0
  %577 = vmatpush1.msra.mxu0 0.0
  %578 = vmatprep.subr.mxu0 0.0
  %579 = vmatpush1.msra.mxu0 0.0
  %580 = vmatprep.subr.mxu0 0.0
  %581 = vmatpush1.msra.mxu0 0.0
  %582 = vmatprep.subr.mxu0 0.0
  %583 = vmatpush1.msra.mxu0 0.0
  %584 = vmatprep.subr.mxu0 0.0
  %585 = vmatpush1.msra.mxu0 0.0
  %586 = vmatprep.subr.mxu0 0.0
  %587 = vmatpush1.msra.mxu0 0.0
  %588 = vmatprep.subr.mxu0 0.0
  %589 = vmatpush1.msra.mxu0 0.0
  %590 = vmatprep.subr.mxu0 0.0
  %591 = vmatpush1.msra.mxu0 0.0
  %592 = vmatprep.subr.mxu0 0.0
  %593 = vmatpush1.msra.mxu0 0.0
  %594 = vmatprep.subr.mxu0 0.0
  %595 = vmatpush1.msra.mxu0 0.0
  %596 = vmatprep.subr.mxu0 0.0
  %597 = vmatpush1.msra.mxu0 0.0
  %598 = vmatprep.subr.mxu0 0.0
  %599 = vmatpush1.msra.mxu0 0.0
  %600 = vmatprep.subr.mxu0 0.0
  %601 = vmatpush1.msra.mxu0 0.0
  %602 = vmatprep.subr.mxu0 0.0
  %603 = vmatpush1.msra.mxu0 0.0
  %604 = vmatprep.subr.mxu0 0.0
  %605 = vmatpush1.msra.mxu0 0.0
  %606 = vmatprep.subr.mxu0 0.0
  %607 = vmatpush1.msra.mxu0 0.0
  %608 = vmatprep.subr.mxu0 0.0
  %609 = vmatpush1.msra.mxu0 0.0
  %610 = vmatprep.subr.mxu0 0.0
  %611 = vmatpush1.msra.mxu0 0.0
  %612 = vmatprep.mubr.f32.mxu0 0.0
  %613 = vmatmul.mubr.f32.gmra.mrb[0].mxu0 %v165
  %v614 = vpop.f32.mrb[0].mxu0
  %v615 = vadd.f32 0.0, %v614
  %v616 = vpop.f32.mrb[0].mxu0
  %617 = vmatprep.mubr.f32.mxu0 0.0
  %618 = vmatmul.mubr.f32.gmra.mrb[0].mxu0 %v168
  %v619 = vpop.f32.mrb[0].mxu0
  %v620 = vadd.f32 0.0, %v619
  %v621 = vpop.f32.mrb[0].mxu0
  %622 = vmatprep.mubr.f32.mxu0 0.0
  %623 = vmatmul.mubr.f32.gmra.mrb[0].mxu0 %v171
  %v624 = vpop.f32.mrb[0].mxu0
  %v625 = vadd.f32 0.0, %v624
  %v626 = vpop.f32.mrb[0].mxu0
  %627 = vmatprep.mubr.f32.mxu0 0.0
  %628 = vmatmul.mubr.f32.gmra.mrb[0].mxu0 %v174
  %v629 = vpop.f32.mrb[0].mxu0
  %v630 = vadd.f32 0.0, %v629
  %v631 = vpop.f32.mrb[0].mxu0
  %632 = vmatprep.mubr.f32.mxu0 0.0
  %633 = vmatmul.mubr.f32.gmra.mrb[0].mxu0 %v177
  %v634 = vpop.f32.mrb[0].mxu0
  %v635 = vadd.f32 0.0, %v634
  %v636 = vpop.f32.mrb[0].mxu0
  %637 = vmatprep.mubr.f32.mxu0 0.0
  %638 = vmatmul.mubr.f32.gmra.mrb[0].mxu0 %v180
  %v639 = vpop.f32.mrb[0].mxu0
  %v640 = vadd.f32 0.0, %v639
  %v641 = vpop.f32.mrb[0].mxu0
  %642 = vmatprep.mubr.f32.mxu0 0.0
  %643 = vmatmul.mubr.f32.gmra.mrb[0].mxu0 %v183
  %v644 = vpop.f32.mrb[0].mxu0
  %v645 = vadd.f32 0.0, %v644
  %v646 = vpop.f32.mrb[0].mxu0
  %647 = vmatprep.mubr.f32.mxu0 0.0
  %648 = vmatmul.mubr.f32.gmra.mrb[0].mxu0 %v186
  %v649 = vpop.f32.mrb[0].mxu0
  %v650 = vadd.f32 0.0, %v649
  %v651 = vpop.f32.mrb[0].mxu0
  %652 = vmatprep.mubr.f32.mxu0 0.0
  %653 = vmatmul.mubr.f32.gmra.mrb[0].mxu0 %v189
  %v654 = vpop.f32.mrb[0].mxu0
  %v655 = vadd.f32 0.0, %v654
  %v656 = vpop.f32.mrb[0].mxu0
  %657 = vmatprep.mubr.f32.mxu0 0.0
  %658 = vmatmul.mubr.f32.gmra.mrb[0].mxu0 %v192
  %v659 = vpop.f32.mrb[0].mxu0
  %v660 = vadd.f32 0.0, %v659
  %v661 = vpop.f32.mrb[0].mxu0
  %662 = vmatprep.mubr.f32.mxu0 0.0
  %663 = vmatmul.mubr.f32.gmra.mrb[0].mxu0 %v195
  %v664 = vpop.f32.mrb[0].mxu0
  %v665 = vadd.f32 0.0, %v664
  %v666 = vpop.f32.mrb[0].mxu0
  %667 = vmatprep.mubr.f32.mxu0 0.0
  %668 = vmatmul.mubr.f32.gmra.mrb[0].mxu0 %v198
  %v669 = vpop.f32.mrb[0].mxu0
  %v670 = vadd.f32 0.0, %v669
  %v671 = vpop.f32.mrb[0].mxu0
  %672 = vmatprep.mubr.f32.mxu0 0.0
  %673 = vmatmul.mubr.f32.gmra.mrb[0].mxu0 %v201
  %v674 = vpop.f32.mrb[0].mxu0
  %v675 = vadd.f32 0.0, %v674
  %v676 = vpop.f32.mrb[0].mxu0
  %677 = vmatprep.mubr.f32.mxu0 0.0
  %678 = vmatmul.mubr.f32.gmra.mrb[0].mxu0 %v204
  %v679 = vpop.f32.mrb[0].mxu0
  %v680 = vadd.f32 0.0, %v679
  %v681 = vpop.f32.mrb[0].mxu0
  %682 = vmatprep.mubr.f32.mxu0 0.0
  %683 = vmatmul.mubr.f32.gmra.mrb[0].mxu0 %v207
  %v684 = vpop.f32.mrb[0].mxu0
  %v685 = vadd.f32 0.0, %v684
  %v686 = vpop.f32.mrb[0].mxu0
  %687 = vmatprep.mubr.f32.mxu0 0.0
  %688 = vmatmul.mubr.f32.gmra.mrb[0].mxu0 %v210
  %v689 = vpop.f32.mrb[0].mxu0
  %v690 = vadd.f32 0.0, %v689
  %v691 = vpop.f32.mrb[0].mxu0
  %692 = vmatprep.mubr.f32.mxu0 0.0
  %693 = vmatmul.mubr.f32.gmra.mrb[0].mxu0 %v213
  %v694 = vpop.f32.mrb[0].mxu0
  %v695 = vadd.f32 0.0, %v694
  %v696 = vpop.f32.mrb[0].mxu0
  %697 = vmatprep.mubr.f32.mxu0 0.0
  %698 = vmatmul.mubr.f32.gmra.mrb[0].mxu0 %v216
  %v699 = vpop.f32.mrb[0].mxu0
  %v700 = vadd.f32 0.0, %v699
  %v701 = vpop.f32.mrb[0].mxu0
  %702 = vmatprep.mubr.f32.mxu0 0.0
  %703 = vmatmul.mubr.f32.gmra.mrb[0].mxu0 %v219
  %v704 = vpop.f32.mrb[0].mxu0
  %v705 = vadd.f32 0.0, %v704
  %v706 = vpop.f32.mrb[0].mxu0
  %707 = vmatprep.mubr.f32.mxu0 0.0
  %708 = vmatmul.mubr.f32.gmra.mrb[0].mxu0 %v222
  %v709 = vpop.f32.mrb[0].mxu0
  %v710 = vadd.f32 0.0, %v709
  %v711 = vpop.f32.mrb[0].mxu0
  %712 = vmatprep.mubr.f32.mxu0 0.0
  %713 = vmatmul.mubr.f32.gmra.mrb[0].mxu0 %v225
  %v714 = vpop.f32.mrb[0].mxu0
  %v715 = vadd.f32 0.0, %v714
  %v716 = vpop.f32.mrb[0].mxu0
  %717 = vmatprep.mubr.f32.mxu0 0.0
  %718 = vmatmul.mubr.f32.gmra.mrb[0].mxu0 %v228
  %v719 = vpop.f32.mrb[0].mxu0
  %v720 = vadd.f32 0.0, %v719
  %v721 = vpop.f32.mrb[0].mxu0
  %722 = vmatprep.mubr.f32.mxu0 0.0
  %723 = vmatmul.mubr.f32.gmra.mrb[0].mxu0 %v231
  %v724 = vpop.f32.mrb[0].mxu0
  %v725 = vadd.f32 0.0, %v724
  %v726 = vpop.f32.mrb[0].mxu0
  %727 = vmatprep.mubr.f32.mxu0 0.0
  %728 = vmatmul.mubr.f32.gmra.mrb[0].mxu0 %v234
  %v729 = vpop.f32.mrb[0].mxu0
  %v730 = vadd.f32 0.0, %v729
  %v731 = vpop.f32.mrb[0].mxu0
  %732 = vmatprep.mubr.f32.mxu0 0.0
  %733 = vmatmul.mubr.f32.gmra.mrb[0].mxu0 %v237
  %v734 = vpop.f32.mrb[0].mxu0
  %v735 = vadd.f32 0.0, %v734
  %v736 = vpop.f32.mrb[0].mxu0
  %737 = vmatprep.mubr.f32.mxu0 0.0
  %738 = vmatmul.mubr.f32.gmra.mrb[0].mxu0 %v240
  %v739 = vpop.f32.mrb[0].mxu0
  %v740 = vadd.f32 0.0, %v739
  %v741 = vpop.f32.mrb[0].mxu0
  %742 = vmatprep.mubr.f32.mxu0 0.0
  %743 = vmatmul.mubr.f32.gmra.mrb[0].mxu0 %v243
  %v744 = vpop.f32.mrb[0].mxu0
  %v745 = vadd.f32 0.0, %v744
  %v746 = vpop.f32.mrb[0].mxu0
  %747 = vmatprep.mubr.f32.mxu0 0.0
  %748 = vmatmul.mubr.f32.gmra.mrb[0].mxu0 %v246
  %v749 = vpop.f32.mrb[0].mxu0
  %v750 = vadd.f32 0.0, %v749
  %v751 = vpop.f32.mrb[0].mxu0
  %752 = vmatprep.mubr.f32.mxu0 0.0
  %753 = vmatmul.mubr.f32.gmra.mrb[0].mxu0 %v249
  %v754 = vpop.f32.mrb[0].mxu0
  %v755 = vadd.f32 0.0, %v754
  %v756 = vpop.f32.mrb[0].mxu0
  %757 = vmatprep.mubr.f32.mxu0 0.0
  %758 = vmatmul.mubr.f32.gmra.mrb[0].mxu0 %v252
  %v759 = vpop.f32.mrb[0].mxu0
  %v760 = vadd.f32 0.0, %v759
  %v761 = vpop.f32.mrb[0].mxu0
  %762 = vmatprep.mubr.f32.mxu0 0.0
  %763 = vmatmul.mubr.f32.gmra.mrb[0].mxu0 %v255
  %v764 = vpop.f32.mrb[0].mxu0
  %v765 = vadd.f32 0.0, %v764
  %v766 = vpop.f32.mrb[0].mxu0
  %767 = vmatprep.mubr.f32.mxu0 0.0
  %768 = vmatmul.mubr.f32.gmra.mrb[0].mxu0 %v258
  %v769 = vpop.f32.mrb[0].mxu0
  %v770 = vadd.f32 0.0, %v769
  %v771 = vpop.f32.mrb[0].mxu0
  %772 = vmatprep.mubr.f32.mxu0 0.0
  %773 = vmatmul.mubr.f32.gmra.mrb[0].mxu0 %v261
  %v774 = vpop.f32.mrb[0].mxu0
  %v775 = vadd.f32 0.0, %v774
  %v776 = vpop.f32.mrb[0].mxu0
  %777 = vmatprep.mubr.f32.mxu0 0.0
  %778 = vmatmul.mubr.f32.gmra.mrb[0].mxu0 %v264
  %v779 = vpop.f32.mrb[0].mxu0
  %v780 = vadd.f32 0.0, %v779
  %v781 = vpop.f32.mrb[0].mxu0
  %782 = vmatprep.mubr.f32.mxu0 0.0
  %783 = vmatmul.mubr.f32.gmra.mrb[0].mxu0 %v267
  %v784 = vpop.f32.mrb[0].mxu0
  %v785 = vadd.f32 0.0, %v784
  %v786 = vpop.f32.mrb[0].mxu0
  %787 = vmatprep.mubr.f32.mxu0 0.0
  %788 = vmatmul.mubr.f32.gmra.mrb[0].mxu0 %v270
  %v789 = vpop.f32.mrb[0].mxu0
  %v790 = vadd.f32 0.0, %v789
  %v791 = vpop.f32.mrb[0].mxu0
  %792 = vmatprep.mubr.f32.mxu0 0.0
  %793 = vmatmul.mubr.f32.gmra.mrb[0].mxu0 %v273
  %v794 = vpop.f32.mrb[0].mxu0
  %v795 = vadd.f32 0.0, %v794
  %v796 = vpop.f32.mrb[0].mxu0
  %797 = vmatprep.mubr.f32.mxu0 0.0
  %798 = vmatmul.mubr.f32.gmra.mrb[0].mxu0 %v276
  %v799 = vpop.f32.mrb[0].mxu0
  %v800 = vadd.f32 0.0, %v799
  %v801 = vpop.f32.mrb[0].mxu0
  %802 = vmatprep.mubr.f32.mxu0 0.0
  %803 = vmatmul.mubr.f32.gmra.mrb[0].mxu0 %v279
  %v804 = vpop.f32.mrb[0].mxu0
  %v805 = vadd.f32 0.0, %v804
  %v806 = vpop.f32.mrb[0].mxu0
  %807 = vmatprep.mubr.f32.mxu0 0.0
  %808 = vmatmul.mubr.f32.gmra.mrb[0].mxu0 %v282
  %v809 = vpop.f32.mrb[0].mxu0
  %v810 = vadd.f32 0.0, %v809
  %v811 = vpop.f32.mrb[0].mxu0
  %812 = vmatprep.mubr.f32.mxu0 0.0
  %813 = vmatmul.mubr.f32.gmra.mrb[0].mxu0 %v285
  %v814 = vpop.f32.mrb[0].mxu0
  %v815 = vadd.f32 0.0, %v814
  %v816 = vpop.f32.mrb[0].mxu0
  %817 = vmatprep.mubr.f32.mxu0 0.0
  %818 = vmatmul.mubr.f32.gmra.mrb[0].mxu0 %v288
  %v819 = vpop.f32.mrb[0].mxu0
  %v820 = vadd.f32 0.0, %v819
  %v821 = vpop.f32.mrb[0].mxu0
  %822 = vmatprep.mubr.f32.mxu0 0.0
  %823 = vmatmul.mubr.f32.gmra.mrb[0].mxu0 %v291
  %v824 = vpop.f32.mrb[0].mxu0
  %v825 = vadd.f32 0.0, %v824
  %v826 = vpop.f32.mrb[0].mxu0
  %827 = vmatprep.mubr.f32.mxu0 0.0
  %828 = vmatmul.mubr.f32.gmra.mrb[0].mxu0 %v294
  %v829 = vpop.f32.mrb[0].mxu0
  %v830 = vadd.f32 0.0, %v829
  %v831 = vpop.f32.mrb[0].mxu0
  %832 = vmatprep.mubr.f32.mxu0 0.0
  %833 = vmatmul.mubr.f32.gmra.mrb[0].mxu0 %v297
  %v834 = vpop.f32.mrb[0].mxu0
  %v835 = vadd.f32 0.0, %v834
  %v836 = vpop.f32.mrb[0].mxu0
  %837 = vmatprep.mubr.f32.mxu0 0.0
  %838 = vmatmul.mubr.f32.gmra.mrb[0].mxu0 %v300
  %v839 = vpop.f32.mrb[0].mxu0
  %v840 = vadd.f32 0.0, %v839
  %v841 = vpop.f32.mrb[0].mxu0
  %842 = vmatprep.mubr.f32.mxu0 0.0
  %843 = vmatmul.mubr.f32.gmra.mrb[0].mxu0 %v303
  %v844 = vpop.f32.mrb[0].mxu0
  %v845 = vadd.f32 0.0, %v844
  %v846 = vpop.f32.mrb[0].mxu0
  %847 = vmatprep.mubr.f32.mxu0 0.0
  %848 = vmatmul.mubr.f32.gmra.mrb[0].mxu0 %v306
  %v849 = vpop.f32.mrb[0].mxu0
  %v850 = vadd.f32 0.0, %v849
  %v851 = vpop.f32.mrb[0].mxu0
  %852 = vmatprep.mubr.f32.mxu0 0.0
  %853 = vmatmul.mubr.f32.gmra.mrb[0].mxu0 %v309
  %v854 = vpop.f32.mrb[0].mxu0
  %v855 = vadd.f32 0.0, %v854
  %v856 = vpop.f32.mrb[0].mxu0
  %857 = vmatprep.mubr.f32.mxu0 0.0
  %858 = vmatmul.mubr.f32.gmra.mrb[0].mxu0 %v312
  %v859 = vpop.f32.mrb[0].mxu0
  %v860 = vadd.f32 0.0, %v859
  %v861 = vpop.f32.mrb[0].mxu0
  %862 = vmatprep.mubr.f32.mxu0 0.0
  %863 = vmatmul.mubr.f32.gmra.mrb[0].mxu0 %v315
  %v864 = vpop.f32.mrb[0].mxu0
  %v865 = vadd.f32 0.0, %v864
  %v866 = vpop.f32.mrb[0].mxu0
  %867 = vmatprep.mubr.f32.mxu0 0.0
  %868 = vmatmul.mubr.f32.gmra.mrb[0].mxu0 %v318
  %v869 = vpop.f32.mrb[0].mxu0
  %v870 = vadd.f32 0.0, %v869
  %v871 = vpop.f32.mrb[0].mxu0
  %872 = vmatprep.mubr.f32.mxu0 0.0
  %873 = vmatmul.mubr.f32.gmra.mrb[0].mxu0 %v321
  %v874 = vpop.f32.mrb[0].mxu0
  %v875 = vadd.f32 0.0, %v874
  %v876 = vpop.f32.mrb[0].mxu0
  %877 = vmatprep.mubr.f32.mxu0 0.0
  %878 = vmatmul.mubr.f32.gmra.mrb[0].mxu0 %v324
  %v879 = vpop.f32.mrb[0].mxu0
  %v880 = vadd.f32 0.0, %v879
  %v881 = vpop.f32.mrb[0].mxu0
  %882 = vmatprep.mubr.f32.mxu0 0.0
  %883 = vmatmul.mubr.f32.gmra.mrb[0].mxu0 %v327
  %v884 = vpop.f32.mrb[0].mxu0
  %v885 = vadd.f32 0.0, %v884
  %v886 = vpop.f32.mrb[0].mxu0
  %887 = vmatprep.mubr.f32.mxu0 0.0
  %888 = vmatmul.mubr.f32.gmra.mrb[0].mxu0 %v330
  %v889 = vpop.f32.mrb[0].mxu0
  %v890 = vadd.f32 0.0, %v889
  %v891 = vpop.f32.mrb[0].mxu0
  %892 = vmatprep.mubr.f32.mxu0 0.0
  %893 = vmatmul.mubr.f32.gmra.mrb[0].mxu0 %v333
  %v894 = vpop.f32.mrb[0].mxu0
  %v895 = vadd.f32 0.0, %v894
  %v896 = vpop.f32.mrb[0].mxu0
  %897 = vmatprep.mubr.f32.mxu0 0.0
  %898 = vmatmul.mubr.f32.gmra.mrb[0].mxu0 %v336
  %v899 = vpop.f32.mrb[0].mxu0
  %v900 = vadd.f32 0.0, %v899
  %v901 = vpop.f32.mrb[0].mxu0
  %902 = vmatprep.mubr.f32.mxu0 0.0
  %903 = vmatmul.mubr.f32.gmra.mrb[0].mxu0 %v339
  %v904 = vpop.f32.mrb[0].mxu0
  %v905 = vadd.f32 0.0, %v904
  %v906 = vpop.f32.mrb[0].mxu0
  %907 = vmatprep.mubr.f32.mxu0 0.0
  %908 = vmatmul.mubr.f32.gmra.mrb[0].mxu0 %v342
  %v909 = vpop.f32.mrb[0].mxu0
  %v910 = vadd.f32 0.0, %v909
  %v911 = vpop.f32.mrb[0].mxu0
  %912 = vmatprep.mubr.f32.mxu0 0.0
  %913 = vmatmul.mubr.f32.gmra.mrb[0].mxu0 %v345
  %v914 = vpop.f32.mrb[0].mxu0
  %v915 = vadd.f32 0.0, %v914
  %v916 = vpop.f32.mrb[0].mxu0
  %917 = vmatprep.mubr.f32.mxu0 0.0
  %918 = vmatmul.mubr.f32.gmra.mrb[0].mxu0 %v348
  %v919 = vpop.f32.mrb[0].mxu0
  %v920 = vadd.f32 0.0, %v919
  %v921 = vpop.f32.mrb[0].mxu0
  %922 = vmatprep.mubr.f32.mxu0 0.0
  %923 = vmatmul.mubr.f32.gmra.mrb[0].mxu0 %v351
  %v924 = vpop.f32.mrb[0].mxu0
  %v925 = vadd.f32 0.0, %v924
  %v926 = vpop.f32.mrb[0].mxu0
  %927 = vmatprep.mubr.f32.mxu0 0.0
  %928 = vmatmul.mubr.f32.gmra.mrb[0].mxu0 %v354
  %v929 = vpop.f32.mrb[0].mxu0
  %v930 = vadd.f32 0.0, %v929
  %v931 = vpop.f32.mrb[0].mxu0
  %932 = vmatprep.mubr.f32.mxu0 0.0
  %933 = vmatmul.mubr.f32.gmra.mrb[0].mxu0 %v357
  %v934 = vpop.f32.mrb[0].mxu0
  %v935 = vadd.f32 0.0, %v934
  %v936 = vpop.f32.mrb[0].mxu0
  %937 = vmatprep.mubr.f32.mxu0 0.0
  %938 = vmatmul.mubr.f32.gmra.mrb[0].mxu0 %v360
  %v939 = vpop.f32.mrb[0].mxu0
  %v940 = vadd.f32 0.0, %v939
  %v941 = vpop.f32.mrb[0].mxu0
  %942 = vmatprep.mubr.f32.mxu0 0.0
  %943 = vmatmul.mubr.f32.gmra.mrb[0].mxu0 %v363
  %v944 = vpop.f32.mrb[0].mxu0
  %v945 = vadd.f32 0.0, %v944
  %v946 = vpop.f32.mrb[0].mxu0
  %947 = vmatprep.mubr.f32.mxu0 0.0
  %948 = vmatmul.mubr.f32.gmra.mrb[0].mxu0 %v366
  %v949 = vpop.f32.mrb[0].mxu0
  %v950 = vadd.f32 0.0, %v949
  %v951 = vpop.f32.mrb[0].mxu0
  %952 = vmatprep.mubr.f32.mxu0 0.0
  %953 = vmatmul.mubr.f32.gmra.mrb[0].mxu0 %v369
  %v954 = vpop.f32.mrb[0].mxu0
  %v955 = vadd.f32 0.0, %v954
  %v956 = vpop.f32.mrb[0].mxu0
  %957 = vmatprep.mubr.f32.mxu0 0.0
  %958 = vmatmul.mubr.f32.gmra.mrb[0].mxu0 %v372
  %v959 = vpop.f32.mrb[0].mxu0
  %v960 = vadd.f32 0.0, %v959
  %v961 = vpop.f32.mrb[0].mxu0
  %962 = vmatprep.mubr.f32.mxu0 0.0
  %963 = vmatmul.mubr.f32.gmra.mrb[0].mxu0 %v375
  %v964 = vpop.f32.mrb[0].mxu0
  %v965 = vadd.f32 0.0, %v964
  %v966 = vpop.f32.mrb[0].mxu0
  %967 = vmatprep.mubr.f32.mxu0 0.0
  %968 = vmatmul.mubr.f32.gmra.mrb[0].mxu0 %v378
  %v969 = vpop.f32.mrb[0].mxu0
  %v970 = vadd.f32 0.0, %v969
  %v971 = vpop.f32.mrb[0].mxu0
  %972 = vmatprep.mubr.f32.mxu0 0.0
  %973 = vmatmul.mubr.f32.gmra.mrb[0].mxu0 %v381
  %v974 = vpop.f32.mrb[0].mxu0
  %v975 = vadd.f32 0.0, %v974
  %v976 = vpop.f32.mrb[0].mxu0
  %977 = vmatprep.mubr.f32.mxu0 0.0
  %978 = vmatmul.mubr.f32.gmra.mrb[0].mxu0 %v384
  %v979 = vpop.f32.mrb[0].mxu0
  %v980 = vadd.f32 0.0, %v979
  %v981 = vpop.f32.mrb[0].mxu0
  %982 = vmatprep.mubr.f32.mxu0 0.0
  %983 = vmatmul.mubr.f32.gmra.mrb[0].mxu0 %v387
  %v984 = vpop.f32.mrb[0].mxu0
  %v985 = vadd.f32 0.0, %v984
  %v986 = vpop.f32.mrb[0].mxu0
  %987 = vmatprep.mubr.f32.mxu0 0.0
  %988 = vmatmul.mubr.f32.gmra.mrb[0].mxu0 %v390
  %v989 = vpop.f32.mrb[0].mxu0
  %v990 = vadd.f32 0.0, %v989
  %v991 = vpop.f32.mrb[0].mxu0
  %992 = vmatprep.mubr.f32.mxu0 0.0
  %993 = vmatmul.mubr.f32.gmra.mrb[0].mxu0 %v393
  %v994 = vpop.f32.mrb[0].mxu0
  %v995 = vadd.f32 0.0, %v994
  %v996 = vpop.f32.mrb[0].mxu0
  %997 = vmatprep.mubr.f32.mxu0 0.0
  %998 = vmatmul.mubr.f32.gmra.mrb[0].mxu0 %v396
  %v999 = vpop.f32.mrb[0].mxu0
  %v1000 = vadd.f32 0.0, %v999
  %v1001 = vpop.f32.mrb[0].mxu0
  %1002 = vmatprep.mubr.f32.mxu0 0.0
  %1003 = vmatmul.mubr.f32.gmra.mrb[0].mxu0 %v399
  %v1004 = vpop.f32.mrb[0].mxu0
  %v1005 = vadd.f32 0.0, %v1004
  %v1006 = vpop.f32.mrb[0].mxu0
  %1007 = vmatprep.mubr.f32.mxu0 0.0
  %1008 = vmatmul.mubr.f32.gmra.mrb[0].mxu0 %v402
  %v1009 = vpop.f32.mrb[0].mxu0
  %v1010 = vadd.f32 0.0, %v1009
  %v1011 = vpop.f32.mrb[0].mxu0
  %1012 = vmatprep.mubr.f32.mxu0 0.0
  %1013 = vmatmul.mubr.f32.gmra.mrb[0].mxu0 %v405
  %v1014 = vpop.f32.mrb[0].mxu0
  %v1015 = vadd.f32 0.0, %v1014
  %v1016 = vpop.f32.mrb[0].mxu0
  %1017 = vmatprep.mubr.f32.mxu0 0.0
  %1018 = vmatmul.mubr.f32.gmra.mrb[0].mxu0 %v408
  %v1019 = vpop.f32.mrb[0].mxu0
  %v1020 = vadd.f32 0.0, %v1019
  %v1021 = vpop.f32.mrb[0].mxu0
  %1022 = vmatprep.mubr.f32.mxu0 0.0
  %1023 = vmatmul.mubr.f32.gmra.mrb[0].mxu0 %v411
  %v1024 = vpop.f32.mrb[0].mxu0
  %v1025 = vadd.f32 0.0, %v1024
  %v1026 = vpop.f32.mrb[0].mxu0
  %1027 = vmatprep.mubr.f32.mxu0 0.0
  %1028 = vmatmul.mubr.f32.gmra.mrb[0].mxu0 %v414
  %v1029 = vpop.f32.mrb[0].mxu0
  %v1030 = vadd.f32 0.0, %v1029
  %v1031 = vpop.f32.mrb[0].mxu0
  %1032 = vmatprep.mubr.f32.mxu0 0.0
  %1033 = vmatmul.mubr.f32.gmra.mrb[0].mxu0 %v417
  %v1034 = vpop.f32.mrb[0].mxu0
  %v1035 = vadd.f32 0.0, %v1034
  %v1036 = vpop.f32.mrb[0].mxu0
  %1037 = vmatprep.mubr.f32.mxu0 0.0
  %1038 = vmatmul.mubr.f32.gmra.mrb[0].mxu0 %v420
  %v1039 = vpop.f32.mrb[0].mxu0
  %v1040 = vadd.f32 0.0, %v1039
  %v1041 = vpop.f32.mrb[0].mxu0
  %1042 = vmatprep.mubr.f32.mxu0 0.0
  %1043 = vmatmul.mubr.f32.gmra.mrb[0].mxu0 %v423
  %v1044 = vpop.f32.mrb[0].mxu0
  %v1045 = vadd.f32 0.0, %v1044
  %v1046 = vpop.f32.mrb[0].mxu0
  %1047 = vmatprep.mubr.f32.mxu0 0.0
  %1048 = vmatmul.mubr.f32.gmra.mrb[0].mxu0 %v426
  %v1049 = vpop.f32.mrb[0].mxu0
  %v1050 = vadd.f32 0.0, %v1049
  %v1051 = vpop.f32.mrb[0].mxu0
  %1052 = vmatprep.mubr.f32.mxu0 0.0
  %1053 = vmatmul.mubr.f32.gmra.mrb[0].mxu0 %v429
  %v1054 = vpop.f32.mrb[0].mxu0
  %v1055 = vadd.f32 0.0, %v1054
  %v1056 = vpop.f32.mrb[0].mxu0
  %1057 = vmatprep.mubr.f32.mxu0 0.0
  %1058 = vmatmul.mubr.f32.gmra.mrb[0].mxu0 %v432
  %v1059 = vpop.f32.mrb[0].mxu0
  %v1060 = vadd.f32 0.0, %v1059
  %v1061 = vpop.f32.mrb[0].mxu0
  %1062 = vmatprep.mubr.f32.mxu0 0.0
  %1063 = vmatmul.mubr.f32.gmra.mrb[0].mxu0 %v435
  %v1064 = vpop.f32.mrb[0].mxu0
  %v1065 = vadd.f32 0.0, %v1064
  %v1066 = vpop.f32.mrb[0].mxu0
  %1067 = vmatprep.mubr.f32.mxu0 0.0
  %1068 = vmatmul.mubr.f32.gmra.mrb[0].mxu0 %v438
  %v1069 = vpop.f32.mrb[0].mxu0
  %v1070 = vadd.f32 0.0, %v1069
  %v1071 = vpop.f32.mrb[0].mxu0
  %1072 = vmatprep.mubr.f32.mxu0 0.0
  %1073 = vmatmul.mubr.f32.gmra.mrb[0].mxu0 %v441
  %v1074 = vpop.f32.mrb[0].mxu0
  %v1075 = vadd.f32 0.0, %v1074
  %v1076 = vpop.f32.mrb[0].mxu0
  %1077 = vmatprep.mubr.f32.mxu0 0.0
  %1078 = vmatmul.mubr.f32.gmra.mrb[0].mxu0 %v444
  %v1079 = vpop.f32.mrb[0].mxu0
  %v1080 = vadd.f32 0.0, %v1079
  %v1081 = vpop.f32.mrb[0].mxu0
  %1082 = vmatprep.mubr.f32.mxu0 0.0
  %1083 = vmatmul.mubr.f32.gmra.mrb[0].mxu0 %v447
  %v1084 = vpop.f32.mrb[0].mxu0
  %v1085 = vadd.f32 0.0, %v1084
  %v1086 = vpop.f32.mrb[0].mxu0
  %1087 = vmatprep.mubr.f32.mxu0 0.0
  %1088 = vmatmul.mubr.f32.gmra.mrb[0].mxu0 %v450
  %v1089 = vpop.f32.mrb[0].mxu0
  %v1090 = vadd.f32 0.0, %v1089
  %v1091 = vpop.f32.mrb[0].mxu0
  %1092 = vmatprep.mubr.f32.mxu0 0.0
  %1093 = vmatmul.mubr.f32.gmra.mrb[0].mxu0 %v453
  %v1094 = vpop.f32.mrb[0].mxu0
  %v1095 = vadd.f32 0.0, %v1094
  %v1096 = vpop.f32.mrb[0].mxu0
  %1097 = vmatprep.mubr.f32.mxu0 0.0
  %1098 = vmatmul.mubr.f32.gmra.mrb[0].mxu0 %v456
  %v1099 = vpop.f32.mrb[0].mxu0
  %v1100 = vadd.f32 0.0, %v1099
  %v1101 = vpop.f32.mrb[0].mxu0
  %1102 = vmatprep.mubr.f32.mxu0 0.0
  %1103 = vmatmul.mubr.f32.gmra.mrb[0].mxu0 %v459
  %v1104 = vpop.f32.mrb[0].mxu0
  %v1105 = vadd.f32 0.0, %v1104
  %v1106 = vpop.f32.mrb[0].mxu0
  %1107 = vmatprep.mubr.f32.mxu0 0.0
  %1108 = vmatmul.mubr.f32.gmra.mrb[0].mxu0 %v462
  %v1109 = vpop.f32.mrb[0].mxu0
  %v1110 = vadd.f32 0.0, %v1109
  %v1111 = vpop.f32.mrb[0].mxu0
  %1112 = vmatprep.mubr.f32.mxu0 0.0
  %1113 = vmatmul.mubr.f32.gmra.mrb[0].mxu0 %v465
  %v1114 = vpop.f32.mrb[0].mxu0
  %v1115 = vadd.f32 0.0, %v1114
  %v1116 = vpop.f32.mrb[0].mxu0
  %1117 = vmatprep.mubr.f32.mxu0 0.0
  %1118 = vmatmul.mubr.f32.gmra.mrb[0].mxu0 %v468
  %v1119 = vpop.f32.mrb[0].mxu0
  %v1120 = vadd.f32 0.0, %v1119
  %v1121 = vpop.f32.mrb[0].mxu0
  %1122 = vmatprep.mubr.f32.mxu0 0.0
  %1123 = vmatmul.mubr.f32.gmra.mrb[0].mxu0 %v471
  %v1124 = vpop.f32.mrb[0].mxu0
  %v1125 = vadd.f32 0.0, %v1124
  %v1126 = vpop.f32.mrb[0].mxu0
  %1127 = vmatprep.mubr.f32.mxu0 0.0
  %1128 = vmatmul.mubr.f32.gmra.mrb[0].mxu0 %v474
  %v1129 = vpop.f32.mrb[0].mxu0
  %v1130 = vadd.f32 0.0, %v1129
  %v1131 = vpop.f32.mrb[0].mxu0
  %1132 = vmatprep.mubr.f32.mxu0 0.0
  %1133 = vmatmul.mubr.f32.gmra.mrb[0].mxu0 %v477
  %v1134 = vpop.f32.mrb[0].mxu0
  %v1135 = vadd.f32 0.0, %v1134
  %v1136 = vpop.f32.mrb[0].mxu0
  %1137 = vmatprep.mubr.f32.mxu0 0.0
  %1138 = vmatmul.mubr.f32.gmra.mrb[0].mxu0 %v480
  %v1139 = vpop.f32.mrb[0].mxu0
  %v1140 = vadd.f32 0.0, %v1139
  %v1141 = vpop.f32.mrb[0].mxu0
  %1142 = vmatprep.mubr.f32.mxu0 0.0
  %1143 = vmatmul.mubr.f32.gmra.mrb[0].mxu0 %v483
  %v1144 = vpop.f32.mrb[0].mxu0
  %v1145 = vadd.f32 0.0, %v1144
  %v1146 = vpop.f32.mrb[0].mxu0
  %1147 = vmatprep.mubr.f32.mxu0 0.0
  %1148 = vmatmul.mubr.f32.gmra.mrb[0].mxu0 %v486
  %v1149 = vpop.f32.mrb[0].mxu0
  %v1150 = vadd.f32 0.0, %v1149
  %v1151 = vpop.f32.mrb[0].mxu0
  %1152 = vmatprep.mubr.f32.mxu0 0.0
  %1153 = vmatmul.mubr.f32.gmra.mrb[0].mxu0 %v489
  %v1154 = vpop.f32.mrb[0].mxu0
  %v1155 = vadd.f32 0.0, %v1154
  %v1156 = vpop.f32.mrb[0].mxu0
  %1157 = vmatprep.mubr.f32.mxu0 0.0
  %1158 = vmatmul.mubr.f32.gmra.mrb[0].mxu0 %v492
  %v1159 = vpop.f32.mrb[0].mxu0
  %v1160 = vadd.f32 0.0, %v1159
  %v1161 = vpop.f32.mrb[0].mxu0
  %1162 = vmatprep.mubr.f32.mxu0 0.0
  %1163 = vmatmul.mubr.f32.gmra.mrb[0].mxu0 %v495
  %v1164 = vpop.f32.mrb[0].mxu0
  %v1165 = vadd.f32 0.0, %v1164
  %v1166 = vpop.f32.mrb[0].mxu0
  %1167 = vmatprep.mubr.f32.mxu0 0.0
  %1168 = vmatmul.mubr.f32.gmra.mrb[0].mxu0 %v498
  %v1169 = vpop.f32.mrb[0].mxu0
  %v1170 = vadd.f32 0.0, %v1169
  %v1171 = vpop.f32.mrb[0].mxu0
  %1172 = vmatprep.mubr.f32.mxu0 0.0
  %1173 = vmatmul.mubr.f32.gmra.mrb[0].mxu0 %v501
  %v1174 = vpop.f32.mrb[0].mxu0
  %v1175 = vadd.f32 0.0, %v1174
  %v1176 = vpop.f32.mrb[0].mxu0
  %1177 = vmatprep.mubr.f32.mxu0 0.0
  %1178 = vmatmul.mubr.f32.gmra.mrb[0].mxu0 %v504
  %v1179 = vpop.f32.mrb[0].mxu0
  %v1180 = vadd.f32 0.0, %v1179
  %v1181 = vpop.f32.mrb[0].mxu0
  %1182 = vmatprep.mubr.f32.mxu0 0.0
  %1183 = vmatmul.mubr.f32.gmra.mrb[0].mxu0 %v507
  %v1184 = vpop.f32.mrb[0].mxu0
  %v1185 = vadd.f32 0.0, %v1184
  %v1186 = vpop.f32.mrb[0].mxu0
  %1187 = vmatprep.mubr.f32.mxu0 0.0
  %1188 = vmatmul.mubr.f32.gmra.mrb[0].mxu0 %v510
  %v1189 = vpop.f32.mrb[0].mxu0
  %v1190 = vadd.f32 0.0, %v1189
  %v1191 = vpop.f32.mrb[0].mxu0
  %1192 = vmatprep.mubr.f32.mxu0 0.0
  %1193 = vmatmul.mubr.f32.gmra.mrb[0].mxu0 %v513
  %v1194 = vpop.f32.mrb[0].mxu0
  %v1195 = vadd.f32 0.0, %v1194
  %v1196 = vpop.f32.mrb[0].mxu0
  %1197 = vmatprep.mubr.f32.mxu0 0.0
  %1198 = vmatmul.mubr.f32.gmra.mrb[0].mxu0 %v516
  %v1199 = vpop.f32.mrb[0].mxu0
  %v1200 = vadd.f32 0.0, %v1199
  %v1201 = vpop.f32.mrb[0].mxu0
  %1202 = vmatprep.mubr.f32.mxu0 0.0
  %1203 = vmatmul.mubr.f32.gmra.mrb[0].mxu0 %v519
  %v1204 = vpop.f32.mrb[0].mxu0
  %v1205 = vadd.f32 0.0, %v1204
  %v1206 = vpop.f32.mrb[0].mxu0
  %1207 = vmatprep.mubr.f32.mxu0 0.0
  %1208 = vmatmul.mubr.f32.gmra.mrb[0].mxu0 %v522
  %v1209 = vpop.f32.mrb[0].mxu0
  %v1210 = vadd.f32 0.0, %v1209
  %v1211 = vpop.f32.mrb[0].mxu0
  %1212 = vmatprep.mubr.f32.mxu0 0.0
  %1213 = vmatmul.mubr.f32.gmra.mrb[0].mxu0 %v525
  %v1214 = vpop.f32.mrb[0].mxu0
  %v1215 = vadd.f32 0.0, %v1214
  %v1216 = vpop.f32.mrb[0].mxu0
  %1217 = vmatprep.mubr.f32.mxu0 0.0
  %1218 = vmatmul.mubr.f32.gmra.mrb[0].mxu0 %v528
  %v1219 = vpop.f32.mrb[0].mxu0
  %v1220 = vadd.f32 0.0, %v1219
  %v1221 = vpop.f32.mrb[0].mxu0
  %1222 = vmatprep.mubr.f32.mxu0 0.0
  %1223 = vmatmul.mubr.f32.gmra.mrb[0].mxu0 %v531
  %v1224 = vpop.f32.mrb[0].mxu0
  %v1225 = vadd.f32 0.0, %v1224
  %v1226 = vpop.f32.mrb[0].mxu0
  %1227 = vmatprep.mubr.f32.mxu0 0.0
  %1228 = vmatmul.mubr.f32.gmra.mrb[0].mxu0 %v534
  %v1229 = vpop.f32.mrb[0].mxu0
  %v1230 = vadd.f32 0.0, %v1229
  %v1231 = vpop.f32.mrb[0].mxu0
  %1232 = vmatprep.mubr.f32.mxu0 0.0
  %1233 = vmatmul.mubr.f32.gmra.mrb[0].mxu0 %v537
  %v1234 = vpop.f32.mrb[0].mxu0
  %v1235 = vadd.f32 0.0, %v1234
  %v1236 = vpop.f32.mrb[0].mxu0
  %1237 = vmatprep.mubr.f32.mxu0 0.0
  %1238 = vmatmul.mubr.f32.gmra.mrb[0].mxu0 %v540
  %v1239 = vpop.f32.mrb[0].mxu0
  %v1240 = vadd.f32 0.0, %v1239
  %v1241 = vpop.f32.mrb[0].mxu0
  %1242 = vmatprep.mubr.f32.mxu0 0.0
  %1243 = vmatmul.mubr.f32.gmra.mrb[0].mxu0 %v543
  %v1244 = vpop.f32.mrb[0].mxu0
  %v1245 = vadd.f32 0.0, %v1244
  %v1246 = vpop.f32.mrb[0].mxu0
  %1247 = vmatprep.mubr.f32.mxu0 0.0
  %1248 = vmatmul.mubr.f32.gmra.mrb[0].mxu0 %v546
  %v1249 = vpop.f32.mrb[0].mxu0
  %v1250 = vadd.f32 0.0, %v1249
  %v1251 = vpop.f32.mrb[0].mxu0
  %1252 = vdwg.mxu0
  %v1253 = vld [vmem:[%s0] sm:$0xff]
  %v1255 = vcombine.high %v1253, %v1253
  %v1257 = vunpack.c.l.s4 1966171168
  %v1258 = vunpack.c.0.s8 %v1257
  %v1259 = vlaneseq
  %v1260 = vshrl.u32 %v1259, 7
  %v1261 = vsub.s32 %v1258, %v1260
  %v1262 = vrot.slane %v1253, %v1261
  %v1264 = vunpack.c.l.s4 1966171168
  %v1265 = vunpack.c.0.s8 %v1264
  %v1266 = vlaneseq
  %v1267 = vshrl.u32 %v1266, 7
  %v1268 = vsub.s32 %v1265, %v1267
  %v1269 = vrot.slane %v1255, %v1268
  %v1270 = vcombine.high %v1262, %v1262
  %v1271 = vcombine.high %v1269, %v1269
  %v1273 = vunpack.c.l.s4 1966171168
  %v1274 = vunpack.c.0.s8 %v1273
  %v1275 = vlaneseq
  %v1276 = vshrl.u32 %v1275, 7
  %v1277 = vsub.s32 %v1274, %v1276
  %v1278 = vrot.slane %v1262, %v1277
  %v1280 = vunpack.c.l.s4 1966171168
  %v1281 = vunpack.c.0.s8 %v1280
  %v1282 = vlaneseq
  %v1283 = vshrl.u32 %v1282, 7
  %v1284 = vsub.s32 %v1281, %v1283
  %v1285 = vrot.slane %v1269, %v1284
  %v1287 = vunpack.c.l.s4 1966171168
  %v1288 = vunpack.c.0.s8 %v1287
  %v1289 = vlaneseq
  %v1290 = vshrl.u32 %v1289, 7
  %v1291 = vsub.s32 %v1288, %v1290
  %v1292 = vrot.slane %v1270, %v1291
  %v1294 = vunpack.c.l.s4 1966171168
  %v1295 = vunpack.c.0.s8 %v1294
  %v1296 = vlaneseq
  %v1297 = vshrl.u32 %v1296, 7
  %v1298 = vsub.s32 %v1295, %v1297
  %v1299 = vrot.slane %v1271, %v1298
  %v1300 = vcombine.high %v1278, %v1278
  %v1301 = vcombine.high %v1285, %v1285
  %v1302 = vcombine.high %v1292, %v1292
  %v1303 = vcombine.high %v1299, %v1299
  %v1304 = vlaneseq
  %v1305 = vshrl.u32 %v1304, 7
  %v1306 = vsub.s32 0, %v1305
  %v1307 = vrot.slane %v1278, %v1306
  %v1308 = vlaneseq
  %v1309 = vshrl.u32 %v1308, 7
  %v1310 = vsub.s32 0, %v1309
  %v1311 = vrot.slane %v1292, %v1310
  %v1312 = vlaneseq
  %v1313 = vshrl.u32 %v1312, 7
  %v1314 = vsub.s32 0, %v1313
  %v1315 = vrot.slane %v1300, %v1314
  %v1316 = vlaneseq
  %v1317 = vshrl.u32 %v1316, 7
  %v1318 = vsub.s32 0, %v1317
  %v1319 = vrot.slane %v1302, %v1318
  %v1320 = vlaneseq
  %v1321 = vshrl.u32 %v1320, 7
  %v1322 = vsub.s32 0, %v1321
  %v1323 = vrot.slane %v1285, %v1322
  %v1324 = vlaneseq
  %v1325 = vshrl.u32 %v1324, 7
  %v1326 = vsub.s32 0, %v1325
  %v1327 = vrot.slane %v1299, %v1326
  %v1328 = vlaneseq
  %v1329 = vshrl.u32 %v1328, 7
  %v1330 = vsub.s32 0, %v1329
  %v1331 = vrot.slane %v1301, %v1330
  %v1332 = vlaneseq
  %v1333 = vshrl.u32 %v1332, 7
  %v1334 = vsub.s32 0, %v1333
  %v1335 = vrot.slane %v1303, %v1334
  %v1344 = vadd.f32 %v1307, %v615
  %v1345 = vadd.f32 %v1307, %v620
  %v1346 = vadd.f32 %v1307, %v625
  %v1347 = vadd.f32 %v1307, %v630
  %v1348 = vadd.f32 %v1307, %v635
  %v1349 = vadd.f32 %v1307, %v640
  %v1350 = vadd.f32 %v1307, %v645
  %v1351 = vadd.f32 %v1307, %v650
  %v1352 = vadd.f32 %v1307, %v655
  %v1353 = vadd.f32 %v1307, %v660
  %v1354 = vadd.f32 %v1307, %v665
  %v1355 = vadd.f32 %v1307, %v670
  %v1356 = vadd.f32 %v1307, %v675
  %v1357 = vadd.f32 %v1307, %v680
  %v1358 = vadd.f32 %v1307, %v685
  %v1359 = vadd.f32 %v1307, %v690
  %v1360 = vadd.f32 %v1311, %v695
  %v1361 = vadd.f32 %v1311, %v700
  %v1362 = vadd.f32 %v1311, %v705
  %v1363 = vadd.f32 %v1311, %v710
  %v1364 = vadd.f32 %v1311, %v715
  %v1365 = vadd.f32 %v1311, %v720
  %v1366 = vadd.f32 %v1311, %v725
  %v1367 = vadd.f32 %v1311, %v730
  %v1368 = vadd.f32 %v1311, %v735
  %v1369 = vadd.f32 %v1311, %v740
  %v1370 = vadd.f32 %v1311, %v745
  %v1371 = vadd.f32 %v1311, %v750
  %v1372 = vadd.f32 %v1311, %v755
  %v1373 = vadd.f32 %v1311, %v760
  %v1374 = vadd.f32 %v1311, %v765
  %v1375 = vadd.f32 %v1311, %v770
  %v1376 = vadd.f32 %v1315, %v775
  %v1377 = vadd.f32 %v1315, %v780
  %v1378 = vadd.f32 %v1315, %v785
  %v1379 = vadd.f32 %v1315, %v790
  %v1380 = vadd.f32 %v1315, %v795
  %v1381 = vadd.f32 %v1315, %v800
  %v1382 = vadd.f32 %v1315, %v805
  %v1383 = vadd.f32 %v1315, %v810
  %v1384 = vadd.f32 %v1315, %v815
  %v1385 = vadd.f32 %v1315, %v820
  %v1386 = vadd.f32 %v1315, %v825
  %v1387 = vadd.f32 %v1315, %v830
  %v1388 = vadd.f32 %v1315, %v835
  %v1389 = vadd.f32 %v1315, %v840
  %v1390 = vadd.f32 %v1315, %v845
  %v1391 = vadd.f32 %v1315, %v850
  %v1392 = vadd.f32 %v1319, %v855
  %v1393 = vadd.f32 %v1319, %v860
  %v1394 = vadd.f32 %v1319, %v865
  %v1395 = vadd.f32 %v1319, %v870
  %v1396 = vadd.f32 %v1319, %v875
  %v1397 = vadd.f32 %v1319, %v880
  %v1398 = vadd.f32 %v1319, %v885
  %v1399 = vadd.f32 %v1319, %v890
  %v1400 = vadd.f32 %v1319, %v895
  %v1401 = vadd.f32 %v1319, %v900
  %v1402 = vadd.f32 %v1319, %v905
  %v1403 = vadd.f32 %v1319, %v910
  %v1404 = vadd.f32 %v1319, %v915
  %v1405 = vadd.f32 %v1319, %v920
  %v1406 = vadd.f32 %v1319, %v925
  %v1407 = vadd.f32 %v1319, %v930
  %v1408 = vadd.f32 %v1323, %v935
  %v1409 = vadd.f32 %v1323, %v940
  %v1410 = vadd.f32 %v1323, %v945
  %v1411 = vadd.f32 %v1323, %v950
  %v1412 = vadd.f32 %v1323, %v955
  %v1413 = vadd.f32 %v1323, %v960
  %v1414 = vadd.f32 %v1323, %v965
  %v1415 = vadd.f32 %v1323, %v970
  %v1416 = vadd.f32 %v1323, %v975
  %v1417 = vadd.f32 %v1323, %v980
  %v1418 = vadd.f32 %v1323, %v985
  %v1419 = vadd.f32 %v1323, %v990
  %v1420 = vadd.f32 %v1323, %v995
  %v1421 = vadd.f32 %v1323, %v1000
  %v1422 = vadd.f32 %v1323, %v1005
  %v1423 = vadd.f32 %v1323, %v1010
  %v1424 = vadd.f32 %v1327, %v1015
  %v1425 = vadd.f32 %v1327, %v1020
  %v1426 = vadd.f32 %v1327, %v1025
  %v1427 = vadd.f32 %v1327, %v1030
  %v1428 = vadd.f32 %v1327, %v1035
  %v1429 = vadd.f32 %v1327, %v1040
  %v1430 = vadd.f32 %v1327, %v1045
  %v1431 = vadd.f32 %v1327, %v1050
  %v1432 = vadd.f32 %v1327, %v1055
  %v1433 = vadd.f32 %v1327, %v1060
  %v1434 = vadd.f32 %v1327, %v1065
  %v1435 = vadd.f32 %v1327, %v1070
  %v1436 = vadd.f32 %v1327, %v1075
  %v1437 = vadd.f32 %v1327, %v1080
  %v1438 = vadd.f32 %v1327, %v1085
  %v1439 = vadd.f32 %v1327, %v1090
  %v1440 = vadd.f32 %v1331, %v1095
  %v1441 = vadd.f32 %v1331, %v1100
  %v1442 = vadd.f32 %v1331, %v1105
  %v1443 = vadd.f32 %v1331, %v1110
  %v1444 = vadd.f32 %v1331, %v1115
  %v1445 = vadd.f32 %v1331, %v1120
  %v1446 = vadd.f32 %v1331, %v1125
  %v1447 = vadd.f32 %v1331, %v1130
  %v1448 = vadd.f32 %v1331, %v1135
  %v1449 = vadd.f32 %v1331, %v1140
  %v1450 = vadd.f32 %v1331, %v1145
  %v1451 = vadd.f32 %v1331, %v1150
  %v1452 = vadd.f32 %v1331, %v1155
  %v1453 = vadd.f32 %v1331, %v1160
  %v1454 = vadd.f32 %v1331, %v1165
  %v1455 = vadd.f32 %v1331, %v1170
  %v1456 = vadd.f32 %v1335, %v1175
  %v1457 = vadd.f32 %v1335, %v1180
  %v1458 = vadd.f32 %v1335, %v1185
  %v1459 = vadd.f32 %v1335, %v1190
  %v1460 = vadd.f32 %v1335, %v1195
  %v1461 = vadd.f32 %v1335, %v1200
  %v1462 = vadd.f32 %v1335, %v1205
  %v1463 = vadd.f32 %v1335, %v1210
  %v1464 = vadd.f32 %v1335, %v1215
  %v1465 = vadd.f32 %v1335, %v1220
  %v1466 = vadd.f32 %v1335, %v1225
  %v1467 = vadd.f32 %v1335, %v1230
  %v1468 = vadd.f32 %v1335, %v1235
  %v1469 = vadd.f32 %v1335, %v1240
  %v1470 = vadd.f32 %v1335, %v1245
  %v1471 = vadd.f32 %v1335, %v1250
  %v1472 = vtanh.pop %v1344
  %v1473 = vtanh.pop %v1345
  %v1474 = vtanh.pop %v1346
  %v1475 = vtanh.pop %v1347
  %v1476 = vtanh.pop %v1348
  %v1477 = vtanh.pop %v1349
  %v1478 = vtanh.pop %v1350
  %v1479 = vtanh.pop %v1351
  %v1480 = vtanh.pop %v1352
  %v1481 = vtanh.pop %v1353
  %v1482 = vtanh.pop %v1354
  %v1483 = vtanh.pop %v1355
  %v1484 = vtanh.pop %v1356
  %v1485 = vtanh.pop %v1357
  %v1486 = vtanh.pop %v1358
  %v1487 = vtanh.pop %v1359
  %v1488 = vtanh.pop %v1360
  %v1489 = vtanh.pop %v1361
  %v1490 = vtanh.pop %v1362
  %v1491 = vtanh.pop %v1363
  %v1492 = vtanh.pop %v1364
  %v1493 = vtanh.pop %v1365
  %v1494 = vtanh.pop %v1366
  %v1495 = vtanh.pop %v1367
  %v1496 = vtanh.pop %v1368
  %v1497 = vtanh.pop %v1369
  %v1498 = vtanh.pop %v1370
  %v1499 = vtanh.pop %v1371
  %v1500 = vtanh.pop %v1372
  %v1501 = vtanh.pop %v1373
  %v1502 = vtanh.pop %v1374
  %v1503 = vtanh.pop %v1375
  %v1504 = vtanh.pop %v1376
  %v1505 = vtanh.pop %v1377
  %v1506 = vtanh.pop %v1378
  %v1507 = vtanh.pop %v1379
  %v1508 = vtanh.pop %v1380
  %v1509 = vtanh.pop %v1381
  %v1510 = vtanh.pop %v1382
  %v1511 = vtanh.pop %v1383
  %v1512 = vtanh.pop %v1384
  %v1513 = vtanh.pop %v1385
  %v1514 = vtanh.pop %v1386
  %v1515 = vtanh.pop %v1387
  %v1516 = vtanh.pop %v1388
  %v1517 = vtanh.pop %v1389
  %v1518 = vtanh.pop %v1390
  %v1519 = vtanh.pop %v1391
  %v1520 = vtanh.pop %v1392
  %v1521 = vtanh.pop %v1393
  %v1522 = vtanh.pop %v1394
  %v1523 = vtanh.pop %v1395
  %v1524 = vtanh.pop %v1396
  %v1525 = vtanh.pop %v1397
  %v1526 = vtanh.pop %v1398
  %v1527 = vtanh.pop %v1399
  %v1528 = vtanh.pop %v1400
  %v1529 = vtanh.pop %v1401
  %v1530 = vtanh.pop %v1402
  %v1531 = vtanh.pop %v1403
  %v1532 = vtanh.pop %v1404
  %v1533 = vtanh.pop %v1405
  %v1534 = vtanh.pop %v1406
  %v1535 = vtanh.pop %v1407
  %v1536 = vtanh.pop %v1408
  %v1537 = vtanh.pop %v1409
  %v1538 = vtanh.pop %v1410
  %v1539 = vtanh.pop %v1411
  %v1540 = vtanh.pop %v1412
  %v1541 = vtanh.pop %v1413
  %v1542 = vtanh.pop %v1414
  %v1543 = vtanh.pop %v1415
  %v1544 = vtanh.pop %v1416
  %v1545 = vtanh.pop %v1417
  %v1546 = vtanh.pop %v1418
  %v1547 = vtanh.pop %v1419
  %v1548 = vtanh.pop %v1420
  %v1549 = vtanh.pop %v1421
  %v1550 = vtanh.pop %v1422
  %v1551 = vtanh.pop %v1423
  %v1552 = vtanh.pop %v1424
  %v1553 = vtanh.pop %v1425
  %v1554 = vtanh.pop %v1426
  %v1555 = vtanh.pop %v1427
  %v1556 = vtanh.pop %v1428
  %v1557 = vtanh.pop %v1429
  %v1558 = vtanh.pop %v1430
  %v1559 = vtanh.pop %v1431
  %v1560 = vtanh.pop %v1432
  %v1561 = vtanh.pop %v1433
  %v1562 = vtanh.pop %v1434
  %v1563 = vtanh.pop %v1435
  %v1564 = vtanh.pop %v1436
  %v1565 = vtanh.pop %v1437
  %v1566 = vtanh.pop %v1438
  %v1567 = vtanh.pop %v1439
  %v1568 = vtanh.pop %v1440
  %v1569 = vtanh.pop %v1441
  %v1570 = vtanh.pop %v1442
  %v1571 = vtanh.pop %v1443
  %v1572 = vtanh.pop %v1444
  %v1573 = vtanh.pop %v1445
  %v1574 = vtanh.pop %v1446
  %v1575 = vtanh.pop %v1447
  %v1576 = vtanh.pop %v1448
  %v1577 = vtanh.pop %v1449
  %v1578 = vtanh.pop %v1450
  %v1579 = vtanh.pop %v1451
  %v1580 = vtanh.pop %v1452
  %v1581 = vtanh.pop %v1453
  %v1582 = vtanh.pop %v1454
  %v1583 = vtanh.pop %v1455
  %v1584 = vtanh.pop %v1456
  %v1585 = vtanh.pop %v1457
  %v1586 = vtanh.pop %v1458
  %v1587 = vtanh.pop %v1459
  %v1588 = vtanh.pop %v1460
  %v1589 = vtanh.pop %v1461
  %v1590 = vtanh.pop %v1462
  %v1591 = vtanh.pop %v1463
  %v1592 = vtanh.pop %v1464
  %v1593 = vtanh.pop %v1465
  %v1594 = vtanh.pop %v1466
  %v1595 = vtanh.pop %v1467
  %v1596 = vtanh.pop %v1468
  %v1597 = vtanh.pop %v1469
  %v1598 = vtanh.pop %v1470
  %v1599 = vtanh.pop %v1471
  %v1600 = vld [vmem:[%s4] sm:$0x1]
  %v1602 = vlaneseq
  %v1603 = vshrl.u32 %v1602, 7
  %v1604 = vsub.s32 0, %v1603
  %v1605 = vrot.slane %v1600, %v1604
  %v1607 = vmul.f32 %v1472, %v1605
  %v1608 = vmul.f32 %v1473, %v1605
  %v1609 = vmul.f32 %v1474, %v1605
  %v1610 = vmul.f32 %v1475, %v1605
  %v1611 = vmul.f32 %v1476, %v1605
  %v1612 = vmul.f32 %v1477, %v1605
  %v1613 = vmul.f32 %v1478, %v1605
  %v1614 = vmul.f32 %v1479, %v1605
  %v1615 = vmul.f32 %v1480, %v1605
  %v1616 = vmul.f32 %v1481, %v1605
  %v1617 = vmul.f32 %v1482, %v1605
  %v1618 = vmul.f32 %v1483, %v1605
  %v1619 = vmul.f32 %v1484, %v1605
  %v1620 = vmul.f32 %v1485, %v1605
  %v1621 = vmul.f32 %v1486, %v1605
  %v1622 = vmul.f32 %v1487, %v1605
  %v1623 = vmul.f32 %v1488, %v1605
  %v1624 = vmul.f32 %v1489, %v1605
  %v1625 = vmul.f32 %v1490, %v1605
  %v1626 = vmul.f32 %v1491, %v1605
  %v1627 = vmul.f32 %v1492, %v1605
  %v1628 = vmul.f32 %v1493, %v1605
  %v1629 = vmul.f32 %v1494, %v1605
  %v1630 = vmul.f32 %v1495, %v1605
  %v1631 = vmul.f32 %v1496, %v1605
  %v1632 = vmul.f32 %v1497, %v1605
  %v1633 = vmul.f32 %v1498, %v1605
  %v1634 = vmul.f32 %v1499, %v1605
  %v1635 = vmul.f32 %v1500, %v1605
  %v1636 = vmul.f32 %v1501, %v1605
  %v1637 = vmul.f32 %v1502, %v1605
  %v1638 = vmul.f32 %v1503, %v1605
  %v1639 = vmul.f32 %v1504, %v1605
  %v1640 = vmul.f32 %v1505, %v1605
  %v1641 = vmul.f32 %v1506, %v1605
  %v1642 = vmul.f32 %v1507, %v1605
  %v1643 = vmul.f32 %v1508, %v1605
  %v1644 = vmul.f32 %v1509, %v1605
  %v1645 = vmul.f32 %v1510, %v1605
  %v1646 = vmul.f32 %v1511, %v1605
  %v1647 = vmul.f32 %v1512, %v1605
  %v1648 = vmul.f32 %v1513, %v1605
  %v1649 = vmul.f32 %v1514, %v1605
  %v1650 = vmul.f32 %v1515, %v1605
  %v1651 = vmul.f32 %v1516, %v1605
  %v1652 = vmul.f32 %v1517, %v1605
  %v1653 = vmul.f32 %v1518, %v1605
  %v1654 = vmul.f32 %v1519, %v1605
  %v1655 = vmul.f32 %v1520, %v1605
  %v1656 = vmul.f32 %v1521, %v1605
  %v1657 = vmul.f32 %v1522, %v1605
  %v1658 = vmul.f32 %v1523, %v1605
  %v1659 = vmul.f32 %v1524, %v1605
  %v1660 = vmul.f32 %v1525, %v1605
  %v1661 = vmul.f32 %v1526, %v1605
  %v1662 = vmul.f32 %v1527, %v1605
  %v1663 = vmul.f32 %v1528, %v1605
  %v1664 = vmul.f32 %v1529, %v1605
  %v1665 = vmul.f32 %v1530, %v1605
  %v1666 = vmul.f32 %v1531, %v1605
  %v1667 = vmul.f32 %v1532, %v1605
  %v1668 = vmul.f32 %v1533, %v1605
  %v1669 = vmul.f32 %v1534, %v1605
  %v1670 = vmul.f32 %v1535, %v1605
  %v1671 = vmul.f32 %v1536, %v1605
  %v1672 = vmul.f32 %v1537, %v1605
  %v1673 = vmul.f32 %v1538, %v1605
  %v1674 = vmul.f32 %v1539, %v1605
  %v1675 = vmul.f32 %v1540, %v1605
  %v1676 = vmul.f32 %v1541, %v1605
  %v1677 = vmul.f32 %v1542, %v1605
  %v1678 = vmul.f32 %v1543, %v1605
  %v1679 = vmul.f32 %v1544, %v1605
  %v1680 = vmul.f32 %v1545, %v1605
  %v1681 = vmul.f32 %v1546, %v1605
  %v1682 = vmul.f32 %v1547, %v1605
  %v1683 = vmul.f32 %v1548, %v1605
  %v1684 = vmul.f32 %v1549, %v1605
  %v1685 = vmul.f32 %v1550, %v1605
  %v1686 = vmul.f32 %v1551, %v1605
  %v1687 = vmul.f32 %v1552, %v1605
  %v1688 = vmul.f32 %v1553, %v1605
  %v1689 = vmul.f32 %v1554, %v1605
  %v1690 = vmul.f32 %v1555, %v1605
  %v1691 = vmul.f32 %v1556, %v1605
  %v1692 = vmul.f32 %v1557, %v1605
  %v1693 = vmul.f32 %v1558, %v1605
  %v1694 = vmul.f32 %v1559, %v1605
  %v1695 = vmul.f32 %v1560, %v1605
  %v1696 = vmul.f32 %v1561, %v1605
  %v1697 = vmul.f32 %v1562, %v1605
  %v1698 = vmul.f32 %v1563, %v1605
  %v1699 = vmul.f32 %v1564, %v1605
  %v1700 = vmul.f32 %v1565, %v1605
  %v1701 = vmul.f32 %v1566, %v1605
  %v1702 = vmul.f32 %v1567, %v1605
  %v1703 = vmul.f32 %v1568, %v1605
  %v1704 = vmul.f32 %v1569, %v1605
  %v1705 = vmul.f32 %v1570, %v1605
  %v1706 = vmul.f32 %v1571, %v1605
  %v1707 = vmul.f32 %v1572, %v1605
  %v1708 = vmul.f32 %v1573, %v1605
  %v1709 = vmul.f32 %v1574, %v1605
  %v1710 = vmul.f32 %v1575, %v1605
  %v1711 = vmul.f32 %v1576, %v1605
  %v1712 = vmul.f32 %v1577, %v1605
  %v1713 = vmul.f32 %v1578, %v1605
  %v1714 = vmul.f32 %v1579, %v1605
  %v1715 = vmul.f32 %v1580, %v1605
  %v1716 = vmul.f32 %v1581, %v1605
  %v1717 = vmul.f32 %v1582, %v1605
  %v1718 = vmul.f32 %v1583, %v1605
  %v1719 = vmul.f32 %v1584, %v1605
  %v1720 = vmul.f32 %v1585, %v1605
  %v1721 = vmul.f32 %v1586, %v1605
  %v1722 = vmul.f32 %v1587, %v1605
  %v1723 = vmul.f32 %v1588, %v1605
  %v1724 = vmul.f32 %v1589, %v1605
  %v1725 = vmul.f32 %v1590, %v1605
  %v1726 = vmul.f32 %v1591, %v1605
  %v1727 = vmul.f32 %v1592, %v1605
  %v1728 = vmul.f32 %v1593, %v1605
  %v1729 = vmul.f32 %v1594, %v1605
  %v1730 = vmul.f32 %v1595, %v1605
  %v1731 = vmul.f32 %v1596, %v1605
  %v1732 = vmul.f32 %v1597, %v1605
  %v1733 = vmul.f32 %v1598, %v1605
  %v1734 = vmul.f32 %v1599, %v1605
  %v1735 = vsel %vm163, %v1607, 0.0
  %1736 = vadd.xlane.f32.xlu0 %v1735
  %v1737 = vpop.xlane.xlu0 %1736
  %v1738 = vsel %vm163, %v1608, 0.0
  %1739 = vadd.xlane.f32.xlu0 %v1738
  %v1740 = vpop.xlane.xlu0 %1739
  %v1741 = vsel %vm163, %v1609, 0.0
  %1742 = vadd.xlane.f32.xlu0 %v1741
  %v1743 = vpop.xlane.xlu0 %1742
  %v1744 = vsel %vm163, %v1610, 0.0
  %1745 = vadd.xlane.f32.xlu0 %v1744
  %v1746 = vpop.xlane.xlu0 %1745
  %v1747 = vsel %vm163, %v1611, 0.0
  %1748 = vadd.xlane.f32.xlu0 %v1747
  %v1749 = vpop.xlane.xlu0 %1748
  %v1750 = vsel %vm163, %v1612, 0.0
  %1751 = vadd.xlane.f32.xlu0 %v1750
  %v1752 = vpop.xlane.xlu0 %1751
  %v1753 = vsel %vm163, %v1613, 0.0
  %1754 = vadd.xlane.f32.xlu0 %v1753
  %v1755 = vpop.xlane.xlu0 %1754
  %v1756 = vsel %vm163, %v1614, 0.0
  %1757 = vadd.xlane.f32.xlu0 %v1756
  %v1758 = vpop.xlane.xlu0 %1757
  %v1759 = vsel %vm163, %v1615, 0.0
  %1760 = vadd.xlane.f32.xlu0 %v1759
  %v1761 = vpop.xlane.xlu0 %1760
  %v1762 = vsel %vm163, %v1616, 0.0
  %1763 = vadd.xlane.f32.xlu0 %v1762
  %v1764 = vpop.xlane.xlu0 %1763
  %v1765 = vsel %vm163, %v1617, 0.0
  %1766 = vadd.xlane.f32.xlu0 %v1765
  %v1767 = vpop.xlane.xlu0 %1766
  %v1768 = vsel %vm163, %v1618, 0.0
  %1769 = vadd.xlane.f32.xlu0 %v1768
  %v1770 = vpop.xlane.xlu0 %1769
  %v1771 = vsel %vm163, %v1619, 0.0
  %1772 = vadd.xlane.f32.xlu0 %v1771
  %v1773 = vpop.xlane.xlu0 %1772
  %v1774 = vsel %vm163, %v1620, 0.0
  %1775 = vadd.xlane.f32.xlu0 %v1774
  %v1776 = vpop.xlane.xlu0 %1775
  %v1777 = vsel %vm163, %v1621, 0.0
  %1778 = vadd.xlane.f32.xlu0 %v1777
  %v1779 = vpop.xlane.xlu0 %1778
  %v1780 = vsel %vm163, %v1622, 0.0
  %1781 = vadd.xlane.f32.xlu0 %v1780
  %v1782 = vpop.xlane.xlu0 %1781
  %v1783 = vsel %vm163, %v1623, 0.0
  %1784 = vadd.xlane.f32.xlu0 %v1783
  %v1785 = vpop.xlane.xlu0 %1784
  %v1786 = vsel %vm163, %v1624, 0.0
  %1787 = vadd.xlane.f32.xlu0 %v1786
  %v1788 = vpop.xlane.xlu0 %1787
  %v1789 = vsel %vm163, %v1625, 0.0
  %1790 = vadd.xlane.f32.xlu0 %v1789
  %v1791 = vpop.xlane.xlu0 %1790
  %v1792 = vsel %vm163, %v1626, 0.0
  %1793 = vadd.xlane.f32.xlu0 %v1792
  %v1794 = vpop.xlane.xlu0 %1793
  %v1795 = vsel %vm163, %v1627, 0.0
  %1796 = vadd.xlane.f32.xlu0 %v1795
  %v1797 = vpop.xlane.xlu0 %1796
  %v1798 = vsel %vm163, %v1628, 0.0
  %1799 = vadd.xlane.f32.xlu0 %v1798
  %v1800 = vpop.xlane.xlu0 %1799
  %v1801 = vsel %vm163, %v1629, 0.0
  %1802 = vadd.xlane.f32.xlu0 %v1801
  %v1803 = vpop.xlane.xlu0 %1802
  %v1804 = vsel %vm163, %v1630, 0.0
  %1805 = vadd.xlane.f32.xlu0 %v1804
  %v1806 = vpop.xlane.xlu0 %1805
  %v1807 = vsel %vm163, %v1631, 0.0
  %1808 = vadd.xlane.f32.xlu0 %v1807
  %v1809 = vpop.xlane.xlu0 %1808
  %v1810 = vsel %vm163, %v1632, 0.0
  %1811 = vadd.xlane.f32.xlu0 %v1810
  %v1812 = vpop.xlane.xlu0 %1811
  %v1813 = vsel %vm163, %v1633, 0.0
  %1814 = vadd.xlane.f32.xlu0 %v1813
  %v1815 = vpop.xlane.xlu0 %1814
  %v1816 = vsel %vm163, %v1634, 0.0
  %1817 = vadd.xlane.f32.xlu0 %v1816
  %v1818 = vpop.xlane.xlu0 %1817
  %v1819 = vsel %vm163, %v1635, 0.0
  %1820 = vadd.xlane.f32.xlu0 %v1819
  %v1821 = vpop.xlane.xlu0 %1820
  %v1822 = vsel %vm163, %v1636, 0.0
  %1823 = vadd.xlane.f32.xlu0 %v1822
  %v1824 = vpop.xlane.xlu0 %1823
  %v1825 = vsel %vm163, %v1637, 0.0
  %1826 = vadd.xlane.f32.xlu0 %v1825
  %v1827 = vpop.xlane.xlu0 %1826
  %v1828 = vsel %vm163, %v1638, 0.0
  %1829 = vadd.xlane.f32.xlu0 %v1828
  %v1830 = vpop.xlane.xlu0 %1829
  %v1831 = vsel %vm163, %v1639, 0.0
  %1832 = vadd.xlane.f32.xlu0 %v1831
  %v1833 = vpop.xlane.xlu0 %1832
  %v1834 = vsel %vm163, %v1640, 0.0
  %1835 = vadd.xlane.f32.xlu0 %v1834
  %v1836 = vpop.xlane.xlu0 %1835
  %v1837 = vsel %vm163, %v1641, 0.0
  %1838 = vadd.xlane.f32.xlu0 %v1837
  %v1839 = vpop.xlane.xlu0 %1838
  %v1840 = vsel %vm163, %v1642, 0.0
  %1841 = vadd.xlane.f32.xlu0 %v1840
  %v1842 = vpop.xlane.xlu0 %1841
  %v1843 = vsel %vm163, %v1643, 0.0
  %1844 = vadd.xlane.f32.xlu0 %v1843
  %v1845 = vpop.xlane.xlu0 %1844
  %v1846 = vsel %vm163, %v1644, 0.0
  %1847 = vadd.xlane.f32.xlu0 %v1846
  %v1848 = vpop.xlane.xlu0 %1847
  %v1849 = vsel %vm163, %v1645, 0.0
  %1850 = vadd.xlane.f32.xlu0 %v1849
  %v1851 = vpop.xlane.xlu0 %1850
  %v1852 = vsel %vm163, %v1646, 0.0
  %1853 = vadd.xlane.f32.xlu0 %v1852
  %v1854 = vpop.xlane.xlu0 %1853
  %v1855 = vsel %vm163, %v1647, 0.0
  %1856 = vadd.xlane.f32.xlu0 %v1855
  %v1857 = vpop.xlane.xlu0 %1856
  %v1858 = vsel %vm163, %v1648, 0.0
  %1859 = vadd.xlane.f32.xlu0 %v1858
  %v1860 = vpop.xlane.xlu0 %1859
  %v1861 = vsel %vm163, %v1649, 0.0
  %1862 = vadd.xlane.f32.xlu0 %v1861
  %v1863 = vpop.xlane.xlu0 %1862
  %v1864 = vsel %vm163, %v1650, 0.0
  %1865 = vadd.xlane.f32.xlu0 %v1864
  %v1866 = vpop.xlane.xlu0 %1865
  %v1867 = vsel %vm163, %v1651, 0.0
  %1868 = vadd.xlane.f32.xlu0 %v1867
  %v1869 = vpop.xlane.xlu0 %1868
  %v1870 = vsel %vm163, %v1652, 0.0
  %1871 = vadd.xlane.f32.xlu0 %v1870
  %v1872 = vpop.xlane.xlu0 %1871
  %v1873 = vsel %vm163, %v1653, 0.0
  %1874 = vadd.xlane.f32.xlu0 %v1873
  %v1875 = vpop.xlane.xlu0 %1874
  %v1876 = vsel %vm163, %v1654, 0.0
  %1877 = vadd.xlane.f32.xlu0 %v1876
  %v1878 = vpop.xlane.xlu0 %1877
  %v1879 = vsel %vm163, %v1655, 0.0
  %1880 = vadd.xlane.f32.xlu0 %v1879
  %v1881 = vpop.xlane.xlu0 %1880
  %v1882 = vsel %vm163, %v1656, 0.0
  %1883 = vadd.xlane.f32.xlu0 %v1882
  %v1884 = vpop.xlane.xlu0 %1883
  %v1885 = vsel %vm163, %v1657, 0.0
  %1886 = vadd.xlane.f32.xlu0 %v1885
  %v1887 = vpop.xlane.xlu0 %1886
  %v1888 = vsel %vm163, %v1658, 0.0
  %1889 = vadd.xlane.f32.xlu0 %v1888
  %v1890 = vpop.xlane.xlu0 %1889
  %v1891 = vsel %vm163, %v1659, 0.0
  %1892 = vadd.xlane.f32.xlu0 %v1891
  %v1893 = vpop.xlane.xlu0 %1892
  %v1894 = vsel %vm163, %v1660, 0.0
  %1895 = vadd.xlane.f32.xlu0 %v1894
  %v1896 = vpop.xlane.xlu0 %1895
  %v1897 = vsel %vm163, %v1661, 0.0
  %1898 = vadd.xlane.f32.xlu0 %v1897
  %v1899 = vpop.xlane.xlu0 %1898
  %v1900 = vsel %vm163, %v1662, 0.0
  %1901 = vadd.xlane.f32.xlu0 %v1900
  %v1902 = vpop.xlane.xlu0 %1901
  %v1903 = vsel %vm163, %v1663, 0.0
  %1904 = vadd.xlane.f32.xlu0 %v1903
  %v1905 = vpop.xlane.xlu0 %1904
  %v1906 = vsel %vm163, %v1664, 0.0
  %1907 = vadd.xlane.f32.xlu0 %v1906
  %v1908 = vpop.xlane.xlu0 %1907
  %v1909 = vsel %vm163, %v1665, 0.0
  %1910 = vadd.xlane.f32.xlu0 %v1909
  %v1911 = vpop.xlane.xlu0 %1910
  %v1912 = vsel %vm163, %v1666, 0.0
  %1913 = vadd.xlane.f32.xlu0 %v1912
  %v1914 = vpop.xlane.xlu0 %1913
  %v1915 = vsel %vm163, %v1667, 0.0
  %1916 = vadd.xlane.f32.xlu0 %v1915
  %v1917 = vpop.xlane.xlu0 %1916
  %v1918 = vsel %vm163, %v1668, 0.0
  %1919 = vadd.xlane.f32.xlu0 %v1918
  %v1920 = vpop.xlane.xlu0 %1919
  %v1921 = vsel %vm163, %v1669, 0.0
  %1922 = vadd.xlane.f32.xlu0 %v1921
  %v1923 = vpop.xlane.xlu0 %1922
  %v1924 = vsel %vm163, %v1670, 0.0
  %1925 = vadd.xlane.f32.xlu0 %v1924
  %v1926 = vpop.xlane.xlu0 %1925
  %v1927 = vsel %vm163, %v1671, 0.0
  %1928 = vadd.xlane.f32.xlu0 %v1927
  %v1929 = vpop.xlane.xlu0 %1928
  %v1930 = vsel %vm163, %v1672, 0.0
  %1931 = vadd.xlane.f32.xlu0 %v1930
  %v1932 = vpop.xlane.xlu0 %1931
  %v1933 = vsel %vm163, %v1673, 0.0
  %1934 = vadd.xlane.f32.xlu0 %v1933
  %v1935 = vpop.xlane.xlu0 %1934
  %v1936 = vsel %vm163, %v1674, 0.0
  %1937 = vadd.xlane.f32.xlu0 %v1936
  %v1938 = vpop.xlane.xlu0 %1937
  %v1939 = vsel %vm163, %v1675, 0.0
  %1940 = vadd.xlane.f32.xlu0 %v1939
  %v1941 = vpop.xlane.xlu0 %1940
  %v1942 = vsel %vm163, %v1676, 0.0
  %1943 = vadd.xlane.f32.xlu0 %v1942
  %v1944 = vpop.xlane.xlu0 %1943
  %v1945 = vsel %vm163, %v1677, 0.0
  %1946 = vadd.xlane.f32.xlu0 %v1945
  %v1947 = vpop.xlane.xlu0 %1946
  %v1948 = vsel %vm163, %v1678, 0.0
  %1949 = vadd.xlane.f32.xlu0 %v1948
  %v1950 = vpop.xlane.xlu0 %1949
  %v1951 = vsel %vm163, %v1679, 0.0
  %1952 = vadd.xlane.f32.xlu0 %v1951
  %v1953 = vpop.xlane.xlu0 %1952
  %v1954 = vsel %vm163, %v1680, 0.0
  %1955 = vadd.xlane.f32.xlu0 %v1954
  %v1956 = vpop.xlane.xlu0 %1955
  %v1957 = vsel %vm163, %v1681, 0.0
  %1958 = vadd.xlane.f32.xlu0 %v1957
  %v1959 = vpop.xlane.xlu0 %1958
  %v1960 = vsel %vm163, %v1682, 0.0
  %1961 = vadd.xlane.f32.xlu0 %v1960
  %v1962 = vpop.xlane.xlu0 %1961
  %v1963 = vsel %vm163, %v1683, 0.0
  %1964 = vadd.xlane.f32.xlu0 %v1963
  %v1965 = vpop.xlane.xlu0 %1964
  %v1966 = vsel %vm163, %v1684, 0.0
  %1967 = vadd.xlane.f32.xlu0 %v1966
  %v1968 = vpop.xlane.xlu0 %1967
  %v1969 = vsel %vm163, %v1685, 0.0
  %1970 = vadd.xlane.f32.xlu0 %v1969
  %v1971 = vpop.xlane.xlu0 %1970
  %v1972 = vsel %vm163, %v1686, 0.0
  %1973 = vadd.xlane.f32.xlu0 %v1972
  %v1974 = vpop.xlane.xlu0 %1973
  %v1975 = vsel %vm163, %v1687, 0.0
  %1976 = vadd.xlane.f32.xlu0 %v1975
  %v1977 = vpop.xlane.xlu0 %1976
  %v1978 = vsel %vm163, %v1688, 0.0
  %1979 = vadd.xlane.f32.xlu0 %v1978
  %v1980 = vpop.xlane.xlu0 %1979
  %v1981 = vsel %vm163, %v1689, 0.0
  %1982 = vadd.xlane.f32.xlu0 %v1981
  %v1983 = vpop.xlane.xlu0 %1982
  %v1984 = vsel %vm163, %v1690, 0.0
  %1985 = vadd.xlane.f32.xlu0 %v1984
  %v1986 = vpop.xlane.xlu0 %1985
  %v1987 = vsel %vm163, %v1691, 0.0
  %1988 = vadd.xlane.f32.xlu0 %v1987
  %v1989 = vpop.xlane.xlu0 %1988
  %v1990 = vsel %vm163, %v1692, 0.0
  %1991 = vadd.xlane.f32.xlu0 %v1990
  %v1992 = vpop.xlane.xlu0 %1991
  %v1993 = vsel %vm163, %v1693, 0.0
  %1994 = vadd.xlane.f32.xlu0 %v1993
  %v1995 = vpop.xlane.xlu0 %1994
  %v1996 = vsel %vm163, %v1694, 0.0
  %1997 = vadd.xlane.f32.xlu0 %v1996
  %v1998 = vpop.xlane.xlu0 %1997
  %v1999 = vsel %vm163, %v1695, 0.0
  %2000 = vadd.xlane.f32.xlu0 %v1999
  %v2001 = vpop.xlane.xlu0 %2000
  %v2002 = vsel %vm163, %v1696, 0.0
  %2003 = vadd.xlane.f32.xlu0 %v2002
  %v2004 = vpop.xlane.xlu0 %2003
  %v2005 = vsel %vm163, %v1697, 0.0
  %2006 = vadd.xlane.f32.xlu0 %v2005
  %v2007 = vpop.xlane.xlu0 %2006
  %v2008 = vsel %vm163, %v1698, 0.0
  %2009 = vadd.xlane.f32.xlu0 %v2008
  %v2010 = vpop.xlane.xlu0 %2009
  %v2011 = vsel %vm163, %v1699, 0.0
  %2012 = vadd.xlane.f32.xlu0 %v2011
  %v2013 = vpop.xlane.xlu0 %2012
  %v2014 = vsel %vm163, %v1700, 0.0
  %2015 = vadd.xlane.f32.xlu0 %v2014
  %v2016 = vpop.xlane.xlu0 %2015
  %v2017 = vsel %vm163, %v1701, 0.0
  %2018 = vadd.xlane.f32.xlu0 %v2017
  %v2019 = vpop.xlane.xlu0 %2018
  %v2020 = vsel %vm163, %v1702, 0.0
  %2021 = vadd.xlane.f32.xlu0 %v2020
  %v2022 = vpop.xlane.xlu0 %2021
  %v2023 = vsel %vm163, %v1703, 0.0
  %2024 = vadd.xlane.f32.xlu0 %v2023
  %v2025 = vpop.xlane.xlu0 %2024
  %v2026 = vsel %vm163, %v1704, 0.0
  %2027 = vadd.xlane.f32.xlu0 %v2026
  %v2028 = vpop.xlane.xlu0 %2027
  %v2029 = vsel %vm163, %v1705, 0.0
  %2030 = vadd.xlane.f32.xlu0 %v2029
  %v2031 = vpop.xlane.xlu0 %2030
  %v2032 = vsel %vm163, %v1706, 0.0
  %2033 = vadd.xlane.f32.xlu0 %v2032
  %v2034 = vpop.xlane.xlu0 %2033
  %v2035 = vsel %vm163, %v1707, 0.0
  %2036 = vadd.xlane.f32.xlu0 %v2035
  %v2037 = vpop.xlane.xlu0 %2036
  %v2038 = vsel %vm163, %v1708, 0.0
  %2039 = vadd.xlane.f32.xlu0 %v2038
  %v2040 = vpop.xlane.xlu0 %2039
  %v2041 = vsel %vm163, %v1709, 0.0
  %2042 = vadd.xlane.f32.xlu0 %v2041
  %v2043 = vpop.xlane.xlu0 %2042
  %v2044 = vsel %vm163, %v1710, 0.0
  %2045 = vadd.xlane.f32.xlu0 %v2044
  %v2046 = vpop.xlane.xlu0 %2045
  %v2047 = vsel %vm163, %v1711, 0.0
  %2048 = vadd.xlane.f32.xlu0 %v2047
  %v2049 = vpop.xlane.xlu0 %2048
  %v2050 = vsel %vm163, %v1712, 0.0
  %2051 = vadd.xlane.f32.xlu0 %v2050
  %v2052 = vpop.xlane.xlu0 %2051
  %v2053 = vsel %vm163, %v1713, 0.0
  %2054 = vadd.xlane.f32.xlu0 %v2053
  %v2055 = vpop.xlane.xlu0 %2054
  %v2056 = vsel %vm163, %v1714, 0.0
  %2057 = vadd.xlane.f32.xlu0 %v2056
  %v2058 = vpop.xlane.xlu0 %2057
  %v2059 = vsel %vm163, %v1715, 0.0
  %2060 = vadd.xlane.f32.xlu0 %v2059
  %v2061 = vpop.xlane.xlu0 %2060
  %v2062 = vsel %vm163, %v1716, 0.0
  %2063 = vadd.xlane.f32.xlu0 %v2062
  %v2064 = vpop.xlane.xlu0 %2063
  %v2065 = vsel %vm163, %v1717, 0.0
  %2066 = vadd.xlane.f32.xlu0 %v2065
  %v2067 = vpop.xlane.xlu0 %2066
  %v2068 = vsel %vm163, %v1718, 0.0
  %2069 = vadd.xlane.f32.xlu0 %v2068
  %v2070 = vpop.xlane.xlu0 %2069
  %v2071 = vsel %vm163, %v1719, 0.0
  %2072 = vadd.xlane.f32.xlu0 %v2071
  %v2073 = vpop.xlane.xlu0 %2072
  %v2074 = vsel %vm163, %v1720, 0.0
  %2075 = vadd.xlane.f32.xlu0 %v2074
  %v2076 = vpop.xlane.xlu0 %2075
  %v2077 = vsel %vm163, %v1721, 0.0
  %2078 = vadd.xlane.f32.xlu0 %v2077
  %v2079 = vpop.xlane.xlu0 %2078
  %v2080 = vsel %vm163, %v1722, 0.0
  %2081 = vadd.xlane.f32.xlu0 %v2080
  %v2082 = vpop.xlane.xlu0 %2081
  %v2083 = vsel %vm163, %v1723, 0.0
  %2084 = vadd.xlane.f32.xlu0 %v2083
  %v2085 = vpop.xlane.xlu0 %2084
  %v2086 = vsel %vm163, %v1724, 0.0
  %2087 = vadd.xlane.f32.xlu0 %v2086
  %v2088 = vpop.xlane.xlu0 %2087
  %v2089 = vsel %vm163, %v1725, 0.0
  %2090 = vadd.xlane.f32.xlu0 %v2089
  %v2091 = vpop.xlane.xlu0 %2090
  %v2092 = vsel %vm163, %v1726, 0.0
  %2093 = vadd.xlane.f32.xlu0 %v2092
  %v2094 = vpop.xlane.xlu0 %2093
  %v2095 = vsel %vm163, %v1727, 0.0
  %2096 = vadd.xlane.f32.xlu0 %v2095
  %v2097 = vpop.xlane.xlu0 %2096
  %v2098 = vsel %vm163, %v1728, 0.0
  %2099 = vadd.xlane.f32.xlu0 %v2098
  %v2100 = vpop.xlane.xlu0 %2099
  %v2101 = vsel %vm163, %v1729, 0.0
  %2102 = vadd.xlane.f32.xlu0 %v2101
  %v2103 = vpop.xlane.xlu0 %2102
  %v2104 = vsel %vm163, %v1730, 0.0
  %2105 = vadd.xlane.f32.xlu0 %v2104
  %v2106 = vpop.xlane.xlu0 %2105
  %v2107 = vsel %vm163, %v1731, 0.0
  %2108 = vadd.xlane.f32.xlu0 %v2107
  %v2109 = vpop.xlane.xlu0 %2108
  %v2110 = vsel %vm163, %v1732, 0.0
  %2111 = vadd.xlane.f32.xlu0 %v2110
  %v2112 = vpop.xlane.xlu0 %2111
  %v2113 = vsel %vm163, %v1733, 0.0
  %2114 = vadd.xlane.f32.xlu0 %v2113
  %v2115 = vpop.xlane.xlu0 %2114
  %v2116 = vsel %vm163, %v1734, 0.0
  %2117 = vadd.xlane.f32.xlu0 %v2116
  %v2118 = vpop.xlane.xlu0 %2117
  %v2119 = vld [vmem:[%s2] sm:$0xff]
  %vm2120 = vcmp.ne.s32.totalorder %v2119, 0
  %v2249 = vlaneseq
  %v2250 = vand.u32 %v2249, 127
  %v2251 = vlaneseq
  %v2252 = vshrl.u32 %v2251, 7
  %v2253 = vsub.s32 %v2250, %v2252
  %v2254 = vrot.slane %v1737, %v2253
  %v2255 = vadd.s32 %v2250, 4294967288
  %v2256 = vlaneseq
  %v2257 = vshrl.u32 %v2256, 7
  %v2258 = vsub.s32 %v2255, %v2257
  %v2259 = vrot.slane %v1740, %v2258
  %vm2260 = vcmask 130112
  %v2261 = vsel %vm2260, %v2259, %v2254
  %v2262 = vadd.s32 %v2250, 4294967280
  %v2263 = vlaneseq
  %v2264 = vshrl.u32 %v2263, 7
  %v2265 = vsub.s32 %v2262, %v2264
  %v2266 = vrot.slane %v1743, %v2265
  %vm2267 = vcmask 195712
  %v2268 = vsel %vm2267, %v2266, %v2261
  %v2269 = vadd.s32 %v2250, 4294967272
  %v2270 = vlaneseq
  %v2271 = vshrl.u32 %v2270, 7
  %v2272 = vsub.s32 %v2269, %v2271
  %v2273 = vrot.slane %v1746, %v2272
  %vm2274 = vcmask 261312
  %v2275 = vsel %vm2274, %v2273, %v2268
  %v2276 = vadd.s32 %v2250, 4294967264
  %v2277 = vlaneseq
  %v2278 = vshrl.u32 %v2277, 7
  %v2279 = vsub.s32 %v2276, %v2278
  %v2280 = vrot.slane %v1749, %v2279
  %vm2281 = vcmask 326912
  %v2282 = vsel %vm2281, %v2280, %v2275
  %v2283 = vadd.s32 %v2250, 4294967256
  %v2284 = vlaneseq
  %v2285 = vshrl.u32 %v2284, 7
  %v2286 = vsub.s32 %v2283, %v2285
  %v2287 = vrot.slane %v1752, %v2286
  %vm2288 = vcmask 392512
  %v2289 = vsel %vm2288, %v2287, %v2282
  %v2290 = vadd.s32 %v2250, 4294967248
  %v2291 = vlaneseq
  %v2292 = vshrl.u32 %v2291, 7
  %v2293 = vsub.s32 %v2290, %v2292
  %v2294 = vrot.slane %v1755, %v2293
  %vm2295 = vcmask 458112
  %v2296 = vsel %vm2295, %v2294, %v2289
  %v2297 = vadd.s32 %v2250, 4294967240
  %v2298 = vlaneseq
  %v2299 = vshrl.u32 %v2298, 7
  %v2300 = vsub.s32 %v2297, %v2299
  %v2301 = vrot.slane %v1758, %v2300
  %vm2302 = vcmask 523712
  %v2303 = vsel %vm2302, %v2301, %v2296
  %v2304 = vadd.s32 %v2250, 4294967232
  %v2305 = vlaneseq
  %v2306 = vshrl.u32 %v2305, 7
  %v2307 = vsub.s32 %v2304, %v2306
  %v2308 = vrot.slane %v1761, %v2307
  %vm2309 = vcmask 589312
  %v2310 = vsel %vm2309, %v2308, %v2303
  %v2311 = vadd.s32 %v2250, 4294967224
  %v2312 = vlaneseq
  %v2313 = vshrl.u32 %v2312, 7
  %v2314 = vsub.s32 %v2311, %v2313
  %v2315 = vrot.slane %v1764, %v2314
  %vm2316 = vcmask 654912
  %v2317 = vsel %vm2316, %v2315, %v2310
  %v2318 = vadd.s32 %v2250, 4294967216
  %v2319 = vlaneseq
  %v2320 = vshrl.u32 %v2319, 7
  %v2321 = vsub.s32 %v2318, %v2320
  %v2322 = vrot.slane %v1767, %v2321
  %vm2323 = vcmask 720512
  %v2324 = vsel %vm2323, %v2322, %v2317
  %v2325 = vadd.s32 %v2250, 4294967208
  %v2326 = vlaneseq
  %v2327 = vshrl.u32 %v2326, 7
  %v2328 = vsub.s32 %v2325, %v2327
  %v2329 = vrot.slane %v1770, %v2328
  %vm2330 = vcmask 786112
  %v2331 = vsel %vm2330, %v2329, %v2324
  %v2332 = vadd.s32 %v2250, 4294967200
  %v2333 = vlaneseq
  %v2334 = vshrl.u32 %v2333, 7
  %v2335 = vsub.s32 %v2332, %v2334
  %v2336 = vrot.slane %v1773, %v2335
  %vm2337 = vcmask 851712
  %v2338 = vsel %vm2337, %v2336, %v2331
  %v2339 = vadd.s32 %v2250, 4294967192
  %v2340 = vlaneseq
  %v2341 = vshrl.u32 %v2340, 7
  %v2342 = vsub.s32 %v2339, %v2341
  %v2343 = vrot.slane %v1776, %v2342
  %vm2344 = vcmask 917312
  %v2345 = vsel %vm2344, %v2343, %v2338
  %v2346 = vadd.s32 %v2250, 4294967184
  %v2347 = vlaneseq
  %v2348 = vshrl.u32 %v2347, 7
  %v2349 = vsub.s32 %v2346, %v2348
  %v2350 = vrot.slane %v1779, %v2349
  %vm2351 = vcmask 982912
  %v2352 = vsel %vm2351, %v2350, %v2345
  %v2353 = vadd.s32 %v2250, 4294967176
  %v2354 = vlaneseq
  %v2355 = vshrl.u32 %v2354, 7
  %v2356 = vsub.s32 %v2353, %v2355
  %v2357 = vrot.slane %v1782, %v2356
  %vm2358 = vcmask 1048512
  %v2359 = vsel %vm2358, %v2357, %v2352
  %v2360 = vlaneseq
  %v2361 = vshrl.u32 %v2360, 7
  %v2362 = vsub.s32 %v2250, %v2361
  %v2363 = vrot.slane %v1785, %v2362
  %v2364 = vlaneseq
  %v2365 = vshrl.u32 %v2364, 7
  %v2366 = vsub.s32 %v2255, %v2365
  %v2367 = vrot.slane %v1788, %v2366
  %v2368 = vsel %vm2260, %v2367, %v2363
  %v2369 = vlaneseq
  %v2370 = vshrl.u32 %v2369, 7
  %v2371 = vsub.s32 %v2262, %v2370
  %v2372 = vrot.slane %v1791, %v2371
  %v2373 = vsel %vm2267, %v2372, %v2368
  %v2374 = vlaneseq
  %v2375 = vshrl.u32 %v2374, 7
  %v2376 = vsub.s32 %v2269, %v2375
  %v2377 = vrot.slane %v1794, %v2376
  %v2378 = vsel %vm2274, %v2377, %v2373
  %v2379 = vlaneseq
  %v2380 = vshrl.u32 %v2379, 7
  %v2381 = vsub.s32 %v2276, %v2380
  %v2382 = vrot.slane %v1797, %v2381
  %v2383 = vsel %vm2281, %v2382, %v2378
  %v2384 = vlaneseq
  %v2385 = vshrl.u32 %v2384, 7
  %v2386 = vsub.s32 %v2283, %v2385
  %v2387 = vrot.slane %v1800, %v2386
  %v2388 = vsel %vm2288, %v2387, %v2383
  %v2389 = vlaneseq
  %v2390 = vshrl.u32 %v2389, 7
  %v2391 = vsub.s32 %v2290, %v2390
  %v2392 = vrot.slane %v1803, %v2391
  %v2393 = vsel %vm2295, %v2392, %v2388
  %v2394 = vlaneseq
  %v2395 = vshrl.u32 %v2394, 7
  %v2396 = vsub.s32 %v2297, %v2395
  %v2397 = vrot.slane %v1806, %v2396
  %v2398 = vsel %vm2302, %v2397, %v2393
  %v2399 = vlaneseq
  %v2400 = vshrl.u32 %v2399, 7
  %v2401 = vsub.s32 %v2304, %v2400
  %v2402 = vrot.slane %v1809, %v2401
  %v2403 = vsel %vm2309, %v2402, %v2398
  %v2404 = vlaneseq
  %v2405 = vshrl.u32 %v2404, 7
  %v2406 = vsub.s32 %v2311, %v2405
  %v2407 = vrot.slane %v1812, %v2406
  %v2408 = vsel %vm2316, %v2407, %v2403
  %v2409 = vlaneseq
  %v2410 = vshrl.u32 %v2409, 7
  %v2411 = vsub.s32 %v2318, %v2410
  %v2412 = vrot.slane %v1815, %v2411
  %v2413 = vsel %vm2323, %v2412, %v2408
  %v2414 = vlaneseq
  %v2415 = vshrl.u32 %v2414, 7
  %v2416 = vsub.s32 %v2325, %v2415
  %v2417 = vrot.slane %v1818, %v2416
  %v2418 = vsel %vm2330, %v2417, %v2413
  %v2419 = vlaneseq
  %v2420 = vshrl.u32 %v2419, 7
  %v2421 = vsub.s32 %v2332, %v2420
  %v2422 = vrot.slane %v1821, %v2421
  %v2423 = vsel %vm2337, %v2422, %v2418
  %v2424 = vlaneseq
  %v2425 = vshrl.u32 %v2424, 7
  %v2426 = vsub.s32 %v2339, %v2425
  %v2427 = vrot.slane %v1824, %v2426
  %v2428 = vsel %vm2344, %v2427, %v2423
  %v2429 = vlaneseq
  %v2430 = vshrl.u32 %v2429, 7
  %v2431 = vsub.s32 %v2346, %v2430
  %v2432 = vrot.slane %v1827, %v2431
  %v2433 = vsel %vm2351, %v2432, %v2428
  %v2434 = vlaneseq
  %v2435 = vshrl.u32 %v2434, 7
  %v2436 = vsub.s32 %v2353, %v2435
  %v2437 = vrot.slane %v1830, %v2436
  %v2438 = vsel %vm2358, %v2437, %v2433
  %v2439 = vlaneseq
  %v2440 = vshrl.u32 %v2439, 7
  %v2441 = vsub.s32 %v2250, %v2440
  %v2442 = vrot.slane %v1833, %v2441
  %v2443 = vlaneseq
  %v2444 = vshrl.u32 %v2443, 7
  %v2445 = vsub.s32 %v2255, %v2444
  %v2446 = vrot.slane %v1836, %v2445
  %v2447 = vsel %vm2260, %v2446, %v2442
  %v2448 = vlaneseq
  %v2449 = vshrl.u32 %v2448, 7
  %v2450 = vsub.s32 %v2262, %v2449
  %v2451 = vrot.slane %v1839, %v2450
  %v2452 = vsel %vm2267, %v2451, %v2447
  %v2453 = vlaneseq
  %v2454 = vshrl.u32 %v2453, 7
  %v2455 = vsub.s32 %v2269, %v2454
  %v2456 = vrot.slane %v1842, %v2455
  %v2457 = vsel %vm2274, %v2456, %v2452
  %v2458 = vlaneseq
  %v2459 = vshrl.u32 %v2458, 7
  %v2460 = vsub.s32 %v2276, %v2459
  %v2461 = vrot.slane %v1845, %v2460
  %v2462 = vsel %vm2281, %v2461, %v2457
  %v2463 = vlaneseq
  %v2464 = vshrl.u32 %v2463, 7
  %v2465 = vsub.s32 %v2283, %v2464
  %v2466 = vrot.slane %v1848, %v2465
  %v2467 = vsel %vm2288, %v2466, %v2462
  %v2468 = vlaneseq
  %v2469 = vshrl.u32 %v2468, 7
  %v2470 = vsub.s32 %v2290, %v2469
  %v2471 = vrot.slane %v1851, %v2470
  %v2472 = vsel %vm2295, %v2471, %v2467
  %v2473 = vlaneseq
  %v2474 = vshrl.u32 %v2473, 7
  %v2475 = vsub.s32 %v2297, %v2474
  %v2476 = vrot.slane %v1854, %v2475
  %v2477 = vsel %vm2302, %v2476, %v2472
  %v2478 = vlaneseq
  %v2479 = vshrl.u32 %v2478, 7
  %v2480 = vsub.s32 %v2304, %v2479
  %v2481 = vrot.slane %v1857, %v2480
  %v2482 = vsel %vm2309, %v2481, %v2477
  %v2483 = vlaneseq
  %v2484 = vshrl.u32 %v2483, 7
  %v2485 = vsub.s32 %v2311, %v2484
  %v2486 = vrot.slane %v1860, %v2485
  %v2487 = vsel %vm2316, %v2486, %v2482
  %v2488 = vlaneseq
  %v2489 = vshrl.u32 %v2488, 7
  %v2490 = vsub.s32 %v2318, %v2489
  %v2491 = vrot.slane %v1863, %v2490
  %v2492 = vsel %vm2323, %v2491, %v2487
  %v2493 = vlaneseq
  %v2494 = vshrl.u32 %v2493, 7
  %v2495 = vsub.s32 %v2325, %v2494
  %v2496 = vrot.slane %v1866, %v2495
  %v2497 = vsel %vm2330, %v2496, %v2492
  %v2498 = vlaneseq
  %v2499 = vshrl.u32 %v2498, 7
  %v2500 = vsub.s32 %v2332, %v2499
  %v2501 = vrot.slane %v1869, %v2500
  %v2502 = vsel %vm2337, %v2501, %v2497
  %v2503 = vlaneseq
  %v2504 = vshrl.u32 %v2503, 7
  %v2505 = vsub.s32 %v2339, %v2504
  %v2506 = vrot.slane %v1872, %v2505
  %v2507 = vsel %vm2344, %v2506, %v2502
  %v2508 = vlaneseq
  %v2509 = vshrl.u32 %v2508, 7
  %v2510 = vsub.s32 %v2346, %v2509
  %v2511 = vrot.slane %v1875, %v2510
  %v2512 = vsel %vm2351, %v2511, %v2507
  %v2513 = vlaneseq
  %v2514 = vshrl.u32 %v2513, 7
  %v2515 = vsub.s32 %v2353, %v2514
  %v2516 = vrot.slane %v1878, %v2515
  %v2517 = vsel %vm2358, %v2516, %v2512
  %v2518 = vlaneseq
  %v2519 = vshrl.u32 %v2518, 7
  %v2520 = vsub.s32 %v2250, %v2519
  %v2521 = vrot.slane %v1881, %v2520
  %v2522 = vlaneseq
  %v2523 = vshrl.u32 %v2522, 7
  %v2524 = vsub.s32 %v2255, %v2523
  %v2525 = vrot.slane %v1884, %v2524
  %v2526 = vsel %vm2260, %v2525, %v2521
  %v2527 = vlaneseq
  %v2528 = vshrl.u32 %v2527, 7
  %v2529 = vsub.s32 %v2262, %v2528
  %v2530 = vrot.slane %v1887, %v2529
  %v2531 = vsel %vm2267, %v2530, %v2526
  %v2532 = vlaneseq
  %v2533 = vshrl.u32 %v2532, 7
  %v2534 = vsub.s32 %v2269, %v2533
  %v2535 = vrot.slane %v1890, %v2534
  %v2536 = vsel %vm2274, %v2535, %v2531
  %v2537 = vlaneseq
  %v2538 = vshrl.u32 %v2537, 7
  %v2539 = vsub.s32 %v2276, %v2538
  %v2540 = vrot.slane %v1893, %v2539
  %v2541 = vsel %vm2281, %v2540, %v2536
  %v2542 = vlaneseq
  %v2543 = vshrl.u32 %v2542, 7
  %v2544 = vsub.s32 %v2283, %v2543
  %v2545 = vrot.slane %v1896, %v2544
  %v2546 = vsel %vm2288, %v2545, %v2541
  %v2547 = vlaneseq
  %v2548 = vshrl.u32 %v2547, 7
  %v2549 = vsub.s32 %v2290, %v2548
  %v2550 = vrot.slane %v1899, %v2549
  %v2551 = vsel %vm2295, %v2550, %v2546
  %v2552 = vlaneseq
  %v2553 = vshrl.u32 %v2552, 7
  %v2554 = vsub.s32 %v2297, %v2553
  %v2555 = vrot.slane %v1902, %v2554
  %v2556 = vsel %vm2302, %v2555, %v2551
  %v2557 = vlaneseq
  %v2558 = vshrl.u32 %v2557, 7
  %v2559 = vsub.s32 %v2304, %v2558
  %v2560 = vrot.slane %v1905, %v2559
  %v2561 = vsel %vm2309, %v2560, %v2556
  %v2562 = vlaneseq
  %v2563 = vshrl.u32 %v2562, 7
  %v2564 = vsub.s32 %v2311, %v2563
  %v2565 = vrot.slane %v1908, %v2564
  %v2566 = vsel %vm2316, %v2565, %v2561
  %v2567 = vlaneseq
  %v2568 = vshrl.u32 %v2567, 7
  %v2569 = vsub.s32 %v2318, %v2568
  %v2570 = vrot.slane %v1911, %v2569
  %v2571 = vsel %vm2323, %v2570, %v2566
  %v2572 = vlaneseq
  %v2573 = vshrl.u32 %v2572, 7
  %v2574 = vsub.s32 %v2325, %v2573
  %v2575 = vrot.slane %v1914, %v2574
  %v2576 = vsel %vm2330, %v2575, %v2571
  %v2577 = vlaneseq
  %v2578 = vshrl.u32 %v2577, 7
  %v2579 = vsub.s32 %v2332, %v2578
  %v2580 = vrot.slane %v1917, %v2579
  %v2581 = vsel %vm2337, %v2580, %v2576
  %v2582 = vlaneseq
  %v2583 = vshrl.u32 %v2582, 7
  %v2584 = vsub.s32 %v2339, %v2583
  %v2585 = vrot.slane %v1920, %v2584
  %v2586 = vsel %vm2344, %v2585, %v2581
  %v2587 = vlaneseq
  %v2588 = vshrl.u32 %v2587, 7
  %v2589 = vsub.s32 %v2346, %v2588
  %v2590 = vrot.slane %v1923, %v2589
  %v2591 = vsel %vm2351, %v2590, %v2586
  %v2592 = vlaneseq
  %v2593 = vshrl.u32 %v2592, 7
  %v2594 = vsub.s32 %v2353, %v2593
  %v2595 = vrot.slane %v1926, %v2594
  %v2596 = vsel %vm2358, %v2595, %v2591
  %v2597 = vlaneseq
  %v2598 = vshrl.u32 %v2597, 7
  %v2599 = vsub.s32 %v2250, %v2598
  %v2600 = vrot.slane %v1929, %v2599
  %v2601 = vlaneseq
  %v2602 = vshrl.u32 %v2601, 7
  %v2603 = vsub.s32 %v2255, %v2602
  %v2604 = vrot.slane %v1932, %v2603
  %v2605 = vsel %vm2260, %v2604, %v2600
  %v2606 = vlaneseq
  %v2607 = vshrl.u32 %v2606, 7
  %v2608 = vsub.s32 %v2262, %v2607
  %v2609 = vrot.slane %v1935, %v2608
  %v2610 = vsel %vm2267, %v2609, %v2605
  %v2611 = vlaneseq
  %v2612 = vshrl.u32 %v2611, 7
  %v2613 = vsub.s32 %v2269, %v2612
  %v2614 = vrot.slane %v1938, %v2613
  %v2615 = vsel %vm2274, %v2614, %v2610
  %v2616 = vlaneseq
  %v2617 = vshrl.u32 %v2616, 7
  %v2618 = vsub.s32 %v2276, %v2617
  %v2619 = vrot.slane %v1941, %v2618
  %v2620 = vsel %vm2281, %v2619, %v2615
  %v2621 = vlaneseq
  %v2622 = vshrl.u32 %v2621, 7
  %v2623 = vsub.s32 %v2283, %v2622
  %v2624 = vrot.slane %v1944, %v2623
  %v2625 = vsel %vm2288, %v2624, %v2620
  %v2626 = vlaneseq
  %v2627 = vshrl.u32 %v2626, 7
  %v2628 = vsub.s32 %v2290, %v2627
  %v2629 = vrot.slane %v1947, %v2628
  %v2630 = vsel %vm2295, %v2629, %v2625
  %v2631 = vlaneseq
  %v2632 = vshrl.u32 %v2631, 7
  %v2633 = vsub.s32 %v2297, %v2632
  %v2634 = vrot.slane %v1950, %v2633
  %v2635 = vsel %vm2302, %v2634, %v2630
  %v2636 = vlaneseq
  %v2637 = vshrl.u32 %v2636, 7
  %v2638 = vsub.s32 %v2304, %v2637
  %v2639 = vrot.slane %v1953, %v2638
  %v2640 = vsel %vm2309, %v2639, %v2635
  %v2641 = vlaneseq
  %v2642 = vshrl.u32 %v2641, 7
  %v2643 = vsub.s32 %v2311, %v2642
  %v2644 = vrot.slane %v1956, %v2643
  %v2645 = vsel %vm2316, %v2644, %v2640
  %v2646 = vlaneseq
  %v2647 = vshrl.u32 %v2646, 7
  %v2648 = vsub.s32 %v2318, %v2647
  %v2649 = vrot.slane %v1959, %v2648
  %v2650 = vsel %vm2323, %v2649, %v2645
  %v2651 = vlaneseq
  %v2652 = vshrl.u32 %v2651, 7
  %v2653 = vsub.s32 %v2325, %v2652
  %v2654 = vrot.slane %v1962, %v2653
  %v2655 = vsel %vm2330, %v2654, %v2650
  %v2656 = vlaneseq
  %v2657 = vshrl.u32 %v2656, 7
  %v2658 = vsub.s32 %v2332, %v2657
  %v2659 = vrot.slane %v1965, %v2658
  %v2660 = vsel %vm2337, %v2659, %v2655
  %v2661 = vlaneseq
  %v2662 = vshrl.u32 %v2661, 7
  %v2663 = vsub.s32 %v2339, %v2662
  %v2664 = vrot.slane %v1968, %v2663
  %v2665 = vsel %vm2344, %v2664, %v2660
  %v2666 = vlaneseq
  %v2667 = vshrl.u32 %v2666, 7
  %v2668 = vsub.s32 %v2346, %v2667
  %v2669 = vrot.slane %v1971, %v2668
  %v2670 = vsel %vm2351, %v2669, %v2665
  %v2671 = vlaneseq
  %v2672 = vshrl.u32 %v2671, 7
  %v2673 = vsub.s32 %v2353, %v2672
  %v2674 = vrot.slane %v1974, %v2673
  %v2675 = vsel %vm2358, %v2674, %v2670
  %v2676 = vlaneseq
  %v2677 = vshrl.u32 %v2676, 7
  %v2678 = vsub.s32 %v2250, %v2677
  %v2679 = vrot.slane %v1977, %v2678
  %v2680 = vlaneseq
  %v2681 = vshrl.u32 %v2680, 7
  %v2682 = vsub.s32 %v2255, %v2681
  %v2683 = vrot.slane %v1980, %v2682
  %v2684 = vsel %vm2260, %v2683, %v2679
  %v2685 = vlaneseq
  %v2686 = vshrl.u32 %v2685, 7
  %v2687 = vsub.s32 %v2262, %v2686
  %v2688 = vrot.slane %v1983, %v2687
  %v2689 = vsel %vm2267, %v2688, %v2684
  %v2690 = vlaneseq
  %v2691 = vshrl.u32 %v2690, 7
  %v2692 = vsub.s32 %v2269, %v2691
  %v2693 = vrot.slane %v1986, %v2692
  %v2694 = vsel %vm2274, %v2693, %v2689
  %v2695 = vlaneseq
  %v2696 = vshrl.u32 %v2695, 7
  %v2697 = vsub.s32 %v2276, %v2696
  %v2698 = vrot.slane %v1989, %v2697
  %v2699 = vsel %vm2281, %v2698, %v2694
  %v2700 = vlaneseq
  %v2701 = vshrl.u32 %v2700, 7
  %v2702 = vsub.s32 %v2283, %v2701
  %v2703 = vrot.slane %v1992, %v2702
  %v2704 = vsel %vm2288, %v2703, %v2699
  %v2705 = vlaneseq
  %v2706 = vshrl.u32 %v2705, 7
  %v2707 = vsub.s32 %v2290, %v2706
  %v2708 = vrot.slane %v1995, %v2707
  %v2709 = vsel %vm2295, %v2708, %v2704
  %v2710 = vlaneseq
  %v2711 = vshrl.u32 %v2710, 7
  %v2712 = vsub.s32 %v2297, %v2711
  %v2713 = vrot.slane %v1998, %v2712
  %v2714 = vsel %vm2302, %v2713, %v2709
  %v2715 = vlaneseq
  %v2716 = vshrl.u32 %v2715, 7
  %v2717 = vsub.s32 %v2304, %v2716
  %v2718 = vrot.slane %v2001, %v2717
  %v2719 = vsel %vm2309, %v2718, %v2714
  %v2720 = vlaneseq
  %v2721 = vshrl.u32 %v2720, 7
  %v2722 = vsub.s32 %v2311, %v2721
  %v2723 = vrot.slane %v2004, %v2722
  %v2724 = vsel %vm2316, %v2723, %v2719
  %v2725 = vlaneseq
  %v2726 = vshrl.u32 %v2725, 7
  %v2727 = vsub.s32 %v2318, %v2726
  %v2728 = vrot.slane %v2007, %v2727
  %v2729 = vsel %vm2323, %v2728, %v2724
  %v2730 = vlaneseq
  %v2731 = vshrl.u32 %v2730, 7
  %v2732 = vsub.s32 %v2325, %v2731
  %v2733 = vrot.slane %v2010, %v2732
  %v2734 = vsel %vm2330, %v2733, %v2729
  %v2735 = vlaneseq
  %v2736 = vshrl.u32 %v2735, 7
  %v2737 = vsub.s32 %v2332, %v2736
  %v2738 = vrot.slane %v2013, %v2737
  %v2739 = vsel %vm2337, %v2738, %v2734
  %v2740 = vlaneseq
  %v2741 = vshrl.u32 %v2740, 7
  %v2742 = vsub.s32 %v2339, %v2741
  %v2743 = vrot.slane %v2016, %v2742
  %v2744 = vsel %vm2344, %v2743, %v2739
  %v2745 = vlaneseq
  %v2746 = vshrl.u32 %v2745, 7
  %v2747 = vsub.s32 %v2346, %v2746
  %v2748 = vrot.slane %v2019, %v2747
  %v2749 = vsel %vm2351, %v2748, %v2744
  %v2750 = vlaneseq
  %v2751 = vshrl.u32 %v2750, 7
  %v2752 = vsub.s32 %v2353, %v2751
  %v2753 = vrot.slane %v2022, %v2752
  %v2754 = vsel %vm2358, %v2753, %v2749
  %v2755 = vlaneseq
  %v2756 = vshrl.u32 %v2755, 7
  %v2757 = vsub.s32 %v2250, %v2756
  %v2758 = vrot.slane %v2025, %v2757
  %v2759 = vlaneseq
  %v2760 = vshrl.u32 %v2759, 7
  %v2761 = vsub.s32 %v2255, %v2760
  %v2762 = vrot.slane %v2028, %v2761
  %v2763 = vsel %vm2260, %v2762, %v2758
  %v2764 = vlaneseq
  %v2765 = vshrl.u32 %v2764, 7
  %v2766 = vsub.s32 %v2262, %v2765
  %v2767 = vrot.slane %v2031, %v2766
  %v2768 = vsel %vm2267, %v2767, %v2763
  %v2769 = vlaneseq
  %v2770 = vshrl.u32 %v2769, 7
  %v2771 = vsub.s32 %v2269, %v2770
  %v2772 = vrot.slane %v2034, %v2771
  %v2773 = vsel %vm2274, %v2772, %v2768
  %v2774 = vlaneseq
  %v2775 = vshrl.u32 %v2774, 7
  %v2776 = vsub.s32 %v2276, %v2775
  %v2777 = vrot.slane %v2037, %v2776
  %v2778 = vsel %vm2281, %v2777, %v2773
  %v2779 = vlaneseq
  %v2780 = vshrl.u32 %v2779, 7
  %v2781 = vsub.s32 %v2283, %v2780
  %v2782 = vrot.slane %v2040, %v2781
  %v2783 = vsel %vm2288, %v2782, %v2778
  %v2784 = vlaneseq
  %v2785 = vshrl.u32 %v2784, 7
  %v2786 = vsub.s32 %v2290, %v2785
  %v2787 = vrot.slane %v2043, %v2786
  %v2788 = vsel %vm2295, %v2787, %v2783
  %v2789 = vlaneseq
  %v2790 = vshrl.u32 %v2789, 7
  %v2791 = vsub.s32 %v2297, %v2790
  %v2792 = vrot.slane %v2046, %v2791
  %v2793 = vsel %vm2302, %v2792, %v2788
  %v2794 = vlaneseq
  %v2795 = vshrl.u32 %v2794, 7
  %v2796 = vsub.s32 %v2304, %v2795
  %v2797 = vrot.slane %v2049, %v2796
  %v2798 = vsel %vm2309, %v2797, %v2793
  %v2799 = vlaneseq
  %v2800 = vshrl.u32 %v2799, 7
  %v2801 = vsub.s32 %v2311, %v2800
  %v2802 = vrot.slane %v2052, %v2801
  %v2803 = vsel %vm2316, %v2802, %v2798
  %v2804 = vlaneseq
  %v2805 = vshrl.u32 %v2804, 7
  %v2806 = vsub.s32 %v2318, %v2805
  %v2807 = vrot.slane %v2055, %v2806
  %v2808 = vsel %vm2323, %v2807, %v2803
  %v2809 = vlaneseq
  %v2810 = vshrl.u32 %v2809, 7
  %v2811 = vsub.s32 %v2325, %v2810
  %v2812 = vrot.slane %v2058, %v2811
  %v2813 = vsel %vm2330, %v2812, %v2808
  %v2814 = vlaneseq
  %v2815 = vshrl.u32 %v2814, 7
  %v2816 = vsub.s32 %v2332, %v2815
  %v2817 = vrot.slane %v2061, %v2816
  %v2818 = vsel %vm2337, %v2817, %v2813
  %v2819 = vlaneseq
  %v2820 = vshrl.u32 %v2819, 7
  %v2821 = vsub.s32 %v2339, %v2820
  %v2822 = vrot.slane %v2064, %v2821
  %v2823 = vsel %vm2344, %v2822, %v2818
  %v2824 = vlaneseq
  %v2825 = vshrl.u32 %v2824, 7
  %v2826 = vsub.s32 %v2346, %v2825
  %v2827 = vrot.slane %v2067, %v2826
  %v2828 = vsel %vm2351, %v2827, %v2823
  %v2829 = vlaneseq
  %v2830 = vshrl.u32 %v2829, 7
  %v2831 = vsub.s32 %v2353, %v2830
  %v2832 = vrot.slane %v2070, %v2831
  %v2833 = vsel %vm2358, %v2832, %v2828
  %v2834 = vlaneseq
  %v2835 = vshrl.u32 %v2834, 7
  %v2836 = vsub.s32 %v2250, %v2835
  %v2837 = vrot.slane %v2073, %v2836
  %v2838 = vlaneseq
  %v2839 = vshrl.u32 %v2838, 7
  %v2840 = vsub.s32 %v2255, %v2839
  %v2841 = vrot.slane %v2076, %v2840
  %v2842 = vsel %vm2260, %v2841, %v2837
  %v2843 = vlaneseq
  %v2844 = vshrl.u32 %v2843, 7
  %v2845 = vsub.s32 %v2262, %v2844
  %v2846 = vrot.slane %v2079, %v2845
  %v2847 = vsel %vm2267, %v2846, %v2842
  %v2848 = vlaneseq
  %v2849 = vshrl.u32 %v2848, 7
  %v2850 = vsub.s32 %v2269, %v2849
  %v2851 = vrot.slane %v2082, %v2850
  %v2852 = vsel %vm2274, %v2851, %v2847
  %v2853 = vlaneseq
  %v2854 = vshrl.u32 %v2853, 7
  %v2855 = vsub.s32 %v2276, %v2854
  %v2856 = vrot.slane %v2085, %v2855
  %v2857 = vsel %vm2281, %v2856, %v2852
  %v2858 = vlaneseq
  %v2859 = vshrl.u32 %v2858, 7
  %v2860 = vsub.s32 %v2283, %v2859
  %v2861 = vrot.slane %v2088, %v2860
  %v2862 = vsel %vm2288, %v2861, %v2857
  %v2863 = vlaneseq
  %v2864 = vshrl.u32 %v2863, 7
  %v2865 = vsub.s32 %v2290, %v2864
  %v2866 = vrot.slane %v2091, %v2865
  %v2867 = vsel %vm2295, %v2866, %v2862
  %v2868 = vlaneseq
  %v2869 = vshrl.u32 %v2868, 7
  %v2870 = vsub.s32 %v2297, %v2869
  %v2871 = vrot.slane %v2094, %v2870
  %v2872 = vsel %vm2302, %v2871, %v2867
  %v2873 = vlaneseq
  %v2874 = vshrl.u32 %v2873, 7
  %v2875 = vsub.s32 %v2304, %v2874
  %v2876 = vrot.slane %v2097, %v2875
  %v2877 = vsel %vm2309, %v2876, %v2872
  %v2878 = vlaneseq
  %v2879 = vshrl.u32 %v2878, 7
  %v2880 = vsub.s32 %v2311, %v2879
  %v2881 = vrot.slane %v2100, %v2880
  %v2882 = vsel %vm2316, %v2881, %v2877
  %v2883 = vlaneseq
  %v2884 = vshrl.u32 %v2883, 7
  %v2885 = vsub.s32 %v2318, %v2884
  %v2886 = vrot.slane %v2103, %v2885
  %v2887 = vsel %vm2323, %v2886, %v2882
  %v2888 = vlaneseq
  %v2889 = vshrl.u32 %v2888, 7
  %v2890 = vsub.s32 %v2325, %v2889
  %v2891 = vrot.slane %v2106, %v2890
  %v2892 = vsel %vm2330, %v2891, %v2887
  %v2893 = vlaneseq
  %v2894 = vshrl.u32 %v2893, 7
  %v2895 = vsub.s32 %v2332, %v2894
  %v2896 = vrot.slane %v2109, %v2895
  %v2897 = vsel %vm2337, %v2896, %v2892
  %v2898 = vlaneseq
  %v2899 = vshrl.u32 %v2898, 7
  %v2900 = vsub.s32 %v2339, %v2899
  %v2901 = vrot.slane %v2112, %v2900
  %v2902 = vsel %vm2344, %v2901, %v2897
  %v2903 = vlaneseq
  %v2904 = vshrl.u32 %v2903, 7
  %v2905 = vsub.s32 %v2346, %v2904
  %v2906 = vrot.slane %v2115, %v2905
  %v2907 = vsel %vm2351, %v2906, %v2902
  %v2908 = vlaneseq
  %v2909 = vshrl.u32 %v2908, 7
  %v2910 = vsub.s32 %v2353, %v2909
  %v2911 = vrot.slane %v2118, %v2910
  %v2912 = vsel %vm2358, %v2911, %v2907
  %vm2913 = vcmask 1041409
  %v2914 = vsel %vm2913, %v2438, %v2359
  %vm2915 = vcmask 1042434
  %v2916 = vsel %vm2915, %v2517, %v2914
  %vm2917 = vcmask 1043459
  %v2918 = vsel %vm2917, %v2596, %v2916
  %vm2919 = vcmask 1044484
  %v2920 = vsel %vm2919, %v2675, %v2918
  %vm2921 = vcmask 1045509
  %v2922 = vsel %vm2921, %v2754, %v2920
  %vm2923 = vcmask 1046534
  %v2924 = vsel %vm2923, %v2833, %v2922
  %vm2925 = vcmask 1047559
  %v2926 = vsel %vm2925, %v2912, %v2924
  %v2928 = vsel %vm2120, %v2926, -1000000.0
  %v2929 = vld [vmem:[#allocation2] sm:$0xff]
  %2930 = vmax.xlane.f32.xlu0 %v2928
  %v2931 = vpop.xlane.xlu0 %2930
  %v2932 = vmax.f32 %v2929, %v2931
  %v2933 = vsub.f32 %v2929, %v2932
  %v2934 = vmul.f32 %v2933, 1.442695
  %v2935 = vpow.pop %v2934
  %2937 = vset.pattern.permute.xlu0 0
  %2938 = vperm.xlu0 %2937, %v2932
  %v2939 = vpop.permute.xlu0 %2938
  %v2941 = vsub.f32 %v2928, %v2939
  %v2942 = vmul.f32 %v2941, 1.442695
  %v2943 = vpow.pop %v2942
  %v2944 = vld [vmem:[#allocation3] sm:$0xff]
  %v2945 = vmul.f32 %v2935, %v2944
  %2946 = vadd.xlane.f32.xlu0 %v2943
  %v2947 = vpop.xlane.xlu0 %2946
  %v2948 = vadd.f32 %v2945, %v2947
  %vm2949 = vcmask 7168
  %2950 = vst.msk [vmem:[#allocation3] sm:$0xff] %vm2949, %v2948
  %v2951 = vlaneseq
  %v2952 = vshrl.u32 %v2951, 7
  %v2953 = vsub.s32 0, %v2952
  %v2954 = vrot.slane %v2943, %v2953
  %2956 = vbcast.lane.b32.xlu0 %v2954, 256
  %v2957 = vpop.permute.xlu0 %2956
  %s2959 = sor.u32 256, 8
  %2960 = vbcast.lane.b32.xlu0 %v2954, %s2959
  %v2961 = vpop.permute.xlu0 %2960
  %s2963 = sor.u32 256, 16
  %2964 = vbcast.lane.b32.xlu0 %v2954, %s2963
  %v2965 = vpop.permute.xlu0 %2964
  %s2967 = sor.u32 256, 24
  %2968 = vbcast.lane.b32.xlu0 %v2954, %s2967
  %v2969 = vpop.permute.xlu0 %2968
  %s2971 = sor.u32 256, 32
  %2972 = vbcast.lane.b32.xlu0 %v2954, %s2971
  %v2973 = vpop.permute.xlu0 %2972
  %s2975 = sor.u32 256, 40
  %2976 = vbcast.lane.b32.xlu0 %v2954, %s2975
  %v2977 = vpop.permute.xlu0 %2976
  %s2979 = sor.u32 256, 48
  %2980 = vbcast.lane.b32.xlu0 %v2954, %s2979
  %v2981 = vpop.permute.xlu0 %2980
  %s2983 = sor.u32 256, 56
  %2984 = vbcast.lane.b32.xlu0 %v2954, %s2983
  %v2985 = vpop.permute.xlu0 %2984
  %s2987 = sor.u32 256, 64
  %2988 = vbcast.lane.b32.xlu0 %v2954, %s2987
  %v2989 = vpop.permute.xlu0 %2988
  %s2991 = sor.u32 256, 72
  %2992 = vbcast.lane.b32.xlu0 %v2954, %s2991
  %v2993 = vpop.permute.xlu0 %2992
  %s2995 = sor.u32 256, 80
  %2996 = vbcast.lane.b32.xlu0 %v2954, %s2995
  %v2997 = vpop.permute.xlu0 %2996
  %s2999 = sor.u32 256, 88
  %3000 = vbcast.lane.b32.xlu0 %v2954, %s2999
  %v3001 = vpop.permute.xlu0 %3000
  %s3003 = sor.u32 256, 96
  %3004 = vbcast.lane.b32.xlu0 %v2954, %s3003
  %v3005 = vpop.permute.xlu0 %3004
  %s3007 = sor.u32 256, 104
  %3008 = vbcast.lane.b32.xlu0 %v2954, %s3007
  %v3009 = vpop.permute.xlu0 %3008
  %s3011 = sor.u32 256, 112
  %3012 = vbcast.lane.b32.xlu0 %v2954, %s3011
  %v3013 = vpop.permute.xlu0 %3012
  %s3015 = sor.u32 256, 120
  %3016 = vbcast.lane.b32.xlu0 %v2954, %s3015
  %v3017 = vpop.permute.xlu0 %3016
  %v3018 = vlaneseq
  %v3019 = vshrl.u32 %v3018, 7
  %v3020 = vsub.s32 1, %v3019
  %v3021 = vrot.slane %v2943, %v3020
  %3023 = vbcast.lane.b32.xlu0 %v3021, 256
  %v3024 = vpop.permute.xlu0 %3023
  %s3026 = sor.u32 256, 8
  %3027 = vbcast.lane.b32.xlu0 %v3021, %s3026
  %v3028 = vpop.permute.xlu0 %3027
  %s3030 = sor.u32 256, 16
  %3031 = vbcast.lane.b32.xlu0 %v3021, %s3030
  %v3032 = vpop.permute.xlu0 %3031
  %s3034 = sor.u32 256, 24
  %3035 = vbcast.lane.b32.xlu0 %v3021, %s3034
  %v3036 = vpop.permute.xlu0 %3035
  %s3038 = sor.u32 256, 32
  %3039 = vbcast.lane.b32.xlu0 %v3021, %s3038
  %v3040 = vpop.permute.xlu0 %3039
  %s3042 = sor.u32 256, 40
  %3043 = vbcast.lane.b32.xlu0 %v3021, %s3042
  %v3044 = vpop.permute.xlu0 %3043
  %s3046 = sor.u32 256, 48
  %3047 = vbcast.lane.b32.xlu0 %v3021, %s3046
  %v3048 = vpop.permute.xlu0 %3047
  %s3050 = sor.u32 256, 56
  %3051 = vbcast.lane.b32.xlu0 %v3021, %s3050
  %v3052 = vpop.permute.xlu0 %3051
  %s3054 = sor.u32 256, 64
  %3055 = vbcast.lane.b32.xlu0 %v3021, %s3054
  %v3056 = vpop.permute.xlu0 %3055
  %s3058 = sor.u32 256, 72
  %3059 = vbcast.lane.b32.xlu0 %v3021, %s3058
  %v3060 = vpop.permute.xlu0 %3059
  %s3062 = sor.u32 256, 80
  %3063 = vbcast.lane.b32.xlu0 %v3021, %s3062
  %v3064 = vpop.permute.xlu0 %3063
  %s3066 = sor.u32 256, 88
  %3067 = vbcast.lane.b32.xlu0 %v3021, %s3066
  %v3068 = vpop.permute.xlu0 %3067
  %s3070 = sor.u32 256, 96
  %3071 = vbcast.lane.b32.xlu0 %v3021, %s3070
  %v3072 = vpop.permute.xlu0 %3071
  %s3074 = sor.u32 256, 104
  %3075 = vbcast.lane.b32.xlu0 %v3021, %s3074
  %v3076 = vpop.permute.xlu0 %3075
  %s3078 = sor.u32 256, 112
  %3079 = vbcast.lane.b32.xlu0 %v3021, %s3078
  %v3080 = vpop.permute.xlu0 %3079
  %s3082 = sor.u32 256, 120
  %3083 = vbcast.lane.b32.xlu0 %v3021, %s3082
  %v3084 = vpop.permute.xlu0 %3083
  %v3085 = vlaneseq
  %v3086 = vshrl.u32 %v3085, 7
  %v3087 = vsub.s32 2, %v3086
  %v3088 = vrot.slane %v2943, %v3087
  %3090 = vbcast.lane.b32.xlu0 %v3088, 256
  %v3091 = vpop.permute.xlu0 %3090
  %s3093 = sor.u32 256, 8
  %3094 = vbcast.lane.b32.xlu0 %v3088, %s3093
  %v3095 = vpop.permute.xlu0 %3094
  %s3097 = sor.u32 256, 16
  %3098 = vbcast.lane.b32.xlu0 %v3088, %s3097
  %v3099 = vpop.permute.xlu0 %3098
  %s3101 = sor.u32 256, 24
  %3102 = vbcast.lane.b32.xlu0 %v3088, %s3101
  %v3103 = vpop.permute.xlu0 %3102
  %s3105 = sor.u32 256, 32
  %3106 = vbcast.lane.b32.xlu0 %v3088, %s3105
  %v3107 = vpop.permute.xlu0 %3106
  %s3109 = sor.u32 256, 40
  %3110 = vbcast.lane.b32.xlu0 %v3088, %s3109
  %v3111 = vpop.permute.xlu0 %3110
  %s3113 = sor.u32 256, 48
  %3114 = vbcast.lane.b32.xlu0 %v3088, %s3113
  %v3115 = vpop.permute.xlu0 %3114
  %s3117 = sor.u32 256, 56
  %3118 = vbcast.lane.b32.xlu0 %v3088, %s3117
  %v3119 = vpop.permute.xlu0 %3118
  %s3121 = sor.u32 256, 64
  %3122 = vbcast.lane.b32.xlu0 %v3088, %s3121
  %v3123 = vpop.permute.xlu0 %3122
  %s3125 = sor.u32 256, 72
  %3126 = vbcast.lane.b32.xlu0 %v3088, %s3125
  %v3127 = vpop.permute.xlu0 %3126
  %s3129 = sor.u32 256, 80
  %3130 = vbcast.lane.b32.xlu0 %v3088, %s3129
  %v3131 = vpop.permute.xlu0 %3130
  %s3133 = sor.u32 256, 88
  %3134 = vbcast.lane.b32.xlu0 %v3088, %s3133
  %v3135 = vpop.permute.xlu0 %3134
  %s3137 = sor.u32 256, 96
  %3138 = vbcast.lane.b32.xlu0 %v3088, %s3137
  %v3139 = vpop.permute.xlu0 %3138
  %s3141 = sor.u32 256, 104
  %3142 = vbcast.lane.b32.xlu0 %v3088, %s3141
  %v3143 = vpop.permute.xlu0 %3142
  %s3145 = sor.u32 256, 112
  %3146 = vbcast.lane.b32.xlu0 %v3088, %s3145
  %v3147 = vpop.permute.xlu0 %3146
  %s3149 = sor.u32 256, 120
  %3150 = vbcast.lane.b32.xlu0 %v3088, %s3149
  %v3151 = vpop.permute.xlu0 %3150
  %v3152 = vlaneseq
  %v3153 = vshrl.u32 %v3152, 7
  %v3154 = vsub.s32 3, %v3153
  %v3155 = vrot.slane %v2943, %v3154
  %3157 = vbcast.lane.b32.xlu0 %v3155, 256
  %v3158 = vpop.permute.xlu0 %3157
  %s3160 = sor.u32 256, 8
  %3161 = vbcast.lane.b32.xlu0 %v3155, %s3160
  %v3162 = vpop.permute.xlu0 %3161
  %s3164 = sor.u32 256, 16
  %3165 = vbcast.lane.b32.xlu0 %v3155, %s3164
  %v3166 = vpop.permute.xlu0 %3165
  %s3168 = sor.u32 256, 24
  %3169 = vbcast.lane.b32.xlu0 %v3155, %s3168
  %v3170 = vpop.permute.xlu0 %3169
  %s3172 = sor.u32 256, 32
  %3173 = vbcast.lane.b32.xlu0 %v3155, %s3172
  %v3174 = vpop.permute.xlu0 %3173
  %s3176 = sor.u32 256, 40
  %3177 = vbcast.lane.b32.xlu0 %v3155, %s3176
  %v3178 = vpop.permute.xlu0 %3177
  %s3180 = sor.u32 256, 48
  %3181 = vbcast.lane.b32.xlu0 %v3155, %s3180
  %v3182 = vpop.permute.xlu0 %3181
  %s3184 = sor.u32 256, 56
  %3185 = vbcast.lane.b32.xlu0 %v3155, %s3184
  %v3186 = vpop.permute.xlu0 %3185
  %s3188 = sor.u32 256, 64
  %3189 = vbcast.lane.b32.xlu0 %v3155, %s3188
  %v3190 = vpop.permute.xlu0 %3189
  %s3192 = sor.u32 256, 72
  %3193 = vbcast.lane.b32.xlu0 %v3155, %s3192
  %v3194 = vpop.permute.xlu0 %3193
  %s3196 = sor.u32 256, 80
  %3197 = vbcast.lane.b32.xlu0 %v3155, %s3196
  %v3198 = vpop.permute.xlu0 %3197
  %s3200 = sor.u32 256, 88
  %3201 = vbcast.lane.b32.xlu0 %v3155, %s3200
  %v3202 = vpop.permute.xlu0 %3201
  %s3204 = sor.u32 256, 96
  %3205 = vbcast.lane.b32.xlu0 %v3155, %s3204
  %v3206 = vpop.permute.xlu0 %3205
  %s3208 = sor.u32 256, 104
  %3209 = vbcast.lane.b32.xlu0 %v3155, %s3208
  %v3210 = vpop.permute.xlu0 %3209
  %s3212 = sor.u32 256, 112
  %3213 = vbcast.lane.b32.xlu0 %v3155, %s3212
  %v3214 = vpop.permute.xlu0 %3213
  %s3216 = sor.u32 256, 120
  %3217 = vbcast.lane.b32.xlu0 %v3155, %s3216
  %v3218 = vpop.permute.xlu0 %3217
  %v3219 = vlaneseq
  %v3220 = vshrl.u32 %v3219, 7
  %v3221 = vsub.s32 4, %v3220
  %v3222 = vrot.slane %v2943, %v3221
  %3224 = vbcast.lane.b32.xlu0 %v3222, 256
  %v3225 = vpop.permute.xlu0 %3224
  %s3227 = sor.u32 256, 8
  %3228 = vbcast.lane.b32.xlu0 %v3222, %s3227
  %v3229 = vpop.permute.xlu0 %3228
  %s3231 = sor.u32 256, 16
  %3232 = vbcast.lane.b32.xlu0 %v3222, %s3231
  %v3233 = vpop.permute.xlu0 %3232
  %s3235 = sor.u32 256, 24
  %3236 = vbcast.lane.b32.xlu0 %v3222, %s3235
  %v3237 = vpop.permute.xlu0 %3236
  %s3239 = sor.u32 256, 32
  %3240 = vbcast.lane.b32.xlu0 %v3222, %s3239
  %v3241 = vpop.permute.xlu0 %3240
  %s3243 = sor.u32 256, 40
  %3244 = vbcast.lane.b32.xlu0 %v3222, %s3243
  %v3245 = vpop.permute.xlu0 %3244
  %s3247 = sor.u32 256, 48
  %3248 = vbcast.lane.b32.xlu0 %v3222, %s3247
  %v3249 = vpop.permute.xlu0 %3248
  %s3251 = sor.u32 256, 56
  %3252 = vbcast.lane.b32.xlu0 %v3222, %s3251
  %v3253 = vpop.permute.xlu0 %3252
  %s3255 = sor.u32 256, 64
  %3256 = vbcast.lane.b32.xlu0 %v3222, %s3255
  %v3257 = vpop.permute.xlu0 %3256
  %s3259 = sor.u32 256, 72
  %3260 = vbcast.lane.b32.xlu0 %v3222, %s3259
  %v3261 = vpop.permute.xlu0 %3260
  %s3263 = sor.u32 256, 80
  %3264 = vbcast.lane.b32.xlu0 %v3222, %s3263
  %v3265 = vpop.permute.xlu0 %3264
  %s3267 = sor.u32 256, 88
  %3268 = vbcast.lane.b32.xlu0 %v3222, %s3267
  %v3269 = vpop.permute.xlu0 %3268
  %s3271 = sor.u32 256, 96
  %3272 = vbcast.lane.b32.xlu0 %v3222, %s3271
  %v3273 = vpop.permute.xlu0 %3272
  %s3275 = sor.u32 256, 104
  %3276 = vbcast.lane.b32.xlu0 %v3222, %s3275
  %v3277 = vpop.permute.xlu0 %3276
  %s3279 = sor.u32 256, 112
  %3280 = vbcast.lane.b32.xlu0 %v3222, %s3279
  %v3281 = vpop.permute.xlu0 %3280
  %s3283 = sor.u32 256, 120
  %3284 = vbcast.lane.b32.xlu0 %v3222, %s3283
  %v3285 = vpop.permute.xlu0 %3284
  %v3286 = vlaneseq
  %v3287 = vshrl.u32 %v3286, 7
  %v3288 = vsub.s32 5, %v3287
  %v3289 = vrot.slane %v2943, %v3288
  %3291 = vbcast.lane.b32.xlu0 %v3289, 256
  %v3292 = vpop.permute.xlu0 %3291
  %s3294 = sor.u32 256, 8
  %3295 = vbcast.lane.b32.xlu0 %v3289, %s3294
  %v3296 = vpop.permute.xlu0 %3295
  %s3298 = sor.u32 256, 16
  %3299 = vbcast.lane.b32.xlu0 %v3289, %s3298
  %v3300 = vpop.permute.xlu0 %3299
  %s3302 = sor.u32 256, 24
  %3303 = vbcast.lane.b32.xlu0 %v3289, %s3302
  %v3304 = vpop.permute.xlu0 %3303
  %s3306 = sor.u32 256, 32
  %3307 = vbcast.lane.b32.xlu0 %v3289, %s3306
  %v3308 = vpop.permute.xlu0 %3307
  %s3310 = sor.u32 256, 40
  %3311 = vbcast.lane.b32.xlu0 %v3289, %s3310
  %v3312 = vpop.permute.xlu0 %3311
  %s3314 = sor.u32 256, 48
  %3315 = vbcast.lane.b32.xlu0 %v3289, %s3314
  %v3316 = vpop.permute.xlu0 %3315
  %s3318 = sor.u32 256, 56
  %3319 = vbcast.lane.b32.xlu0 %v3289, %s3318
  %v3320 = vpop.permute.xlu0 %3319
  %s3322 = sor.u32 256, 64
  %3323 = vbcast.lane.b32.xlu0 %v3289, %s3322
  %v3324 = vpop.permute.xlu0 %3323
  %s3326 = sor.u32 256, 72
  %3327 = vbcast.lane.b32.xlu0 %v3289, %s3326
  %v3328 = vpop.permute.xlu0 %3327
  %s3330 = sor.u32 256, 80
  %3331 = vbcast.lane.b32.xlu0 %v3289, %s3330
  %v3332 = vpop.permute.xlu0 %3331
  %s3334 = sor.u32 256, 88
  %3335 = vbcast.lane.b32.xlu0 %v3289, %s3334
  %v3336 = vpop.permute.xlu0 %3335
  %s3338 = sor.u32 256, 96
  %3339 = vbcast.lane.b32.xlu0 %v3289, %s3338
  %v3340 = vpop.permute.xlu0 %3339
  %s3342 = sor.u32 256, 104
  %3343 = vbcast.lane.b32.xlu0 %v3289, %s3342
  %v3344 = vpop.permute.xlu0 %3343
  %s3346 = sor.u32 256, 112
  %3347 = vbcast.lane.b32.xlu0 %v3289, %s3346
  %v3348 = vpop.permute.xlu0 %3347
  %s3350 = sor.u32 256, 120
  %3351 = vbcast.lane.b32.xlu0 %v3289, %s3350
  %v3352 = vpop.permute.xlu0 %3351
  %v3353 = vlaneseq
  %v3354 = vshrl.u32 %v3353, 7
  %v3355 = vsub.s32 6, %v3354
  %v3356 = vrot.slane %v2943, %v3355
  %3358 = vbcast.lane.b32.xlu0 %v3356, 256
  %v3359 = vpop.permute.xlu0 %3358
  %s3361 = sor.u32 256, 8
  %3362 = vbcast.lane.b32.xlu0 %v3356, %s3361
  %v3363 = vpop.permute.xlu0 %3362
  %s3365 = sor.u32 256, 16
  %3366 = vbcast.lane.b32.xlu0 %v3356, %s3365
  %v3367 = vpop.permute.xlu0 %3366
  %s3369 = sor.u32 256, 24
  %3370 = vbcast.lane.b32.xlu0 %v3356, %s3369
  %v3371 = vpop.permute.xlu0 %3370
  %s3373 = sor.u32 256, 32
  %3374 = vbcast.lane.b32.xlu0 %v3356, %s3373
  %v3375 = vpop.permute.xlu0 %3374
  %s3377 = sor.u32 256, 40
  %3378 = vbcast.lane.b32.xlu0 %v3356, %s3377
  %v3379 = vpop.permute.xlu0 %3378
  %s3381 = sor.u32 256, 48
  %3382 = vbcast.lane.b32.xlu0 %v3356, %s3381
  %v3383 = vpop.permute.xlu0 %3382
  %s3385 = sor.u32 256, 56
  %3386 = vbcast.lane.b32.xlu0 %v3356, %s3385
  %v3387 = vpop.permute.xlu0 %3386
  %s3389 = sor.u32 256, 64
  %3390 = vbcast.lane.b32.xlu0 %v3356, %s3389
  %v3391 = vpop.permute.xlu0 %3390
  %s3393 = sor.u32 256, 72
  %3394 = vbcast.lane.b32.xlu0 %v3356, %s3393
  %v3395 = vpop.permute.xlu0 %3394
  %s3397 = sor.u32 256, 80
  %3398 = vbcast.lane.b32.xlu0 %v3356, %s3397
  %v3399 = vpop.permute.xlu0 %3398
  %s3401 = sor.u32 256, 88
  %3402 = vbcast.lane.b32.xlu0 %v3356, %s3401
  %v3403 = vpop.permute.xlu0 %3402
  %s3405 = sor.u32 256, 96
  %3406 = vbcast.lane.b32.xlu0 %v3356, %s3405
  %v3407 = vpop.permute.xlu0 %3406
  %s3409 = sor.u32 256, 104
  %3410 = vbcast.lane.b32.xlu0 %v3356, %s3409
  %v3411 = vpop.permute.xlu0 %3410
  %s3413 = sor.u32 256, 112
  %3414 = vbcast.lane.b32.xlu0 %v3356, %s3413
  %v3415 = vpop.permute.xlu0 %3414
  %s3417 = sor.u32 256, 120
  %3418 = vbcast.lane.b32.xlu0 %v3356, %s3417
  %v3419 = vpop.permute.xlu0 %3418
  %v3420 = vlaneseq
  %v3421 = vshrl.u32 %v3420, 7
  %v3422 = vsub.s32 7, %v3421
  %v3423 = vrot.slane %v2943, %v3422
  %3425 = vbcast.lane.b32.xlu0 %v3423, 256
  %v3426 = vpop.permute.xlu0 %3425
  %s3428 = sor.u32 256, 8
  %3429 = vbcast.lane.b32.xlu0 %v3423, %s3428
  %v3430 = vpop.permute.xlu0 %3429
  %s3432 = sor.u32 256, 16
  %3433 = vbcast.lane.b32.xlu0 %v3423, %s3432
  %v3434 = vpop.permute.xlu0 %3433
  %s3436 = sor.u32 256, 24
  %3437 = vbcast.lane.b32.xlu0 %v3423, %s3436
  %v3438 = vpop.permute.xlu0 %3437
  %s3440 = sor.u32 256, 32
  %3441 = vbcast.lane.b32.xlu0 %v3423, %s3440
  %v3442 = vpop.permute.xlu0 %3441
  %s3444 = sor.u32 256, 40
  %3445 = vbcast.lane.b32.xlu0 %v3423, %s3444
  %v3446 = vpop.permute.xlu0 %3445
  %s3448 = sor.u32 256, 48
  %3449 = vbcast.lane.b32.xlu0 %v3423, %s3448
  %v3450 = vpop.permute.xlu0 %3449
  %s3452 = sor.u32 256, 56
  %3453 = vbcast.lane.b32.xlu0 %v3423, %s3452
  %v3454 = vpop.permute.xlu0 %3453
  %s3456 = sor.u32 256, 64
  %3457 = vbcast.lane.b32.xlu0 %v3423, %s3456
  %v3458 = vpop.permute.xlu0 %3457
  %s3460 = sor.u32 256, 72
  %3461 = vbcast.lane.b32.xlu0 %v3423, %s3460
  %v3462 = vpop.permute.xlu0 %3461
  %s3464 = sor.u32 256, 80
  %3465 = vbcast.lane.b32.xlu0 %v3423, %s3464
  %v3466 = vpop.permute.xlu0 %3465
  %s3468 = sor.u32 256, 88
  %3469 = vbcast.lane.b32.xlu0 %v3423, %s3468
  %v3470 = vpop.permute.xlu0 %3469
  %s3472 = sor.u32 256, 96
  %3473 = vbcast.lane.b32.xlu0 %v3423, %s3472
  %v3474 = vpop.permute.xlu0 %3473
  %s3476 = sor.u32 256, 104
  %3477 = vbcast.lane.b32.xlu0 %v3423, %s3476
  %v3478 = vpop.permute.xlu0 %3477
  %s3480 = sor.u32 256, 112
  %3481 = vbcast.lane.b32.xlu0 %v3423, %s3480
  %v3482 = vpop.permute.xlu0 %3481
  %s3484 = sor.u32 256, 120
  %3485 = vbcast.lane.b32.xlu0 %v3423, %s3484
  %v3486 = vpop.permute.xlu0 %3485
  %v3487 = vmul.f32 %v2957, %v31
  %v3488 = vmul.f32 %v2961, %v32
  %v3489 = vmul.f32 %v2965, %v33
  %v3490 = vmul.f32 %v2969, %v34
  %v3491 = vmul.f32 %v2973, %v35
  %v3492 = vmul.f32 %v2977, %v36
  %v3493 = vmul.f32 %v2981, %v37
  %v3494 = vmul.f32 %v2985, %v38
  %v3495 = vmul.f32 %v2989, %v39
  %v3496 = vmul.f32 %v2993, %v40
  %v3497 = vmul.f32 %v2997, %v41
  %v3498 = vmul.f32 %v3001, %v42
  %v3499 = vmul.f32 %v3005, %v43
  %v3500 = vmul.f32 %v3009, %v44
  %v3501 = vmul.f32 %v3013, %v45
  %v3502 = vmul.f32 %v3017, %v46
  %v3503 = vmul.f32 %v3024, %v47
  %v3504 = vmul.f32 %v3028, %v48
  %v3505 = vmul.f32 %v3032, %v49
  %v3506 = vmul.f32 %v3036, %v50
  %v3507 = vmul.f32 %v3040, %v51
  %v3508 = vmul.f32 %v3044, %v52
  %v3509 = vmul.f32 %v3048, %v53
  %v3510 = vmul.f32 %v3052, %v54
  %v3511 = vmul.f32 %v3056, %v55
  %v3512 = vmul.f32 %v3060, %v56
  %v3513 = vmul.f32 %v3064, %v57
  %v3514 = vmul.f32 %v3068, %v58
  %v3515 = vmul.f32 %v3072, %v59
  %v3516 = vmul.f32 %v3076, %v60
  %v3517 = vmul.f32 %v3080, %v61
  %v3518 = vmul.f32 %v3084, %v62
  %v3519 = vmul.f32 %v3091, %v63
  %v3520 = vmul.f32 %v3095, %v64
  %v3521 = vmul.f32 %v3099, %v65
  %v3522 = vmul.f32 %v3103, %v66
  %v3523 = vmul.f32 %v3107, %v67
  %v3524 = vmul.f32 %v3111, %v68
  %v3525 = vmul.f32 %v3115, %v69
  %v3526 = vmul.f32 %v3119, %v70
  %v3527 = vmul.f32 %v3123, %v71
  %v3528 = vmul.f32 %v3127, %v72
  %v3529 = vmul.f32 %v3131, %v73
  %v3530 = vmul.f32 %v3135, %v74
  %v3531 = vmul.f32 %v3139, %v75
  %v3532 = vmul.f32 %v3143, %v76
  %v3533 = vmul.f32 %v3147, %v77
  %v3534 = vmul.f32 %v3151, %v78
  %v3535 = vmul.f32 %v3158, %v79
  %v3536 = vmul.f32 %v3162, %v80
  %v3537 = vmul.f32 %v3166, %v81
  %v3538 = vmul.f32 %v3170, %v82
  %v3539 = vmul.f32 %v3174, %v83
  %v3540 = vmul.f32 %v3178, %v84
  %v3541 = vmul.f32 %v3182, %v85
  %v3542 = vmul.f32 %v3186, %v86
  %v3543 = vmul.f32 %v3190, %v87
  %v3544 = vmul.f32 %v3194, %v88
  %v3545 = vmul.f32 %v3198, %v89
  %v3546 = vmul.f32 %v3202, %v90
  %v3547 = vmul.f32 %v3206, %v91
  %v3548 = vmul.f32 %v3210, %v92
  %v3549 = vmul.f32 %v3214, %v93
  %v3550 = vmul.f32 %v3218, %v94
  %v3551 = vmul.f32 %v3225, %v95
  %v3552 = vmul.f32 %v3229, %v96
  %v3553 = vmul.f32 %v3233, %v97
  %v3554 = vmul.f32 %v3237, %v98
  %v3555 = vmul.f32 %v3241, %v99
  %v3556 = vmul.f32 %v3245, %v100
  %v3557 = vmul.f32 %v3249, %v101
  %v3558 = vmul.f32 %v3253, %v102
  %v3559 = vmul.f32 %v3257, %v103
  %v3560 = vmul.f32 %v3261, %v104
  %v3561 = vmul.f32 %v3265, %v105
  %v3562 = vmul.f32 %v3269, %v106
  %v3563 = vmul.f32 %v3273, %v107
  %v3564 = vmul.f32 %v3277, %v108
  %v3565 = vmul.f32 %v3281, %v109
  %v3566 = vmul.f32 %v3285, %v110
  %v3567 = vmul.f32 %v3292, %v111
  %v3568 = vmul.f32 %v3296, %v112
  %v3569 = vmul.f32 %v3300, %v113
  %v3570 = vmul.f32 %v3304, %v114
  %v3571 = vmul.f32 %v3308, %v115
  %v3572 = vmul.f32 %v3312, %v116
  %v3573 = vmul.f32 %v3316, %v117
  %v3574 = vmul.f32 %v3320, %v118
  %v3575 = vmul.f32 %v3324, %v119
  %v3576 = vmul.f32 %v3328, %v120
  %v3577 = vmul.f32 %v3332, %v121
  %v3578 = vmul.f32 %v3336, %v122
  %v3579 = vmul.f32 %v3340, %v123
  %v3580 = vmul.f32 %v3344, %v124
  %v3581 = vmul.f32 %v3348, %v125
  %v3582 = vmul.f32 %v3352, %v126
  %v3583 = vmul.f32 %v3359, %v127
  %v3584 = vmul.f32 %v3363, %v128
  %v3585 = vmul.f32 %v3367, %v129
  %v3586 = vmul.f32 %v3371, %v130
  %v3587 = vmul.f32 %v3375, %v131
  %v3588 = vmul.f32 %v3379, %v132
  %v3589 = vmul.f32 %v3383, %v133
  %v3590 = vmul.f32 %v3387, %v134
  %v3591 = vmul.f32 %v3391, %v135
  %v3592 = vmul.f32 %v3395, %v136
  %v3593 = vmul.f32 %v3399, %v137
  %v3594 = vmul.f32 %v3403, %v138
  %v3595 = vmul.f32 %v3407, %v139
  %v3596 = vmul.f32 %v3411, %v140
  %v3597 = vmul.f32 %v3415, %v141
  %v3598 = vmul.f32 %v3419, %v142
  %v3599 = vmul.f32 %v3426, %v143
  %v3600 = vmul.f32 %v3430, %v144
  %v3601 = vmul.f32 %v3434, %v145
  %v3602 = vmul.f32 %v3438, %v146
  %v3603 = vmul.f32 %v3442, %v147
  %v3604 = vmul.f32 %v3446, %v148
  %v3605 = vmul.f32 %v3450, %v149
  %v3606 = vmul.f32 %v3454, %v150
  %v3607 = vmul.f32 %v3458, %v151
  %v3608 = vmul.f32 %v3462, %v152
  %v3609 = vmul.f32 %v3466, %v153
  %v3610 = vmul.f32 %v3470, %v154
  %v3611 = vmul.f32 %v3474, %v155
  %v3612 = vmul.f32 %v3478, %v156
  %v3613 = vmul.f32 %v3482, %v157
  %v3614 = vmul.f32 %v3486, %v158
  %v3615 = vsel %vm163, %v3487, 0.0
  %v3616 = vsel %vm163, %v3488, 0.0
  %v3617 = vadd.f32 %v3615, %v3616
  %v3618 = vsel %vm163, %v3489, 0.0
  %v3619 = vadd.f32 %v3617, %v3618
  %v3620 = vsel %vm163, %v3490, 0.0
  %v3621 = vadd.f32 %v3619, %v3620
  %v3622 = vsel %vm163, %v3491, 0.0
  %v3623 = vadd.f32 %v3621, %v3622
  %v3624 = vsel %vm163, %v3492, 0.0
  %v3625 = vadd.f32 %v3623, %v3624
  %v3626 = vsel %vm163, %v3493, 0.0
  %v3627 = vadd.f32 %v3625, %v3626
  %v3628 = vsel %vm163, %v3494, 0.0
  %v3629 = vadd.f32 %v3627, %v3628
  %v3630 = vsel %vm163, %v3495, 0.0
  %v3631 = vadd.f32 %v3629, %v3630
  %v3632 = vsel %vm163, %v3496, 0.0
  %v3633 = vadd.f32 %v3631, %v3632
  %v3634 = vsel %vm163, %v3497, 0.0
  %v3635 = vadd.f32 %v3633, %v3634
  %v3636 = vsel %vm163, %v3498, 0.0
  %v3637 = vadd.f32 %v3635, %v3636
  %v3638 = vsel %vm163, %v3499, 0.0
  %v3639 = vadd.f32 %v3637, %v3638
  %v3640 = vsel %vm163, %v3500, 0.0
  %v3641 = vadd.f32 %v3639, %v3640
  %v3642 = vsel %vm163, %v3501, 0.0
  %v3643 = vadd.f32 %v3641, %v3642
  %v3644 = vsel %vm163, %v3502, 0.0
  %v3645 = vadd.f32 %v3643, %v3644
  %v3646 = vrot.slane %v3645, 4
  %v3647 = vadd.f32 %v3645, %v3646
  %v3648 = vrot.slane %v3647, 2
  %v3649 = vadd.f32 %v3647, %v3648
  %v3650 = vrot.slane %v3649, 1
  %v3651 = vadd.f32 %v3649, %v3650
  %v3652 = vsel %vm163, %v3503, 0.0
  %v3653 = vsel %vm163, %v3504, 0.0
  %v3654 = vadd.f32 %v3652, %v3653
  %v3655 = vsel %vm163, %v3505, 0.0
  %v3656 = vadd.f32 %v3654, %v3655
  %v3657 = vsel %vm163, %v3506, 0.0
  %v3658 = vadd.f32 %v3656, %v3657
  %v3659 = vsel %vm163, %v3507, 0.0
  %v3660 = vadd.f32 %v3658, %v3659
  %v3661 = vsel %vm163, %v3508, 0.0
  %v3662 = vadd.f32 %v3660, %v3661
  %v3663 = vsel %vm163, %v3509, 0.0
  %v3664 = vadd.f32 %v3662, %v3663
  %v3665 = vsel %vm163, %v3510, 0.0
  %v3666 = vadd.f32 %v3664, %v3665
  %v3667 = vsel %vm163, %v3511, 0.0
  %v3668 = vadd.f32 %v3666, %v3667
  %v3669 = vsel %vm163, %v3512, 0.0
  %v3670 = vadd.f32 %v3668, %v3669
  %v3671 = vsel %vm163, %v3513, 0.0
  %v3672 = vadd.f32 %v3670, %v3671
  %v3673 = vsel %vm163, %v3514, 0.0
  %v3674 = vadd.f32 %v3672, %v3673
  %v3675 = vsel %vm163, %v3515, 0.0
  %v3676 = vadd.f32 %v3674, %v3675
  %v3677 = vsel %vm163, %v3516, 0.0
  %v3678 = vadd.f32 %v3676, %v3677
  %v3679 = vsel %vm163, %v3517, 0.0
  %v3680 = vadd.f32 %v3678, %v3679
  %v3681 = vsel %vm163, %v3518, 0.0
  %v3682 = vadd.f32 %v3680, %v3681
  %v3683 = vrot.slane %v3682, 4
  %v3684 = vadd.f32 %v3682, %v3683
  %v3685 = vrot.slane %v3684, 2
  %v3686 = vadd.f32 %v3684, %v3685
  %v3687 = vrot.slane %v3686, 1
  %v3688 = vadd.f32 %v3686, %v3687
  %v3689 = vsel %vm163, %v3519, 0.0
  %v3690 = vsel %vm163, %v3520, 0.0
  %v3691 = vadd.f32 %v3689, %v3690
  %v3692 = vsel %vm163, %v3521, 0.0
  %v3693 = vadd.f32 %v3691, %v3692
  %v3694 = vsel %vm163, %v3522, 0.0
  %v3695 = vadd.f32 %v3693, %v3694
  %v3696 = vsel %vm163, %v3523, 0.0
  %v3697 = vadd.f32 %v3695, %v3696
  %v3698 = vsel %vm163, %v3524, 0.0
  %v3699 = vadd.f32 %v3697, %v3698
  %v3700 = vsel %vm163, %v3525, 0.0
  %v3701 = vadd.f32 %v3699, %v3700
  %v3702 = vsel %vm163, %v3526, 0.0
  %v3703 = vadd.f32 %v3701, %v3702
  %v3704 = vsel %vm163, %v3527, 0.0
  %v3705 = vadd.f32 %v3703, %v3704
  %v3706 = vsel %vm163, %v3528, 0.0
  %v3707 = vadd.f32 %v3705, %v3706
  %v3708 = vsel %vm163, %v3529, 0.0
  %v3709 = vadd.f32 %v3707, %v3708
  %v3710 = vsel %vm163, %v3530, 0.0
  %v3711 = vadd.f32 %v3709, %v3710
  %v3712 = vsel %vm163, %v3531, 0.0
  %v3713 = vadd.f32 %v3711, %v3712
  %v3714 = vsel %vm163, %v3532, 0.0
  %v3715 = vadd.f32 %v3713, %v3714
  %v3716 = vsel %vm163, %v3533, 0.0
  %v3717 = vadd.f32 %v3715, %v3716
  %v3718 = vsel %vm163, %v3534, 0.0
  %v3719 = vadd.f32 %v3717, %v3718
  %v3720 = vrot.slane %v3719, 4
  %v3721 = vadd.f32 %v3719, %v3720
  %v3722 = vrot.slane %v3721, 2
  %v3723 = vadd.f32 %v3721, %v3722
  %v3724 = vrot.slane %v3723, 1
  %v3725 = vadd.f32 %v3723, %v3724
  %v3726 = vsel %vm163, %v3535, 0.0
  %v3727 = vsel %vm163, %v3536, 0.0
  %v3728 = vadd.f32 %v3726, %v3727
  %v3729 = vsel %vm163, %v3537, 0.0
  %v3730 = vadd.f32 %v3728, %v3729
  %v3731 = vsel %vm163, %v3538, 0.0
  %v3732 = vadd.f32 %v3730, %v3731
  %v3733 = vsel %vm163, %v3539, 0.0
  %v3734 = vadd.f32 %v3732, %v3733
  %v3735 = vsel %vm163, %v3540, 0.0
  %v3736 = vadd.f32 %v3734, %v3735
  %v3737 = vsel %vm163, %v3541, 0.0
  %v3738 = vadd.f32 %v3736, %v3737
  %v3739 = vsel %vm163, %v3542, 0.0
  %v3740 = vadd.f32 %v3738, %v3739
  %v3741 = vsel %vm163, %v3543, 0.0
  %v3742 = vadd.f32 %v3740, %v3741
  %v3743 = vsel %vm163, %v3544, 0.0
  %v3744 = vadd.f32 %v3742, %v3743
  %v3745 = vsel %vm163, %v3545, 0.0
  %v3746 = vadd.f32 %v3744, %v3745
  %v3747 = vsel %vm163, %v3546, 0.0
  %v3748 = vadd.f32 %v3746, %v3747
  %v3749 = vsel %vm163, %v3547, 0.0
  %v3750 = vadd.f32 %v3748, %v3749
  %v3751 = vsel %vm163, %v3548, 0.0
  %v3752 = vadd.f32 %v3750, %v3751
  %v3753 = vsel %vm163, %v3549, 0.0
  %v3754 = vadd.f32 %v3752, %v3753
  %v3755 = vsel %vm163, %v3550, 0.0
  %v3756 = vadd.f32 %v3754, %v3755
  %v3757 = vrot.slane %v3756, 4
  %v3758 = vadd.f32 %v3756, %v3757
  %v3759 = vrot.slane %v3758, 2
  %v3760 = vadd.f32 %v3758, %v3759
  %v3761 = vrot.slane %v3760, 1
  %v3762 = vadd.f32 %v3760, %v3761
  %v3763 = vsel %vm163, %v3551, 0.0
  %v3764 = vsel %vm163, %v3552, 0.0
  %v3765 = vadd.f32 %v3763, %v3764
  %v3766 = vsel %vm163, %v3553, 0.0
  %v3767 = vadd.f32 %v3765, %v3766
  %v3768 = vsel %vm163, %v3554, 0.0
  %v3769 = vadd.f32 %v3767, %v3768
  %v3770 = vsel %vm163, %v3555, 0.0
  %v3771 = vadd.f32 %v3769, %v3770
  %v3772 = vsel %vm163, %v3556, 0.0
  %v3773 = vadd.f32 %v3771, %v3772
  %v3774 = vsel %vm163, %v3557, 0.0
  %v3775 = vadd.f32 %v3773, %v3774
  %v3776 = vsel %vm163, %v3558, 0.0
  %v3777 = vadd.f32 %v3775, %v3776
  %v3778 = vsel %vm163, %v3559, 0.0
  %v3779 = vadd.f32 %v3777, %v3778
  %v3780 = vsel %vm163, %v3560, 0.0
  %v3781 = vadd.f32 %v3779, %v3780
  %v3782 = vsel %vm163, %v3561, 0.0
  %v3783 = vadd.f32 %v3781, %v3782
  %v3784 = vsel %vm163, %v3562, 0.0
  %v3785 = vadd.f32 %v3783, %v3784
  %v3786 = vsel %vm163, %v3563, 0.0
  %v3787 = vadd.f32 %v3785, %v3786
  %v3788 = vsel %vm163, %v3564, 0.0
  %v3789 = vadd.f32 %v3787, %v3788
  %v3790 = vsel %vm163, %v3565, 0.0
  %v3791 = vadd.f32 %v3789, %v3790
  %v3792 = vsel %vm163, %v3566, 0.0
  %v3793 = vadd.f32 %v3791, %v3792
  %v3794 = vrot.slane %v3793, 4
  %v3795 = vadd.f32 %v3793, %v3794
  %v3796 = vrot.slane %v3795, 2
  %v3797 = vadd.f32 %v3795, %v3796
  %v3798 = vrot.slane %v3797, 1
  %v3799 = vadd.f32 %v3797, %v3798
  %v3800 = vsel %vm163, %v3567, 0.0
  %v3801 = vsel %vm163, %v3568, 0.0
  %v3802 = vadd.f32 %v3800, %v3801
  %v3803 = vsel %vm163, %v3569, 0.0
  %v3804 = vadd.f32 %v3802, %v3803
  %v3805 = vsel %vm163, %v3570, 0.0
  %v3806 = vadd.f32 %v3804, %v3805
  %v3807 = vsel %vm163, %v3571, 0.0
  %v3808 = vadd.f32 %v3806, %v3807
  %v3809 = vsel %vm163, %v3572, 0.0
  %v3810 = vadd.f32 %v3808, %v3809
  %v3811 = vsel %vm163, %v3573, 0.0
  %v3812 = vadd.f32 %v3810, %v3811
  %v3813 = vsel %vm163, %v3574, 0.0
  %v3814 = vadd.f32 %v3812, %v3813
  %v3815 = vsel %vm163, %v3575, 0.0
  %v3816 = vadd.f32 %v3814, %v3815
  %v3817 = vsel %vm163, %v3576, 0.0
  %v3818 = vadd.f32 %v3816, %v3817
  %v3819 = vsel %vm163, %v3577, 0.0
  %v3820 = vadd.f32 %v3818, %v3819
  %v3821 = vsel %vm163, %v3578, 0.0
  %v3822 = vadd.f32 %v3820, %v3821
  %v3823 = vsel %vm163, %v3579, 0.0
  %v3824 = vadd.f32 %v3822, %v3823
  %v3825 = vsel %vm163, %v3580, 0.0
  %v3826 = vadd.f32 %v3824, %v3825
  %v3827 = vsel %vm163, %v3581, 0.0
  %v3828 = vadd.f32 %v3826, %v3827
  %v3829 = vsel %vm163, %v3582, 0.0
  %v3830 = vadd.f32 %v3828, %v3829
  %v3831 = vrot.slane %v3830, 4
  %v3832 = vadd.f32 %v3830, %v3831
  %v3833 = vrot.slane %v3832, 2
  %v3834 = vadd.f32 %v3832, %v3833
  %v3835 = vrot.slane %v3834, 1
  %v3836 = vadd.f32 %v3834, %v3835
  %v3837 = vsel %vm163, %v3583, 0.0
  %v3838 = vsel %vm163, %v3584, 0.0
  %v3839 = vadd.f32 %v3837, %v3838
  %v3840 = vsel %vm163, %v3585, 0.0
  %v3841 = vadd.f32 %v3839, %v3840
  %v3842 = vsel %vm163, %v3586, 0.0
  %v3843 = vadd.f32 %v3841, %v3842
  %v3844 = vsel %vm163, %v3587, 0.0
  %v3845 = vadd.f32 %v3843, %v3844
  %v3846 = vsel %vm163, %v3588, 0.0
  %v3847 = vadd.f32 %v3845, %v3846
  %v3848 = vsel %vm163, %v3589, 0.0
  %v3849 = vadd.f32 %v3847, %v3848
  %v3850 = vsel %vm163, %v3590, 0.0
  %v3851 = vadd.f32 %v3849, %v3850
  %v3852 = vsel %vm163, %v3591, 0.0
  %v3853 = vadd.f32 %v3851, %v3852
  %v3854 = vsel %vm163, %v3592, 0.0
  %v3855 = vadd.f32 %v3853, %v3854
  %v3856 = vsel %vm163, %v3593, 0.0
  %v3857 = vadd.f32 %v3855, %v3856
  %v3858 = vsel %vm163, %v3594, 0.0
  %v3859 = vadd.f32 %v3857, %v3858
  %v3860 = vsel %vm163, %v3595, 0.0
  %v3861 = vadd.f32 %v3859, %v3860
  %v3862 = vsel %vm163, %v3596, 0.0
  %v3863 = vadd.f32 %v3861, %v3862
  %v3864 = vsel %vm163, %v3597, 0.0
  %v3865 = vadd.f32 %v3863, %v3864
  %v3866 = vsel %vm163, %v3598, 0.0
  %v3867 = vadd.f32 %v3865, %v3866
  %v3868 = vrot.slane %v3867, 4
  %v3869 = vadd.f32 %v3867, %v3868
  %v3870 = vrot.slane %v3869, 2
  %v3871 = vadd.f32 %v3869, %v3870
  %v3872 = vrot.slane %v3871, 1
  %v3873 = vadd.f32 %v3871, %v3872
  %v3874 = vsel %vm163, %v3599, 0.0
  %v3875 = vsel %vm163, %v3600, 0.0
  %v3876 = vadd.f32 %v3874, %v3875
  %v3877 = vsel %vm163, %v3601, 0.0
  %v3878 = vadd.f32 %v3876, %v3877
  %v3879 = vsel %vm163, %v3602, 0.0
  %v3880 = vadd.f32 %v3878, %v3879
  %v3881 = vsel %vm163, %v3603, 0.0
  %v3882 = vadd.f32 %v3880, %v3881
  %v3883 = vsel %vm163, %v3604, 0.0
  %v3884 = vadd.f32 %v3882, %v3883
  %v3885 = vsel %vm163, %v3605, 0.0
  %v3886 = vadd.f32 %v3884, %v3885
  %v3887 = vsel %vm163, %v3606, 0.0
  %v3888 = vadd.f32 %v3886, %v3887
  %v3889 = vsel %vm163, %v3607, 0.0
  %v3890 = vadd.f32 %v3888, %v3889
  %v3891 = vsel %vm163, %v3608, 0.0
  %v3892 = vadd.f32 %v3890, %v3891
  %v3893 = vsel %vm163, %v3609, 0.0
  %v3894 = vadd.f32 %v3892, %v3893
  %v3895 = vsel %vm163, %v3610, 0.0
  %v3896 = vadd.f32 %v3894, %v3895
  %v3897 = vsel %vm163, %v3611, 0.0
  %v3898 = vadd.f32 %v3896, %v3897
  %v3899 = vsel %vm163, %v3612, 0.0
  %v3900 = vadd.f32 %v3898, %v3899
  %v3901 = vsel %vm163, %v3613, 0.0
  %v3902 = vadd.f32 %v3900, %v3901
  %v3903 = vsel %vm163, %v3614, 0.0
  %v3904 = vadd.f32 %v3902, %v3903
  %v3905 = vrot.slane %v3904, 4
  %v3906 = vadd.f32 %v3904, %v3905
  %v3907 = vrot.slane %v3906, 2
  %v3908 = vadd.f32 %v3906, %v3907
  %v3909 = vrot.slane %v3908, 1
  %v3910 = vadd.f32 %v3908, %v3909
  %v3911 = vld [vmem:[#allocation4] sm:$0xff]
  %3913 = vset.pattern.permute.xlu0 0
  %3914 = vperm.xlu0 %3913, %v2935
  %v3915 = vpop.permute.xlu0 %3914
  %v3917 = vmul.f32 %v3915, %v3911
  %v3926 = vsel %vm2913, %v3688, %v3651
  %v3927 = vsel %vm2915, %v3725, %v3926
  %v3928 = vsel %vm2917, %v3762, %v3927
  %v3929 = vsel %vm2919, %v3799, %v3928
  %v3930 = vsel %vm2921, %v3836, %v3929
  %v3931 = vsel %vm2923, %v3873, %v3930
  %v3932 = vsel %vm2925, %v3910, %v3931
  %v3934 = vadd.f32 %v3917, %v3932
  %3935 = vst.msk [vmem:[#allocation4] sm:$0xff] %vm163, %v3934
  %3936 = vst.msk [vmem:[#allocation2] sm:$0xff] %vm2949, %v2932
  %s3937 = smul.u32 0, 8
  %s3938 = scalar_lea.vmem [#allocation6], %s3937
  %3939 = vst [vmem:[%s3938] sm:$0xff] %v2943
  %s3940 = scalar_lea.vmem [#allocation5], %s3937
  %3941 = vst.msk [vmem:[%s3940] sm:$0xff] %vm2949, %v2932
  // Predicated region
  $region26: #{additive_attention.1} parent=0 // pred_check
    %p3942 = pneg %p22
  $region27: #{additive_attention.1} parent=0 // pred_check_branch
    %3944 = sbr.rel (%p3942) target = $region29
  $region28: #{additive_attention.1} parent=0 // pred_region
    %v3945 = vld [vmem:[#allocation3] sm:$0xff]
    %v3946 = vrcp.pop %v3945
    %v3947 = vmul.f32 1.0, %v3946
    %v3948 = vld [vmem:[#allocation4] sm:$0xff]
    %3950 = vset.pattern.permute.xlu0 0
    %3951 = vperm.xlu0 %3950, %v3947
    %v3952 = vpop.permute.xlu0 %3951
    %v3954 = vmul.f32 %v3948, %v3952
    %3955 = vst.msk [vmem:[%s5] sm:$0xff] %vm163, %v3954
    %v3956 = vld [vmem:[#allocation2] sm:$0xff]
    %v3957 = vld [vmem:[#allocation5] sm:$0xff]
    %v3958 = vsub.f32 %v3957, %v3956
    %v3959 = vmul.f32 %v3958, 1.442695
    %v3960 = vpow.pop %v3959
    %v3961 = vmul.f32 %v3960, %v3947
    %v3962 = vld [vmem:[#allocation6] sm:$0xff]
    %3964 = vset.pattern.permute.xlu0 0
    %3965 = vperm.xlu0 %3964, %v3961
    %v3966 = vpop.permute.xlu0 %3965
    %v3968 = vmul.f32 %v3962, %v3966
    %3969 = vst [vmem:[%s6] sm:$0xff] %v3968
  $region29: #{additive_attention.1} parent=0 // pred_fallthru
    _
  // Predicated region
  $region30: #{additive_attention.1} parent=0 // pred_check
    _
  $region31: #{additive_attention.1} parent=0 // pred_check_branch
    %3971 = sbr.rel (0) target = $region33
  $region32: #{additive_attention.1} parent=0 // pred_region
    _
  $region33: #{additive_attention.1} parent=0 // pred_fallthru
    _
  // Predicated region
  $region34: #{additive_attention.1} parent=0 // pred_check
    _
  $region35: #{additive_attention.1} parent=0 // pred_check_branch
    %3973 = sbr.rel (0) target = $region37
  $region36: #{additive_attention.1} parent=0 // pred_region
    _
  $region37: #{additive_attention.1} parent=0 // pred_fallthru
    _
  // Predicated region
  $region38: #{additive_attention.1} parent=0 // pred_check
    _
  $region39: #{additive_attention.1} parent=0 // pred_check_branch
    %3975 = sbr.rel (0) target = $region41
  $region40: #{additive_attention.1} parent=0 // pred_region
    _
  $region41: #{additive_attention.1} parent=0 // pred_fallthru
    _
  // Predicated region
  $region42: #{additive_attention.1} parent=0 // pred_check
    _
  $region43: #{additive_attention.1} parent=0 // pred_check_branch
    %3977 = sbr.rel (0) target = $region45
  $region44: #{additive_attention.1} parent=0 // pred_region
    _
  $region45: #{additive_attention.1} parent=0 // pred_fallthru
    _

</llo_original>
